<compile_context>
chip_gen: v6e
topology: v6e:2x2x1
jax: 0.10.0
libtpu: 0.0.40
codegen_flags: <defaults>
</compile_context>

<pallas_src>
import functools

import jax
import jax.numpy as jnp
from jax import lax
from jax.experimental import pallas as pl
from jax.experimental.pallas import tpu as pltpu

_LN_EPS = 1e-5
_SQRT_2_OVER_PI = 0.7978845608028654


def _gelu_tanh(x):
    # TODO(synk): torch.nn.GELU defaults to the exact erf form; the tanh
    # approximation (max abs deviation ~1e-3) is used because tanh has a
    # guaranteed EUP lowering in Mosaic.
    return 0.5 * x * (1.0 + jnp.tanh(_SQRT_2_OVER_PI * (x + 0.044715 * x * x * x)))


def _layernorm(v, w, b, eps=_LN_EPS):
    mu = jnp.mean(v, axis=-1, keepdims=True)
    d = v - mu
    var = jnp.mean(d * d, axis=-1, keepdims=True)
    return d * lax.rsqrt(var + eps) * w + b


def _encoder_kernel(x_ref,
                    ln1_w_ref, ln1_b_ref,
                    wq_ref, wk_ref, wv_ref, wproj_ref, bproj_ref,
                    ln2_w_ref, ln2_b_ref,
                    wfc1_ref, bfc1_ref, wfc2_ref, bfc2_ref,
                    o_ref,
                    ctx_ref,
                    *, batch_tile, seq_len, num_heads, head_dim, compute_dtype):
    """One grid step processes a (batch_tile*seq_len, C) row slab."""
    rows_n = batch_tile * seq_len

    rows = x_ref[...].astype(jnp.float32)                      # (R, C) f32

    # ---- LayerNorm 1 (f32) --------------------------------------------------
    h = _layernorm(rows, ln1_w_ref[...], ln1_b_ref[...]).astype(compute_dtype)

    # ---- QKV on the whole row slab (tall MXU matmuls) -------------------------
    # softmax scale is pre-folded into wq (prepare_params); cast once here.
    q = jnp.dot(h, wq_ref[...], preferred_element_type=jnp.float32).astype(compute_dtype)
    k = jnp.dot(h, wk_ref[...], preferred_element_type=jnp.float32).astype(compute_dtype)
    v = jnp.dot(h, wv_ref[...], preferred_element_type=jnp.float32).astype(compute_dtype)

    # ---- multi-head attention -----------------------------------------------
    # Static Python loop over heads only (lane offsets must be static for
    # hd < 128 slices); the batch dimension is handled by 3-D batched
    # dot_generals, and every head writes into ONE shared (R, C) VMEM scratch
    # so no acc list / concat and a single full-width projection matmul.
    for hidx in range(num_heads):
        lo = hidx * head_dim
        qh = q[:, lo:lo + head_dim].reshape(batch_tile, seq_len, head_dim)
        kh = k[:, lo:lo + head_dim].reshape(batch_tile, seq_len, head_dim)
        vh = v[:, lo:lo + head_dim].reshape(batch_tile, seq_len, head_dim)

        # q @ k^T without explicit transpose: contract head_dim of both.
        logits = jnp.einsum('bqd,bkd->bqk', qh, kh,
                            preferred_element_type=jnp.float32)   # (bt, N, N)
        m = jnp.max(logits, axis=-1, keepdims=True)
        e = jnp.exp(logits - m)
        p = (e * pl.reciprocal(jnp.sum(e, axis=-1, keepdims=True),
                               approx=True)).astype(compute_dtype)
        ctx = jnp.einsum('bqk,bkd->bqd', p, vh,
                         preferred_element_type=jnp.float32)      # (bt, N, hd)
        ctx_ref[:, lo:lo + head_dim] = (
            ctx.reshape(rows_n, head_dim).astype(ctx_ref.dtype))

    # Output projection: one full-C-contraction matmul over all heads.
    attn_out = jnp.dot(ctx_ref[...], wproj_ref[...],
                       preferred_element_type=jnp.float32) + bproj_ref[...]

    x1 = rows + attn_out                                          # residual 1

    # ---- LayerNorm 2 + MLP (row-slab matmuls) --------------------------------
    h2 = _layernorm(x1, ln2_w_ref[...], ln2_b_ref[...]).astype(compute_dtype)
    f1 = jnp.dot(h2, wfc1_ref[...], preferred_element_type=jnp.float32)
    f1 = f1 + bfc1_ref[...]
    g = _gelu_tanh(f1).astype(compute_dtype)
    f2 = jnp.dot(g, wfc2_ref[...], preferred_element_type=jnp.float32)
    f2 = f2 + bfc2_ref[...]

    o_ref[...] = (x1 + f2).astype(o_ref.dtype)                    # residual 2


def prepare_params(raw, *, num_heads, compute_dtype=jnp.float32):
    """One-time (outside the hot path) weight transposes / splits / casts."""
    C = raw["w_proj"].shape[0]
    head_dim = C // num_heads
    scale = head_dim ** (-0.5)
    f32 = jnp.float32
    w_qkv = raw["w_qkv"]                                   # (3C, C), PyTorch layout
    wq = jnp.asarray(w_qkv[0:C].T * scale, compute_dtype)  # scale folded into Wq
    wk = jnp.asarray(w_qkv[C:2 * C].T, compute_dtype)
    wv = jnp.asarray(w_qkv[2 * C:3 * C].T, compute_dtype)
    wproj = jnp.asarray(raw["w_proj"].T, compute_dtype)    # (C, C)
    wfc1 = jnp.asarray(raw["w_fc1"].T, compute_dtype)      # (C, H)
    wfc2 = jnp.asarray(raw["w_fc2"].T, compute_dtype)      # (H, C)
    return (raw["ln1_w"].reshape(1, C).astype(f32),
            raw["ln1_b"].reshape(1, C).astype(f32),
            wq, wk, wv, wproj,
            raw["b_proj"].reshape(1, C).astype(f32),
            raw["ln2_w"].reshape(1, C).astype(f32),
            raw["ln2_b"].reshape(1, C).astype(f32),
            wfc1, raw["b_fc1"].reshape(1, -1).astype(f32),
            wfc2, raw["b_fc2"].reshape(1, C).astype(f32))


def transformer_encoder_forward(x, prepped, *, num_heads, batch_tile=None):
    """x: (B, N, C) f32.  prepped: output of prepare_params()."""
    B, N, C = x.shape
    head_dim = C // num_heads
    compute_dtype = jnp.dtype(prepped[2].dtype)     # matmul operand dtype (wq)

    if batch_tile is None:
        # Target >= 256 rows per grid step (v6e/v7x MXU is 256-wide), but keep
        # grid >= 2 so both v7x TensorCores get work and the slab DMA pipelines.
        target_rows = 256
        batch_tile = max(1, min(B, -(-target_rows // N)))
        if B >= 2:
            batch_tile = min(batch_tile, max(1, B // 2))
        while B % batch_tile:
            batch_tile -= 1
    # (8,128) constraint: the sublane dim of the row-slab block must be a
    # multiple of 8 unless it spans the whole array.
    if (batch_tile * N) % 8 and batch_tile != B:
        bt = batch_tile
        while bt <= B and ((bt * N) % 8 or B % bt):
            bt += 1
        batch_tile = bt if bt <= B else B

    rows_per_step = batch_tile * N
    grid = (B // batch_tile,)

    x2 = x.reshape(B * N, C)          # row-major flatten: free outside the kernel
    weights = prepped

    kernel = functools.partial(
        _encoder_kernel,
        batch_tile=batch_tile, seq_len=N, num_heads=num_heads,
        head_dim=head_dim, compute_dtype=compute_dtype)

    # --- explicit VMEM budget: weights(single-buffered) + 2x in/out slabs +
    #     intermediates, 30% headroom, clamped to [32 MiB, 64 MiB] (v7x phys).
    hidden = weights[9].shape[1]
    wbytes = sum(int(w.size) * w.dtype.itemsize for w in weights)
    act = rows_per_step * C * 4
    est = (wbytes
           + 2 * 2 * act                          # double-buffered in/out slabs
           + 10 * act                             # h, q, k, v, ctx, x1, attn_out...
           + 2 * rows_per_step * hidden * 4       # MLP hidden activation + GELU
           + 3 * batch_tile * N * N * 4)          # logits / softmax temporaries
    vmem_limit = int(min(max(int(est * 1.3), 32 * 1024 * 1024), 64 * 1024 * 1024))

    def _build(weight_buffer_count):
        def weight_spec(arr):
            if weight_buffer_count == 1:
                # Constant index_map -> second buffer is pure waste; keep the
                # resident weights single-buffered (crucial on v7x 64 MiB VMEM).
                return pl.BlockSpec(arr.shape, lambda i: (0, 0),
                                    pipeline_mode=pl.Buffered(1))
            return pl.BlockSpec(arr.shape, lambda i: (0, 0))

        return pl.pallas_call(
            kernel,
            out_shape=jax.ShapeDtypeStruct((B * N, C), x.dtype),
            grid_spec=pltpu.PrefetchScalarGridSpec(
                num_scalar_prefetch=0,
                grid=grid,
                in_specs=[pl.BlockSpec((rows_per_step, C), lambda i: (i, 0))]
                         + [weight_spec(w) for w in weights],
                out_specs=pl.BlockSpec((rows_per_step, C), lambda i: (i, 0)),
                scratch_shapes=[pltpu.VMEM((rows_per_step, C), compute_dtype)],
            ),
            compiler_params=pltpu.CompilerParams(
                dimension_semantics=("parallel",),
                vmem_limit_bytes=vmem_limit),
        )

    try:
        y2 = jax.block_until_ready(_build(1)(x2, *weights))
    except Exception:
        # TODO(synk): pl.Buffered(1) (single-buffered resident weights) not
        # supported by this jax version; fall back to default double buffering.
        y2 = jax.block_until_ready(_build(2)(x2, *weights))
    return y2.reshape(B, N, C)


def transformer_encoder_reference(x, raw, *, num_heads):
    """Pure-JAX mirror of the PyTorch TransformerEncoder forward."""
    B, N, C = x.shape
    hd = C // num_heads
    scale = hd ** (-0.5)
    h = _layernorm(x, raw["ln1_w"], raw["ln1_b"])
    qkv = h @ raw["w_qkv"].T
    qkv = qkv.reshape(B, N, 3, num_heads, hd).transpose(2, 0, 3, 1, 4)
    q, k, v = qkv[0], qkv[1], qkv[2]
    attn = jnp.einsum("bhnd,bhmd->bhnm", q, k) * scale
    attn = jax.nn.softmax(attn, axis=-1)
    ctx = jnp.einsum("bhnm,bhmd->bhnd", attn, v)
    ctx = ctx.transpose(0, 2, 1, 3).reshape(B, N, C)
    x1 = x + (ctx @ raw["w_proj"].T + raw["b_proj"])
    h2 = _layernorm(x1, raw["ln2_w"], raw["ln2_b"])
    f1 = h2 @ raw["w_fc1"].T + raw["b_fc1"]
    f2 = _gelu_tanh(f1) @ raw["w_fc2"].T + raw["b_fc2"]
    return x1 + f2


if __name__ == "__main__":
    # Small shapes consistent with the module: dim=32, num_heads=4 (hd=8),
    # mlp_hidden = 4*dim = 128, seq=8, batch=2.
    B, N, C = 2, 8, 32
    num_heads = 4
    hidden = 4 * C

    key = jax.random.PRNGKey(0)
    ks = jax.random.split(key, 12)

    def rnd(k, shape, s=0.05):
        return s * jax.random.normal(k, shape, dtype=jnp.float32)

    x = jax.random.normal(ks[0], (B, N, C), dtype=jnp.float32)
    raw = dict(
        ln1_w=1.0 + rnd(ks[1], (C,), 0.1), ln1_b=rnd(ks[2], (C,)),
        w_qkv=rnd(ks[3], (3 * C, C)),
        w_proj=rnd(ks[4], (C, C)), b_proj=rnd(ks[5], (C,)),
        ln2_w=1.0 + rnd(ks[6], (C,), 0.1), ln2_b=rnd(ks[7], (C,)),
        w_fc1=rnd(ks[8], (hidden, C)), b_fc1=rnd(ks[9], (hidden,)),
        w_fc2=rnd(ks[10], (C, hidden)), b_fc2=rnd(ks[11], (C,)),
    )

    y_ref = transformer_encoder_reference(x, raw, num_heads=num_heads)

    # --- bf16 matmul operands, f32 accumulation: the default, fast path on
    #     v5e / v6e / v7x (per review) -----------------------------------------
    prepped_bf16 = prepare_params(raw, num_heads=num_heads,
                                  compute_dtype=jnp.bfloat16)
    y_bf16 = transformer_encoder_forward(x, prepped_bf16, num_heads=num_heads)
    y_bf16 = jax.block_until_ready(y_bf16)
    assert y_bf16.shape == (B, N, C)
    assert jnp.allclose(y_bf16, y_ref, atol=5e-2, rtol=5e-2), "bf16 mismatch vs ref"

    # --- f32 matmul path for a tight numerical check --------------------------
    prepped_f32 = prepare_params(raw, num_heads=num_heads,
                                 compute_dtype=jnp.float32)
    y_f32 = transformer_encoder_forward(x, prepped_f32, num_heads=num_heads)
    y_f32 = jax.block_until_ready(y_f32)
    assert jnp.allclose(y_f32, y_ref, atol=2e-3, rtol=2e-3), "fp32 mismatch vs ref"

    print("KERNEL_OK")
</pallas_src>

<mosaic_0001>
module attributes {stable_mosaic.version = 11 : i64} {
  func.func @_encoder_kernel(%arg0: i32, %arg1: memref<8x32xf32, #tpu.memory_space<vmem>>, %arg2: memref<1x32xf32, #tpu.memory_space<vmem>>, %arg3: memref<1x32xf32, #tpu.memory_space<vmem>>, %arg4: memref<32x32xbf16, #tpu.memory_space<vmem>>, %arg5: memref<32x32xbf16, #tpu.memory_space<vmem>>, %arg6: memref<32x32xbf16, #tpu.memory_space<vmem>>, %arg7: memref<32x32xbf16, #tpu.memory_space<vmem>>, %arg8: memref<1x32xf32, #tpu.memory_space<vmem>>, %arg9: memref<1x32xf32, #tpu.memory_space<vmem>>, %arg10: memref<1x32xf32, #tpu.memory_space<vmem>>, %arg11: memref<32x128xbf16, #tpu.memory_space<vmem>>, %arg12: memref<1x128xf32, #tpu.memory_space<vmem>>, %arg13: memref<128x32xbf16, #tpu.memory_space<vmem>>, %arg14: memref<1x32xf32, #tpu.memory_space<vmem>>, %arg15: memref<8x32xf32, #tpu.memory_space<vmem>>, %arg16: memref<8x32xbf16, #tpu.memory_space<vmem>>) attributes {dimension_semantics = [#tpu.dimension_semantics<parallel>], iteration_bounds = array<i64: 2>, scalar_prefetch = 0 : i64, scratch_operands = 1 : i64, tpu.core_type = #tpu.core_type<tc>, window_params = [{transform_indices = @transform_0, window_bounds = array<i64: 8, 32>}, {pipeline_mode = #tpu.pipeline_mode<synchronous>, transform_indices = @transform_1, window_bounds = array<i64: 1, 32>}, {pipeline_mode = #tpu.pipeline_mode<synchronous>, transform_indices = @transform_2, window_bounds = array<i64: 1, 32>}, {pipeline_mode = #tpu.pipeline_mode<synchronous>, transform_indices = @transform_3, window_bounds = array<i64: 32, 32>}, {pipeline_mode = #tpu.pipeline_mode<synchronous>, transform_indices = @transform_4, window_bounds = array<i64: 32, 32>}, {pipeline_mode = #tpu.pipeline_mode<synchronous>, transform_indices = @transform_5, window_bounds = array<i64: 32, 32>}, {pipeline_mode = #tpu.pipeline_mode<synchronous>, transform_indices = @transform_6, window_bounds = array<i64: 32, 32>}, {pipeline_mode = #tpu.pipeline_mode<synchronous>, transform_indices = @transform_7, window_bounds = array<i64: 1, 32>}, {pipeline_mode = #tpu.pipeline_mode<synchronous>, transform_indices = @transform_8, window_bounds = array<i64: 1, 32>}, {pipeline_mode = #tpu.pipeline_mode<synchronous>, transform_indices = @transform_9, window_bounds = array<i64: 1, 32>}, {pipeline_mode = #tpu.pipeline_mode<synchronous>, transform_indices = @transform_10, window_bounds = array<i64: 32, 128>}, {pipeline_mode = #tpu.pipeline_mode<synchronous>, transform_indices = @transform_11, window_bounds = array<i64: 1, 128>}, {pipeline_mode = #tpu.pipeline_mode<synchronous>, transform_indices = @transform_12, window_bounds = array<i64: 128, 32>}, {pipeline_mode = #tpu.pipeline_mode<synchronous>, transform_indices = @transform_13, window_bounds = array<i64: 1, 32>}, {transform_indices = @transform_14, window_bounds = array<i64: 8, 32>}]} {
    %c0 = arith.constant 0 : index
    %c0_0 = arith.constant 0 : index
    %0 = vector.load %arg1[%c0, %c0_0] : memref<8x32xf32, #tpu.memory_space<vmem>>, vector<8x32xf32>
    %c0_1 = arith.constant 0 : index
    %c0_2 = arith.constant 0 : index
    %1 = vector.load %arg2[%c0_1, %c0_2] : memref<1x32xf32, #tpu.memory_space<vmem>>, vector<1x32xf32>
    %c0_3 = arith.constant 0 : index
    %c0_4 = arith.constant 0 : index
    %2 = vector.load %arg3[%c0_3, %c0_4] : memref<1x32xf32, #tpu.memory_space<vmem>>, vector<1x32xf32>
    %cst = arith.constant dense<0.000000e+00> : vector<8xf32>
    %3 = vector.multi_reduction <add>, %0, %cst [1] : vector<8x32xf32> to vector<8xf32>
    %4 = vector.shape_cast %3 : vector<8xf32> to vector<8x1xf32>
    %cst_5 = arith.constant 3.200000e+01 : f32
    %5 = vector.broadcast %cst_5 : f32 to vector<8x1xf32>
    %6 = arith.divf %4, %5 : vector<8x1xf32>
    %7 = vector.broadcast %6 : vector<8x1xf32> to vector<8x32xf32>
    %8 = arith.subf %0, %7 : vector<8x32xf32>
    %9 = arith.mulf %8, %8 : vector<8x32xf32>
    %cst_6 = arith.constant dense<0.000000e+00> : vector<8xf32>
    %10 = vector.multi_reduction <add>, %9, %cst_6 [1] : vector<8x32xf32> to vector<8xf32>
    %11 = vector.shape_cast %10 : vector<8xf32> to vector<8x1xf32>
    %cst_7 = arith.constant 3.200000e+01 : f32
    %12 = vector.broadcast %cst_7 : f32 to vector<8x1xf32>
    %13 = arith.divf %11, %12 : vector<8x1xf32>
    %cst_8 = arith.constant 9.99999974E-6 : f32
    %14 = vector.broadcast %cst_8 : f32 to vector<8x1xf32>
    %15 = arith.addf %13, %14 : vector<8x1xf32>
    %16 = math.rsqrt %15 : vector<8x1xf32>
    %17 = vector.broadcast %16 : vector<8x1xf32> to vector<8x32xf32>
    %18 = arith.mulf %8, %17 : vector<8x32xf32>
    %19 = vector.broadcast %1 : vector<1x32xf32> to vector<8x32xf32>
    %20 = arith.mulf %18, %19 : vector<8x32xf32>
    %21 = vector.broadcast %2 : vector<1x32xf32> to vector<8x32xf32>
    %22 = arith.addf %20, %21 : vector<8x32xf32>
    %23 = arith.truncf %22 : vector<8x32xf32> to vector<8x32xbf16>
    %c0_9 = arith.constant 0 : index
    %c0_10 = arith.constant 0 : index
    %24 = vector.load %arg4[%c0_9, %c0_10] : memref<32x32xbf16, #tpu.memory_space<vmem>>, vector<32x32xbf16>
    %cst_11 = arith.constant dense<0.000000e+00> : vector<8x32xf32>
    %25 = tpu.matmul %23, %24, %cst_11 {dimension_numbers = #tpu.dot_dimension_numbers<[1], [0], [0], [1], [0, 0, 1, 1], [], []>} : vector<8x32xbf16>, vector<32x32xbf16>, vector<8x32xf32> -> vector<8x32xf32>
    %26 = arith.truncf %25 : vector<8x32xf32> to vector<8x32xbf16>
    %c0_12 = arith.constant 0 : index
    %c0_13 = arith.constant 0 : index
    %27 = vector.load %arg5[%c0_12, %c0_13] : memref<32x32xbf16, #tpu.memory_space<vmem>>, vector<32x32xbf16>
    %cst_14 = arith.constant dense<0.000000e+00> : vector<8x32xf32>
    %28 = tpu.matmul %23, %27, %cst_14 {dimension_numbers = #tpu.dot_dimension_numbers<[1], [0], [0], [1], [0, 0, 1, 1], [], []>} : vector<8x32xbf16>, vector<32x32xbf16>, vector<8x32xf32> -> vector<8x32xf32>
    %29 = arith.truncf %28 : vector<8x32xf32> to vector<8x32xbf16>
    %c0_15 = arith.constant 0 : index
    %c0_16 = arith.constant 0 : index
    %30 = vector.load %arg6[%c0_15, %c0_16] : memref<32x32xbf16, #tpu.memory_space<vmem>>, vector<32x32xbf16>
    %cst_17 = arith.constant dense<0.000000e+00> : vector<8x32xf32>
    %31 = tpu.matmul %23, %30, %cst_17 {dimension_numbers = #tpu.dot_dimension_numbers<[1], [0], [0], [1], [0, 0, 1, 1], [], []>} : vector<8x32xbf16>, vector<32x32xbf16>, vector<8x32xf32> -> vector<8x32xf32>
    %32 = arith.truncf %31 : vector<8x32xf32> to vector<8x32xbf16>
    %33 = vector.extract_strided_slice %26 {offsets = [0, 0], sizes = [8, 8], strides = [1, 1]} : vector<8x32xbf16> to vector<8x8xbf16>
    %34 = vector.shape_cast %33 : vector<8x8xbf16> to vector<1x8x8xbf16>
    %35 = vector.extract_strided_slice %29 {offsets = [0, 0], sizes = [8, 8], strides = [1, 1]} : vector<8x32xbf16> to vector<8x8xbf16>
    %36 = vector.shape_cast %35 : vector<8x8xbf16> to vector<1x8x8xbf16>
    %37 = vector.extract_strided_slice %32 {offsets = [0, 0], sizes = [8, 8], strides = [1, 1]} : vector<8x32xbf16> to vector<8x8xbf16>
    %38 = vector.shape_cast %37 : vector<8x8xbf16> to vector<1x8x8xbf16>
    "tpu.trace_start"() <{level = 10 : i32, message = "bqd,bkd->bqk"}> : () -> ()
    %cst_18 = arith.constant dense<0.000000e+00> : vector<1x8x8xf32>
    %39 = tpu.matmul %34, %36, %cst_18 {dimension_numbers = #tpu.dot_dimension_numbers<[2], [2], [1], [1], [0, 0, 0, 1, 1, 1], [0], [0]>} : vector<1x8x8xbf16>, vector<1x8x8xbf16>, vector<1x8x8xf32> -> vector<1x8x8xf32>
    "tpu.trace_stop"() : () -> ()
    %cst_19 = arith.constant dense<0xFF800000> : vector<1x8xf32>
    %40 = vector.multi_reduction <maximumf>, %39, %cst_19 [2] : vector<1x8x8xf32> to vector<1x8xf32>
    %41 = vector.shape_cast %40 : vector<1x8xf32> to vector<1x8x1xf32>
    %42 = vector.broadcast %41 : vector<1x8x1xf32> to vector<1x8x8xf32>
    %43 = arith.subf %39, %42 : vector<1x8x8xf32>
    %44 = math.exp %43 : vector<1x8x8xf32>
    %cst_20 = arith.constant dense<0.000000e+00> : vector<1x8xf32>
    %45 = vector.multi_reduction <add>, %44, %cst_20 [2] : vector<1x8x8xf32> to vector<1x8xf32>
    %46 = vector.shape_cast %45 : vector<1x8xf32> to vector<1x8x1xf32>
    %47 = tpu.reciprocal %46 {approx = true} : vector<1x8x1xf32> -> vector<1x8x1xf32>
    %48 = vector.broadcast %47 : vector<1x8x1xf32> to vector<1x8x8xf32>
    %49 = arith.mulf %44, %48 : vector<1x8x8xf32>
    %50 = arith.truncf %49 : vector<1x8x8xf32> to vector<1x8x8xbf16>
    "tpu.trace_start"() <{level = 10 : i32, message = "bqk,bkd->bqd"}> : () -> ()
    %cst_21 = arith.constant dense<0.000000e+00> : vector<1x8x8xf32>
    %51 = tpu.matmul %50, %38, %cst_21 {dimension_numbers = #tpu.dot_dimension_numbers<[2], [1], [1], [2], [0, 0, 0, 1, 1, 2], [0], [0]>} : vector<1x8x8xbf16>, vector<1x8x8xbf16>, vector<1x8x8xf32> -> vector<1x8x8xf32>
    "tpu.trace_stop"() : () -> ()
    %52 = vector.shape_cast %51 : vector<1x8x8xf32> to vector<8x8xf32>
    %53 = arith.truncf %52 : vector<8x8xf32> to vector<8x8xbf16>
    %c0_22 = arith.constant 0 : index
    %c0_23 = arith.constant 0 : index
    %54 = vector.load %arg16[%c0_22, %c0_23] : memref<8x32xbf16, #tpu.memory_space<vmem>>, vector<8x8xbf16>
    tpu.vector_store %arg16[%c0_22, %c0_23], %53 {strides = array<i32>} : memref<8x32xbf16, #tpu.memory_space<vmem>>, vector<8x8xbf16>,
    %55 = vector.extract_strided_slice %26 {offsets = [0, 8], sizes = [8, 8], strides = [1, 1]} : vector<8x32xbf16> to vector<8x8xbf16>
    %56 = vector.shape_cast %55 : vector<8x8xbf16> to vector<1x8x8xbf16>
    %57 = vector.extract_strided_slice %29 {offsets = [0, 8], sizes = [8, 8], strides = [1, 1]} : vector<8x32xbf16> to vector<8x8xbf16>
    %58 = vector.shape_cast %57 : vector<8x8xbf16> to vector<1x8x8xbf16>
    %59 = vector.extract_strided_slice %32 {offsets = [0, 8], sizes = [8, 8], strides = [1, 1]} : vector<8x32xbf16> to vector<8x8xbf16>
    %60 = vector.shape_cast %59 : vector<8x8xbf16> to vector<1x8x8xbf16>
    "tpu.trace_start"() <{level = 10 : i32, message = "bqd,bkd->bqk"}> : () -> ()
    %cst_24 = arith.constant dense<0.000000e+00> : vector<1x8x8xf32>
    %61 = tpu.matmul %56, %58, %cst_24 {dimension_numbers = #tpu.dot_dimension_numbers<[2], [2], [1], [1], [0, 0, 0, 1, 1, 1], [0], [0]>} : vector<1x8x8xbf16>, vector<1x8x8xbf16>, vector<1x8x8xf32> -> vector<1x8x8xf32>
    "tpu.trace_stop"() : () -> ()
    %cst_25 = arith.constant dense<0xFF800000> : vector<1x8xf32>
    %62 = vector.multi_reduction <maximumf>, %61, %cst_25 [2] : vector<1x8x8xf32> to vector<1x8xf32>
    %63 = vector.shape_cast %62 : vector<1x8xf32> to vector<1x8x1xf32>
    %64 = vector.broadcast %63 : vector<1x8x1xf32> to vector<1x8x8xf32>
    %65 = arith.subf %61, %64 : vector<1x8x8xf32>
    %66 = math.exp %65 : vector<1x8x8xf32>
    %cst_26 = arith.constant dense<0.000000e+00> : vector<1x8xf32>
    %67 = vector.multi_reduction <add>, %66, %cst_26 [2] : vector<1x8x8xf32> to vector<1x8xf32>
    %68 = vector.shape_cast %67 : vector<1x8xf32> to vector<1x8x1xf32>
    %69 = tpu.reciprocal %68 {approx = true} : vector<1x8x1xf32> -> vector<1x8x1xf32>
    %70 = vector.broadcast %69 : vector<1x8x1xf32> to vector<1x8x8xf32>
    %71 = arith.mulf %66, %70 : vector<1x8x8xf32>
    %72 = arith.truncf %71 : vector<1x8x8xf32> to vector<1x8x8xbf16>
    "tpu.trace_start"() <{level = 10 : i32, message = "bqk,bkd->bqd"}> : () -> ()
    %cst_27 = arith.constant dense<0.000000e+00> : vector<1x8x8xf32>
    %73 = tpu.matmul %72, %60, %cst_27 {dimension_numbers = #tpu.dot_dimension_numbers<[2], [1], [1], [2], [0, 0, 0, 1, 1, 2], [0], [0]>} : vector<1x8x8xbf16>, vector<1x8x8xbf16>, vector<1x8x8xf32> -> vector<1x8x8xf32>
    "tpu.trace_stop"() : () -> ()
    %74 = vector.shape_cast %73 : vector<1x8x8xf32> to vector<8x8xf32>
    %75 = arith.truncf %74 : vector<8x8xf32> to vector<8x8xbf16>
    %c0_28 = arith.constant 0 : index
    %c8 = arith.constant 8 : index
    %76 = vector.load %arg16[%c0_28, %c8] : memref<8x32xbf16, #tpu.memory_space<vmem>>, vector<8x8xbf16>
    tpu.vector_store %arg16[%c0_28, %c8], %75 {strides = array<i32>} : memref<8x32xbf16, #tpu.memory_space<vmem>>, vector<8x8xbf16>,
    %77 = vector.extract_strided_slice %26 {offsets = [0, 16], sizes = [8, 8], strides = [1, 1]} : vector<8x32xbf16> to vector<8x8xbf16>
    %78 = vector.shape_cast %77 : vector<8x8xbf16> to vector<1x8x8xbf16>
    %79 = vector.extract_strided_slice %29 {offsets = [0, 16], sizes = [8, 8], strides = [1, 1]} : vector<8x32xbf16> to vector<8x8xbf16>
    %80 = vector.shape_cast %79 : vector<8x8xbf16> to vector<1x8x8xbf16>
    %81 = vector.extract_strided_slice %32 {offsets = [0, 16], sizes = [8, 8], strides = [1, 1]} : vector<8x32xbf16> to vector<8x8xbf16>
    %82 = vector.shape_cast %81 : vector<8x8xbf16> to vector<1x8x8xbf16>
    "tpu.trace_start"() <{level = 10 : i32, message = "bqd,bkd->bqk"}> : () -> ()
    %cst_29 = arith.constant dense<0.000000e+00> : vector<1x8x8xf32>
    %83 = tpu.matmul %78, %80, %cst_29 {dimension_numbers = #tpu.dot_dimension_numbers<[2], [2], [1], [1], [0, 0, 0, 1, 1, 1], [0], [0]>} : vector<1x8x8xbf16>, vector<1x8x8xbf16>, vector<1x8x8xf32> -> vector<1x8x8xf32>
    "tpu.trace_stop"() : () -> ()
    %cst_30 = arith.constant dense<0xFF800000> : vector<1x8xf32>
    %84 = vector.multi_reduction <maximumf>, %83, %cst_30 [2] : vector<1x8x8xf32> to vector<1x8xf32>
    %85 = vector.shape_cast %84 : vector<1x8xf32> to vector<1x8x1xf32>
    %86 = vector.broadcast %85 : vector<1x8x1xf32> to vector<1x8x8xf32>
    %87 = arith.subf %83, %86 : vector<1x8x8xf32>
    %88 = math.exp %87 : vector<1x8x8xf32>
    %cst_31 = arith.constant dense<0.000000e+00> : vector<1x8xf32>
    %89 = vector.multi_reduction <add>, %88, %cst_31 [2] : vector<1x8x8xf32> to vector<1x8xf32>
    %90 = vector.shape_cast %89 : vector<1x8xf32> to vector<1x8x1xf32>
    %91 = tpu.reciprocal %90 {approx = true} : vector<1x8x1xf32> -> vector<1x8x1xf32>
    %92 = vector.broadcast %91 : vector<1x8x1xf32> to vector<1x8x8xf32>
    %93 = arith.mulf %88, %92 : vector<1x8x8xf32>
    %94 = arith.truncf %93 : vector<1x8x8xf32> to vector<1x8x8xbf16>
    "tpu.trace_start"() <{level = 10 : i32, message = "bqk,bkd->bqd"}> : () -> ()
    %cst_32 = arith.constant dense<0.000000e+00> : vector<1x8x8xf32>
    %95 = tpu.matmul %94, %82, %cst_32 {dimension_numbers = #tpu.dot_dimension_numbers<[2], [1], [1], [2], [0, 0, 0, 1, 1, 2], [0], [0]>} : vector<1x8x8xbf16>, vector<1x8x8xbf16>, vector<1x8x8xf32> -> vector<1x8x8xf32>
    "tpu.trace_stop"() : () -> ()
    %96 = vector.shape_cast %95 : vector<1x8x8xf32> to vector<8x8xf32>
    %97 = arith.truncf %96 : vector<8x8xf32> to vector<8x8xbf16>
    %c0_33 = arith.constant 0 : index
    %c16 = arith.constant 16 : index
    %98 = vector.load %arg16[%c0_33, %c16] : memref<8x32xbf16, #tpu.memory_space<vmem>>, vector<8x8xbf16>
    tpu.vector_store %arg16[%c0_33, %c16], %97 {strides = array<i32>} : memref<8x32xbf16, #tpu.memory_space<vmem>>, vector<8x8xbf16>,
    %99 = vector.extract_strided_slice %26 {offsets = [0, 24], sizes = [8, 8], strides = [1, 1]} : vector<8x32xbf16> to vector<8x8xbf16>
    %100 = vector.shape_cast %99 : vector<8x8xbf16> to vector<1x8x8xbf16>
    %101 = vector.extract_strided_slice %29 {offsets = [0, 24], sizes = [8, 8], strides = [1, 1]} : vector<8x32xbf16> to vector<8x8xbf16>
    %102 = vector.shape_cast %101 : vector<8x8xbf16> to vector<1x8x8xbf16>
    %103 = vector.extract_strided_slice %32 {offsets = [0, 24], sizes = [8, 8], strides = [1, 1]} : vector<8x32xbf16> to vector<8x8xbf16>
    %104 = vector.shape_cast %103 : vector<8x8xbf16> to vector<1x8x8xbf16>
    "tpu.trace_start"() <{level = 10 : i32, message = "bqd,bkd->bqk"}> : () -> ()
    %cst_34 = arith.constant dense<0.000000e+00> : vector<1x8x8xf32>
    %105 = tpu.matmul %100, %102, %cst_34 {dimension_numbers = #tpu.dot_dimension_numbers<[2], [2], [1], [1], [0, 0, 0, 1, 1, 1], [0], [0]>} : vector<1x8x8xbf16>, vector<1x8x8xbf16>, vector<1x8x8xf32> -> vector<1x8x8xf32>
    "tpu.trace_stop"() : () -> ()
    %cst_35 = arith.constant dense<0xFF800000> : vector<1x8xf32>
    %106 = vector.multi_reduction <maximumf>, %105, %cst_35 [2] : vector<1x8x8xf32> to vector<1x8xf32>
    %107 = vector.shape_cast %106 : vector<1x8xf32> to vector<1x8x1xf32>
    %108 = vector.broadcast %107 : vector<1x8x1xf32> to vector<1x8x8xf32>
    %109 = arith.subf %105, %108 : vector<1x8x8xf32>
    %110 = math.exp %109 : vector<1x8x8xf32>
    %cst_36 = arith.constant dense<0.000000e+00> : vector<1x8xf32>
    %111 = vector.multi_reduction <add>, %110, %cst_36 [2] : vector<1x8x8xf32> to vector<1x8xf32>
    %112 = vector.shape_cast %111 : vector<1x8xf32> to vector<1x8x1xf32>
    %113 = tpu.reciprocal %112 {approx = true} : vector<1x8x1xf32> -> vector<1x8x1xf32>
    %114 = vector.broadcast %113 : vector<1x8x1xf32> to vector<1x8x8xf32>
    %115 = arith.mulf %110, %114 : vector<1x8x8xf32>
    %116 = arith.truncf %115 : vector<1x8x8xf32> to vector<1x8x8xbf16>
    "tpu.trace_start"() <{level = 10 : i32, message = "bqk,bkd->bqd"}> : () -> ()
    %cst_37 = arith.constant dense<0.000000e+00> : vector<1x8x8xf32>
    %117 = tpu.matmul %116, %104, %cst_37 {dimension_numbers = #tpu.dot_dimension_numbers<[2], [1], [1], [2], [0, 0, 0, 1, 1, 2], [0], [0]>} : vector<1x8x8xbf16>, vector<1x8x8xbf16>, vector<1x8x8xf32> -> vector<1x8x8xf32>
    "tpu.trace_stop"() : () -> ()
    %118 = vector.shape_cast %117 : vector<1x8x8xf32> to vector<8x8xf32>
    %119 = arith.truncf %118 : vector<8x8xf32> to vector<8x8xbf16>
    %c0_38 = arith.constant 0 : index
    %c24 = arith.constant 24 : index
    %120 = vector.load %arg16[%c0_38, %c24] : memref<8x32xbf16, #tpu.memory_space<vmem>>, vector<8x8xbf16>
    tpu.vector_store %arg16[%c0_38, %c24], %119 {strides = array<i32>} : memref<8x32xbf16, #tpu.memory_space<vmem>>, vector<8x8xbf16>,
    %c0_39 = arith.constant 0 : index
    %c0_40 = arith.constant 0 : index
    %121 = vector.load %arg16[%c0_39, %c0_40] : memref<8x32xbf16, #tpu.memory_space<vmem>>, vector<8x32xbf16>
    %c0_41 = arith.constant 0 : index
    %c0_42 = arith.constant 0 : index
    %122 = vector.load %arg7[%c0_41, %c0_42] : memref<32x32xbf16, #tpu.memory_space<vmem>>, vector<32x32xbf16>
    %cst_43 = arith.constant dense<0.000000e+00> : vector<8x32xf32>
    %123 = tpu.matmul %121, %122, %cst_43 {dimension_numbers = #tpu.dot_dimension_numbers<[1], [0], [0], [1], [0, 0, 1, 1], [], []>} : vector<8x32xbf16>, vector<32x32xbf16>, vector<8x32xf32> -> vector<8x32xf32>
    %c0_44 = arith.constant 0 : index
    %c0_45 = arith.constant 0 : index
    %124 = vector.load %arg8[%c0_44, %c0_45] : memref<1x32xf32, #tpu.memory_space<vmem>>, vector<1x32xf32>
    %125 = vector.broadcast %124 : vector<1x32xf32> to vector<8x32xf32>
    %126 = arith.addf %123, %125 : vector<8x32xf32>
    %127 = arith.addf %0, %126 : vector<8x32xf32>
    %c0_46 = arith.constant 0 : index
    %c0_47 = arith.constant 0 : index
    %128 = vector.load %arg9[%c0_46, %c0_47] : memref<1x32xf32, #tpu.memory_space<vmem>>, vector<1x32xf32>
    %c0_48 = arith.constant 0 : index
    %c0_49 = arith.constant 0 : index
    %129 = vector.load %arg10[%c0_48, %c0_49] : memref<1x32xf32, #tpu.memory_space<vmem>>, vector<1x32xf32>
    %cst_50 = arith.constant dense<0.000000e+00> : vector<8xf32>
    %130 = vector.multi_reduction <add>, %127, %cst_50 [1] : vector<8x32xf32> to vector<8xf32>
    %131 = vector.shape_cast %130 : vector<8xf32> to vector<8x1xf32>
    %cst_51 = arith.constant 3.200000e+01 : f32
    %132 = vector.broadcast %cst_51 : f32 to vector<8x1xf32>
    %133 = arith.divf %131, %132 : vector<8x1xf32>
    %134 = vector.broadcast %133 : vector<8x1xf32> to vector<8x32xf32>
    %135 = arith.subf %127, %134 : vector<8x32xf32>
    %136 = arith.mulf %135, %135 : vector<8x32xf32>
    %cst_52 = arith.constant dense<0.000000e+00> : vector<8xf32>
    %137 = vector.multi_reduction <add>, %136, %cst_52 [1] : vector<8x32xf32> to vector<8xf32>
    %138 = vector.shape_cast %137 : vector<8xf32> to vector<8x1xf32>
    %cst_53 = arith.constant 3.200000e+01 : f32
    %139 = vector.broadcast %cst_53 : f32 to vector<8x1xf32>
    %140 = arith.divf %138, %139 : vector<8x1xf32>
    %cst_54 = arith.constant 9.99999974E-6 : f32
    %141 = vector.broadcast %cst_54 : f32 to vector<8x1xf32>
    %142 = arith.addf %140, %141 : vector<8x1xf32>
    %143 = math.rsqrt %142 : vector<8x1xf32>
    %144 = vector.broadcast %143 : vector<8x1xf32> to vector<8x32xf32>
    %145 = arith.mulf %135, %144 : vector<8x32xf32>
    %146 = vector.broadcast %128 : vector<1x32xf32> to vector<8x32xf32>
    %147 = arith.mulf %145, %146 : vector<8x32xf32>
    %148 = vector.broadcast %129 : vector<1x32xf32> to vector<8x32xf32>
    %149 = arith.addf %147, %148 : vector<8x32xf32>
    %150 = arith.truncf %149 : vector<8x32xf32> to vector<8x32xbf16>
    %c0_55 = arith.constant 0 : index
    %c0_56 = arith.constant 0 : index
    %151 = vector.load %arg11[%c0_55, %c0_56] : memref<32x128xbf16, #tpu.memory_space<vmem>>, vector<32x128xbf16>
    %cst_57 = arith.constant dense<0.000000e+00> : vector<8x128xf32>
    %152 = tpu.matmul %150, %151, %cst_57 {dimension_numbers = #tpu.dot_dimension_numbers<[1], [0], [0], [1], [0, 0, 1, 1], [], []>} : vector<8x32xbf16>, vector<32x128xbf16>, vector<8x128xf32> -> vector<8x128xf32>
    %c0_58 = arith.constant 0 : index
    %c0_59 = arith.constant 0 : index
    %153 = vector.load %arg12[%c0_58, %c0_59] : memref<1x128xf32, #tpu.memory_space<vmem>>, vector<1x128xf32>
    %154 = vector.broadcast %153 : vector<1x128xf32> to vector<8x128xf32>
    %155 = arith.addf %152, %154 : vector<8x128xf32>
    %cst_60 = arith.constant 5.000000e-01 : f32
    %156 = vector.broadcast %cst_60 : f32 to vector<8x128xf32>
    %157 = arith.mulf %156, %155 : vector<8x128xf32>
    %cst_61 = arith.constant 4.471500e-02 : f32
    %158 = vector.broadcast %cst_61 : f32 to vector<8x128xf32>
    %159 = arith.mulf %158, %155 : vector<8x128xf32>
    %160 = arith.mulf %159, %155 : vector<8x128xf32>
    %161 = arith.mulf %160, %155 : vector<8x128xf32>
    %162 = arith.addf %155, %161 : vector<8x128xf32>
    %cst_62 = arith.constant 0.797884583 : f32
    %163 = vector.broadcast %cst_62 : f32 to vector<8x128xf32>
    %164 = arith.mulf %163, %162 : vector<8x128xf32>
    %165 = math.tanh %164 : vector<8x128xf32>
    %cst_63 = arith.constant 1.000000e+00 : f32
    %166 = vector.broadcast %cst_63 : f32 to vector<8x128xf32>
    %167 = arith.addf %166, %165 : vector<8x128xf32>
    %168 = arith.mulf %157, %167 : vector<8x128xf32>
    %169 = arith.truncf %168 : vector<8x128xf32> to vector<8x128xbf16>
    %c0_64 = arith.constant 0 : index
    %c0_65 = arith.constant 0 : index
    %170 = vector.load %arg13[%c0_64, %c0_65] : memref<128x32xbf16, #tpu.memory_space<vmem>>, vector<128x32xbf16>
    %cst_66 = arith.constant dense<0.000000e+00> : vector<8x32xf32>
    %171 = tpu.matmul %169, %170, %cst_66 {dimension_numbers = #tpu.dot_dimension_numbers<[1], [0], [0], [1], [0, 0, 1, 1], [], []>} : vector<8x128xbf16>, vector<128x32xbf16>, vector<8x32xf32> -> vector<8x32xf32>
    %c0_67 = arith.constant 0 : index
    %c0_68 = arith.constant 0 : index
    %172 = vector.load %arg14[%c0_67, %c0_68] : memref<1x32xf32, #tpu.memory_space<vmem>>, vector<1x32xf32>
    %173 = vector.broadcast %172 : vector<1x32xf32> to vector<8x32xf32>
    %174 = arith.addf %171, %173 : vector<8x32xf32>
    %175 = arith.addf %127, %174 : vector<8x32xf32>
    %c0_69 = arith.constant 0 : index
    %c0_70 = arith.constant 0 : index
    %176 = vector.load %arg15[%c0_69, %c0_70] : memref<8x32xf32, #tpu.memory_space<vmem>>, vector<8x32xf32>
    tpu.vector_store %arg15[%c0_69, %c0_70], %175 {strides = array<i32>} : memref<8x32xf32, #tpu.memory_space<vmem>>, vector<8x32xf32>,
    return
  }
  func.func @transform_0(%arg0: i32) -> (i32, i32) {
    %c0_i32 = arith.constant 0 : i32
    %c0_i32_0 = arith.constant 0 : i32
    return %arg0, %c0_i32 : i32, i32
  }
  func.func @transform_1(%arg0: i32) -> (i32, i32) {
    %c0_i32 = arith.constant 0 : i32
    %c0_i32_0 = arith.constant 0 : i32
    %c0_i32_1 = arith.constant 0 : i32
    return %c0_i32, %c0_i32_0 : i32, i32
  }
  func.func @transform_2(%arg0: i32) -> (i32, i32) {
    %c0_i32 = arith.constant 0 : i32
    %c0_i32_0 = arith.constant 0 : i32
    %c0_i32_1 = arith.constant 0 : i32
    return %c0_i32, %c0_i32_0 : i32, i32
  }
  func.func @transform_3(%arg0: i32) -> (i32, i32) {
    %c0_i32 = arith.constant 0 : i32
    %c0_i32_0 = arith.constant 0 : i32
    %c0_i32_1 = arith.constant 0 : i32
    return %c0_i32, %c0_i32_0 : i32, i32
  }
  func.func @transform_4(%arg0: i32) -> (i32, i32) {
    %c0_i32 = arith.constant 0 : i32
    %c0_i32_0 = arith.constant 0 : i32
    %c0_i32_1 = arith.constant 0 : i32
    return %c0_i32, %c0_i32_0 : i32, i32
  }
  func.func @transform_5(%arg0: i32) -> (i32, i32) {
    %c0_i32 = arith.constant 0 : i32
    %c0_i32_0 = arith.constant 0 : i32
    %c0_i32_1 = arith.constant 0 : i32
    return %c0_i32, %c0_i32_0 : i32, i32
  }
  func.func @transform_6(%arg0: i32) -> (i32, i32) {
    %c0_i32 = arith.constant 0 : i32
    %c0_i32_0 = arith.constant 0 : i32
    %c0_i32_1 = arith.constant 0 : i32
    return %c0_i32, %c0_i32_0 : i32, i32
  }
  func.func @transform_7(%arg0: i32) -> (i32, i32) {
    %c0_i32 = arith.constant 0 : i32
    %c0_i32_0 = arith.constant 0 : i32
    %c0_i32_1 = arith.constant 0 : i32
    return %c0_i32, %c0_i32_0 : i32, i32
  }
  func.func @transform_8(%arg0: i32) -> (i32, i32) {
    %c0_i32 = arith.constant 0 : i32
    %c0_i32_0 = arith.constant 0 : i32
    %c0_i32_1 = arith.constant 0 : i32
    return %c0_i32, %c0_i32_0 : i32, i32
  }
  func.func @transform_9(%arg0: i32) -> (i32, i32) {
    %c0_i32 = arith.constant 0 : i32
    %c0_i32_0 = arith.constant 0 : i32
    %c0_i32_1 = arith.constant 0 : i32
    return %c0_i32, %c0_i32_0 : i32, i32
  }
  func.func @transform_10(%arg0: i32) -> (i32, i32) {
    %c0_i32 = arith.constant 0 : i32
    %c0_i32_0 = arith.constant 0 : i32
    %c0_i32_1 = arith.constant 0 : i32
    return %c0_i32, %c0_i32_0 : i32, i32
  }
  func.func @transform_11(%arg0: i32) -> (i32, i32) {
    %c0_i32 = arith.constant 0 : i32
    %c0_i32_0 = arith.constant 0 : i32
    %c0_i32_1 = arith.constant 0 : i32
    return %c0_i32, %c0_i32_0 : i32, i32
  }
  func.func @transform_12(%arg0: i32) -> (i32, i32) {
    %c0_i32 = arith.constant 0 : i32
    %c0_i32_0 = arith.constant 0 : i32
    %c0_i32_1 = arith.constant 0 : i32
    return %c0_i32, %c0_i32_0 : i32, i32
  }
  func.func @transform_13(%arg0: i32) -> (i32, i32) {
    %c0_i32 = arith.constant 0 : i32
    %c0_i32_0 = arith.constant 0 : i32
    %c0_i32_1 = arith.constant 0 : i32
    return %c0_i32, %c0_i32_0 : i32, i32
  }
  func.func @transform_14(%arg0: i32) -> (i32, i32) {
    %c0_i32 = arith.constant 0 : i32
    %c0_i32_0 = arith.constant 0 : i32
    return %arg0, %c0_i32 : i32, i32
  }
}

module attributes {stable_mosaic.version = 11 : i64} {
  func.func @_encoder_kernel(%arg0: i32, %arg1: memref<8x32xf32, #tpu.memory_space<vmem>>, %arg2: memref<1x32xf32, #tpu.memory_space<vmem>>, %arg3: memref<1x32xf32, #tpu.memory_space<vmem>>, %arg4: memref<32x32xbf16, #tpu.memory_space<vmem>>, %arg5: memref<32x32xbf16, #tpu.memory_space<vmem>>, %arg6: memref<32x32xbf16, #tpu.memory_space<vmem>>, %arg7: memref<32x32xbf16, #tpu.memory_space<vmem>>, %arg8: memref<1x32xf32, #tpu.memory_space<vmem>>, %arg9: memref<1x32xf32, #tpu.memory_space<vmem>>, %arg10: memref<1x32xf32, #tpu.memory_space<vmem>>, %arg11: memref<32x128xbf16, #tpu.memory_space<vmem>>, %arg12: memref<1x128xf32, #tpu.memory_space<vmem>>, %arg13: memref<128x32xbf16, #tpu.memory_space<vmem>>, %arg14: memref<1x32xf32, #tpu.memory_space<vmem>>, %arg15: memref<8x32xf32, #tpu.memory_space<vmem>>, %arg16: memref<8x32xbf16, #tpu.memory_space<vmem>>) attributes {dimension_semantics = [#tpu.dimension_semantics<parallel>], iteration_bounds = array<i64: 2>, scalar_prefetch = 0 : i64, scratch_operands = 1 : i64, tpu.core_type = #tpu.core_type<tc>, window_params = [{transform_indices = @transform_0, window_bounds = array<i64: 8, 32>}, {pipeline_mode = #tpu.pipeline_mode<synchronous>, transform_indices = @transform_1, window_bounds = array<i64: 1, 32>}, {pipeline_mode = #tpu.pipeline_mode<synchronous>, transform_indices = @transform_2, window_bounds = array<i64: 1, 32>}, {pipeline_mode = #tpu.pipeline_mode<synchronous>, transform_indices = @transform_3, window_bounds = array<i64: 32, 32>}, {pipeline_mode = #tpu.pipeline_mode<synchronous>, transform_indices = @transform_4, window_bounds = array<i64: 32, 32>}, {pipeline_mode = #tpu.pipeline_mode<synchronous>, transform_indices = @transform_5, window_bounds = array<i64: 32, 32>}, {pipeline_mode = #tpu.pipeline_mode<synchronous>, transform_indices = @transform_6, window_bounds = array<i64: 32, 32>}, {pipeline_mode = #tpu.pipeline_mode<synchronous>, transform_indices = @transform_7, window_bounds = array<i64: 1, 32>}, {pipeline_mode = #tpu.pipeline_mode<synchronous>, transform_indices = @transform_8, window_bounds = array<i64: 1, 32>}, {pipeline_mode = #tpu.pipeline_mode<synchronous>, transform_indices = @transform_9, window_bounds = array<i64: 1, 32>}, {pipeline_mode = #tpu.pipeline_mode<synchronous>, transform_indices = @transform_10, window_bounds = array<i64: 32, 128>}, {pipeline_mode = #tpu.pipeline_mode<synchronous>, transform_indices = @transform_11, window_bounds = array<i64: 1, 128>}, {pipeline_mode = #tpu.pipeline_mode<synchronous>, transform_indices = @transform_12, window_bounds = array<i64: 128, 32>}, {pipeline_mode = #tpu.pipeline_mode<synchronous>, transform_indices = @transform_13, window_bounds = array<i64: 1, 32>}, {transform_indices = @transform_14, window_bounds = array<i64: 8, 32>}]} {
    %c0 = arith.constant 0 : index
    %c0_0 = arith.constant 0 : index
    %0 = vector.load %arg1[%c0, %c0_0] : memref<8x32xf32, #tpu.memory_space<vmem>>, vector<8x32xf32>
    %c0_1 = arith.constant 0 : index
    %c0_2 = arith.constant 0 : index
    %1 = vector.load %arg2[%c0_1, %c0_2] : memref<1x32xf32, #tpu.memory_space<vmem>>, vector<1x32xf32>
    %c0_3 = arith.constant 0 : index
    %c0_4 = arith.constant 0 : index
    %2 = vector.load %arg3[%c0_3, %c0_4] : memref<1x32xf32, #tpu.memory_space<vmem>>, vector<1x32xf32>
    %cst = arith.constant dense<0.000000e+00> : vector<8xf32>
    %3 = vector.multi_reduction <add>, %0, %cst [1] : vector<8x32xf32> to vector<8xf32>
    %4 = vector.shape_cast %3 : vector<8xf32> to vector<8x1xf32>
    %cst_5 = arith.constant 3.200000e+01 : f32
    %5 = vector.broadcast %cst_5 : f32 to vector<8x1xf32>
    %6 = arith.divf %4, %5 : vector<8x1xf32>
    %7 = vector.broadcast %6 : vector<8x1xf32> to vector<8x32xf32>
    %8 = arith.subf %0, %7 : vector<8x32xf32>
    %9 = arith.mulf %8, %8 : vector<8x32xf32>
    %cst_6 = arith.constant dense<0.000000e+00> : vector<8xf32>
    %10 = vector.multi_reduction <add>, %9, %cst_6 [1] : vector<8x32xf32> to vector<8xf32>
    %11 = vector.shape_cast %10 : vector<8xf32> to vector<8x1xf32>
    %cst_7 = arith.constant 3.200000e+01 : f32
    %12 = vector.broadcast %cst_7 : f32 to vector<8x1xf32>
    %13 = arith.divf %11, %12 : vector<8x1xf32>
    %cst_8 = arith.constant 9.99999974E-6 : f32
    %14 = vector.broadcast %cst_8 : f32 to vector<8x1xf32>
    %15 = arith.addf %13, %14 : vector<8x1xf32>
    %16 = math.rsqrt %15 : vector<8x1xf32>
    %17 = vector.broadcast %16 : vector<8x1xf32> to vector<8x32xf32>
    %18 = arith.mulf %8, %17 : vector<8x32xf32>
    %19 = vector.broadcast %1 : vector<1x32xf32> to vector<8x32xf32>
    %20 = arith.mulf %18, %19 : vector<8x32xf32>
    %21 = vector.broadcast %2 : vector<1x32xf32> to vector<8x32xf32>
    %22 = arith.addf %20, %21 : vector<8x32xf32>
    %23 = arith.truncf %22 : vector<8x32xf32> to vector<8x32xbf16>
    %c0_9 = arith.constant 0 : index
    %c0_10 = arith.constant 0 : index
    %24 = vector.load %arg4[%c0_9, %c0_10] : memref<32x32xbf16, #tpu.memory_space<vmem>>, vector<32x32xbf16>
    %cst_11 = arith.constant dense<0.000000e+00> : vector<8x32xf32>
    %25 = tpu.matmul %23, %24, %cst_11 {dimension_numbers = #tpu.dot_dimension_numbers<[1], [0], [0], [1], [0, 0, 1, 1], [], []>} : vector<8x32xbf16>, vector<32x32xbf16>, vector<8x32xf32> -> vector<8x32xf32>
    %26 = arith.truncf %25 : vector<8x32xf32> to vector<8x32xbf16>
    %c0_12 = arith.constant 0 : index
    %c0_13 = arith.constant 0 : index
    %27 = vector.load %arg5[%c0_12, %c0_13] : memref<32x32xbf16, #tpu.memory_space<vmem>>, vector<32x32xbf16>
    %cst_14 = arith.constant dense<0.000000e+00> : vector<8x32xf32>
    %28 = tpu.matmul %23, %27, %cst_14 {dimension_numbers = #tpu.dot_dimension_numbers<[1], [0], [0], [1], [0, 0, 1, 1], [], []>} : vector<8x32xbf16>, vector<32x32xbf16>, vector<8x32xf32> -> vector<8x32xf32>
    %29 = arith.truncf %28 : vector<8x32xf32> to vector<8x32xbf16>
    %c0_15 = arith.constant 0 : index
    %c0_16 = arith.constant 0 : index
    %30 = vector.load %arg6[%c0_15, %c0_16] : memref<32x32xbf16, #tpu.memory_space<vmem>>, vector<32x32xbf16>
    %cst_17 = arith.constant dense<0.000000e+00> : vector<8x32xf32>
    %31 = tpu.matmul %23, %30, %cst_17 {dimension_numbers = #tpu.dot_dimension_numbers<[1], [0], [0], [1], [0, 0, 1, 1], [], []>} : vector<8x32xbf16>, vector<32x32xbf16>, vector<8x32xf32> -> vector<8x32xf32>
    %32 = arith.truncf %31 : vector<8x32xf32> to vector<8x32xbf16>
    %33 = vector.extract_strided_slice %26 {offsets = [0, 0], sizes = [8, 8], strides = [1, 1]} : vector<8x32xbf16> to vector<8x8xbf16>
    %34 = vector.shape_cast %33 : vector<8x8xbf16> to vector<1x8x8xbf16>
    %35 = vector.extract_strided_slice %29 {offsets = [0, 0], sizes = [8, 8], strides = [1, 1]} : vector<8x32xbf16> to vector<8x8xbf16>
    %36 = vector.shape_cast %35 : vector<8x8xbf16> to vector<1x8x8xbf16>
    %37 = vector.extract_strided_slice %32 {offsets = [0, 0], sizes = [8, 8], strides = [1, 1]} : vector<8x32xbf16> to vector<8x8xbf16>
    %38 = vector.shape_cast %37 : vector<8x8xbf16> to vector<1x8x8xbf16>
    "tpu.trace_start"() <{level = 10 : i32, message = "bqd,bkd->bqk"}> : () -> ()
    %cst_18 = arith.constant dense<0.000000e+00> : vector<1x8x8xf32>
    %39 = tpu.matmul %34, %36, %cst_18 {dimension_numbers = #tpu.dot_dimension_numbers<[2], [2], [1], [1], [0, 0, 0, 1, 1, 1], [0], [0]>} : vector<1x8x8xbf16>, vector<1x8x8xbf16>, vector<1x8x8xf32> -> vector<1x8x8xf32>
    "tpu.trace_stop"() : () -> ()
    %cst_19 = arith.constant dense<0xFF800000> : vector<1x8xf32>
    %40 = vector.multi_reduction <maximumf>, %39, %cst_19 [2] : vector<1x8x8xf32> to vector<1x8xf32>
    %41 = vector.shape_cast %40 : vector<1x8xf32> to vector<1x8x1xf32>
    %42 = vector.broadcast %41 : vector<1x8x1xf32> to vector<1x8x8xf32>
    %43 = arith.subf %39, %42 : vector<1x8x8xf32>
    %44 = math.exp %43 : vector<1x8x8xf32>
    %cst_20 = arith.constant dense<0.000000e+00> : vector<1x8xf32>
    %45 = vector.multi_reduction <add>, %44, %cst_20 [2] : vector<1x8x8xf32> to vector<1x8xf32>
    %46 = vector.shape_cast %45 : vector<1x8xf32> to vector<1x8x1xf32>
    %47 = tpu.reciprocal %46 {approx = true} : vector<1x8x1xf32> -> vector<1x8x1xf32>
    %48 = vector.broadcast %47 : vector<1x8x1xf32> to vector<1x8x8xf32>
    %49 = arith.mulf %44, %48 : vector<1x8x8xf32>
    %50 = arith.truncf %49 : vector<1x8x8xf32> to vector<1x8x8xbf16>
    "tpu.trace_start"() <{level = 10 : i32, message = "bqk,bkd->bqd"}> : () -> ()
    %cst_21 = arith.constant dense<0.000000e+00> : vector<1x8x8xf32>
    %51 = tpu.matmul %50, %38, %cst_21 {dimension_numbers = #tpu.dot_dimension_numbers<[2], [1], [1], [2], [0, 0, 0, 1, 1, 2], [0], [0]>} : vector<1x8x8xbf16>, vector<1x8x8xbf16>, vector<1x8x8xf32> -> vector<1x8x8xf32>
    "tpu.trace_stop"() : () -> ()
    %52 = vector.shape_cast %51 : vector<1x8x8xf32> to vector<8x8xf32>
    %53 = arith.truncf %52 : vector<8x8xf32> to vector<8x8xbf16>
    %c0_22 = arith.constant 0 : index
    %c0_23 = arith.constant 0 : index
    %54 = vector.load %arg16[%c0_22, %c0_23] : memref<8x32xbf16, #tpu.memory_space<vmem>>, vector<8x8xbf16>
    tpu.vector_store %arg16[%c0_22, %c0_23], %53 {strides = array<i32>} : memref<8x32xbf16, #tpu.memory_space<vmem>>, vector<8x8xbf16>,
    %55 = vector.extract_strided_slice %26 {offsets = [0, 8], sizes = [8, 8], strides = [1, 1]} : vector<8x32xbf16> to vector<8x8xbf16>
    %56 = vector.shape_cast %55 : vector<8x8xbf16> to vector<1x8x8xbf16>
    %57 = vector.extract_strided_slice %29 {offsets = [0, 8], sizes = [8, 8], strides = [1, 1]} : vector<8x32xbf16> to vector<8x8xbf16>
    %58 = vector.shape_cast %57 : vector<8x8xbf16> to vector<1x8x8xbf16>
    %59 = vector.extract_strided_slice %32 {offsets = [0, 8], sizes = [8, 8], strides = [1, 1]} : vector<8x32xbf16> to vector<8x8xbf16>
    %60 = vector.shape_cast %59 : vector<8x8xbf16> to vector<1x8x8xbf16>
    "tpu.trace_start"() <{level = 10 : i32, message = "bqd,bkd->bqk"}> : () -> ()
    %cst_24 = arith.constant dense<0.000000e+00> : vector<1x8x8xf32>
    %61 = tpu.matmul %56, %58, %cst_24 {dimension_numbers = #tpu.dot_dimension_numbers<[2], [2], [1], [1], [0, 0, 0, 1, 1, 1], [0], [0]>} : vector<1x8x8xbf16>, vector<1x8x8xbf16>, vector<1x8x8xf32> -> vector<1x8x8xf32>
    "tpu.trace_stop"() : () -> ()
    %cst_25 = arith.constant dense<0xFF800000> : vector<1x8xf32>
    %62 = vector.multi_reduction <maximumf>, %61, %cst_25 [2] : vector<1x8x8xf32> to vector<1x8xf32>
    %63 = vector.shape_cast %62 : vector<1x8xf32> to vector<1x8x1xf32>
    %64 = vector.broadcast %63 : vector<1x8x1xf32> to vector<1x8x8xf32>
    %65 = arith.subf %61, %64 : vector<1x8x8xf32>
    %66 = math.exp %65 : vector<1x8x8xf32>
    %cst_26 = arith.constant dense<0.000000e+00> : vector<1x8xf32>
    %67 = vector.multi_reduction <add>, %66, %cst_26 [2] : vector<1x8x8xf32> to vector<1x8xf32>
    %68 = vector.shape_cast %67 : vector<1x8xf32> to vector<1x8x1xf32>
    %69 = tpu.reciprocal %68 {approx = true} : vector<1x8x1xf32> -> vector<1x8x1xf32>
    %70 = vector.broadcast %69 : vector<1x8x1xf32> to vector<1x8x8xf32>
    %71 = arith.mulf %66, %70 : vector<1x8x8xf32>
    %72 = arith.truncf %71 : vector<1x8x8xf32> to vector<1x8x8xbf16>
    "tpu.trace_start"() <{level = 10 : i32, message = "bqk,bkd->bqd"}> : () -> ()
    %cst_27 = arith.constant dense<0.000000e+00> : vector<1x8x8xf32>
    %73 = tpu.matmul %72, %60, %cst_27 {dimension_numbers = #tpu.dot_dimension_numbers<[2], [1], [1], [2], [0, 0, 0, 1, 1, 2], [0], [0]>} : vector<1x8x8xbf16>, vector<1x8x8xbf16>, vector<1x8x8xf32> -> vector<1x8x8xf32>
    "tpu.trace_stop"() : () -> ()
    %74 = vector.shape_cast %73 : vector<1x8x8xf32> to vector<8x8xf32>
    %75 = arith.truncf %74 : vector<8x8xf32> to vector<8x8xbf16>
    %c0_28 = arith.constant 0 : index
    %c8 = arith.constant 8 : index
    %76 = vector.load %arg16[%c0_28, %c8] : memref<8x32xbf16, #tpu.memory_space<vmem>>, vector<8x8xbf16>
    tpu.vector_store %arg16[%c0_28, %c8], %75 {strides = array<i32>} : memref<8x32xbf16, #tpu.memory_space<vmem>>, vector<8x8xbf16>,
    %77 = vector.extract_strided_slice %26 {offsets = [0, 16], sizes = [8, 8], strides = [1, 1]} : vector<8x32xbf16> to vector<8x8xbf16>
    %78 = vector.shape_cast %77 : vector<8x8xbf16> to vector<1x8x8xbf16>
    %79 = vector.extract_strided_slice %29 {offsets = [0, 16], sizes = [8, 8], strides = [1, 1]} : vector<8x32xbf16> to vector<8x8xbf16>
    %80 = vector.shape_cast %79 : vector<8x8xbf16> to vector<1x8x8xbf16>
    %81 = vector.extract_strided_slice %32 {offsets = [0, 16], sizes = [8, 8], strides = [1, 1]} : vector<8x32xbf16> to vector<8x8xbf16>
    %82 = vector.shape_cast %81 : vector<8x8xbf16> to vector<1x8x8xbf16>
    "tpu.trace_start"() <{level = 10 : i32, message = "bqd,bkd->bqk"}> : () -> ()
    %cst_29 = arith.constant dense<0.000000e+00> : vector<1x8x8xf32>
    %83 = tpu.matmul %78, %80, %cst_29 {dimension_numbers = #tpu.dot_dimension_numbers<[2], [2], [1], [1], [0, 0, 0, 1, 1, 1], [0], [0]>} : vector<1x8x8xbf16>, vector<1x8x8xbf16>, vector<1x8x8xf32> -> vector<1x8x8xf32>
    "tpu.trace_stop"() : () -> ()
    %cst_30 = arith.constant dense<0xFF800000> : vector<1x8xf32>
    %84 = vector.multi_reduction <maximumf>, %83, %cst_30 [2] : vector<1x8x8xf32> to vector<1x8xf32>
    %85 = vector.shape_cast %84 : vector<1x8xf32> to vector<1x8x1xf32>
    %86 = vector.broadcast %85 : vector<1x8x1xf32> to vector<1x8x8xf32>
    %87 = arith.subf %83, %86 : vector<1x8x8xf32>
    %88 = math.exp %87 : vector<1x8x8xf32>
    %cst_31 = arith.constant dense<0.000000e+00> : vector<1x8xf32>
    %89 = vector.multi_reduction <add>, %88, %cst_31 [2] : vector<1x8x8xf32> to vector<1x8xf32>
    %90 = vector.shape_cast %89 : vector<1x8xf32> to vector<1x8x1xf32>
    %91 = tpu.reciprocal %90 {approx = true} : vector<1x8x1xf32> -> vector<1x8x1xf32>
    %92 = vector.broadcast %91 : vector<1x8x1xf32> to vector<1x8x8xf32>
    %93 = arith.mulf %88, %92 : vector<1x8x8xf32>
    %94 = arith.truncf %93 : vector<1x8x8xf32> to vector<1x8x8xbf16>
    "tpu.trace_start"() <{level = 10 : i32, message = "bqk,bkd->bqd"}> : () -> ()
    %cst_32 = arith.constant dense<0.000000e+00> : vector<1x8x8xf32>
    %95 = tpu.matmul %94, %82, %cst_32 {dimension_numbers = #tpu.dot_dimension_numbers<[2], [1], [1], [2], [0, 0, 0, 1, 1, 2], [0], [0]>} : vector<1x8x8xbf16>, vector<1x8x8xbf16>, vector<1x8x8xf32> -> vector<1x8x8xf32>
    "tpu.trace_stop"() : () -> ()
    %96 = vector.shape_cast %95 : vector<1x8x8xf32> to vector<8x8xf32>
    %97 = arith.truncf %96 : vector<8x8xf32> to vector<8x8xbf16>
    %c0_33 = arith.constant 0 : index
    %c16 = arith.constant 16 : index
    %98 = vector.load %arg16[%c0_33, %c16] : memref<8x32xbf16, #tpu.memory_space<vmem>>, vector<8x8xbf16>
    tpu.vector_store %arg16[%c0_33, %c16], %97 {strides = array<i32>} : memref<8x32xbf16, #tpu.memory_space<vmem>>, vector<8x8xbf16>,
    %99 = vector.extract_strided_slice %26 {offsets = [0, 24], sizes = [8, 8], strides = [1, 1]} : vector<8x32xbf16> to vector<8x8xbf16>
    %100 = vector.shape_cast %99 : vector<8x8xbf16> to vector<1x8x8xbf16>
    %101 = vector.extract_strided_slice %29 {offsets = [0, 24], sizes = [8, 8], strides = [1, 1]} : vector<8x32xbf16> to vector<8x8xbf16>
    %102 = vector.shape_cast %101 : vector<8x8xbf16> to vector<1x8x8xbf16>
    %103 = vector.extract_strided_slice %32 {offsets = [0, 24], sizes = [8, 8], strides = [1, 1]} : vector<8x32xbf16> to vector<8x8xbf16>
    %104 = vector.shape_cast %103 : vector<8x8xbf16> to vector<1x8x8xbf16>
    "tpu.trace_start"() <{level = 10 : i32, message = "bqd,bkd->bqk"}> : () -> ()
    %cst_34 = arith.constant dense<0.000000e+00> : vector<1x8x8xf32>
    %105 = tpu.matmul %100, %102, %cst_34 {dimension_numbers = #tpu.dot_dimension_numbers<[2], [2], [1], [1], [0, 0, 0, 1, 1, 1], [0], [0]>} : vector<1x8x8xbf16>, vector<1x8x8xbf16>, vector<1x8x8xf32> -> vector<1x8x8xf32>
    "tpu.trace_stop"() : () -> ()
    %cst_35 = arith.constant dense<0xFF800000> : vector<1x8xf32>
    %106 = vector.multi_reduction <maximumf>, %105, %cst_35 [2] : vector<1x8x8xf32> to vector<1x8xf32>
    %107 = vector.shape_cast %106 : vector<1x8xf32> to vector<1x8x1xf32>
    %108 = vector.broadcast %107 : vector<1x8x1xf32> to vector<1x8x8xf32>
    %109 = arith.subf %105, %108 : vector<1x8x8xf32>
    %110 = math.exp %109 : vector<1x8x8xf32>
    %cst_36 = arith.constant dense<0.000000e+00> : vector<1x8xf32>
    %111 = vector.multi_reduction <add>, %110, %cst_36 [2] : vector<1x8x8xf32> to vector<1x8xf32>
    %112 = vector.shape_cast %111 : vector<1x8xf32> to vector<1x8x1xf32>
    %113 = tpu.reciprocal %112 {approx = true} : vector<1x8x1xf32> -> vector<1x8x1xf32>
    %114 = vector.broadcast %113 : vector<1x8x1xf32> to vector<1x8x8xf32>
    %115 = arith.mulf %110, %114 : vector<1x8x8xf32>
    %116 = arith.truncf %115 : vector<1x8x8xf32> to vector<1x8x8xbf16>
    "tpu.trace_start"() <{level = 10 : i32, message = "bqk,bkd->bqd"}> : () -> ()
    %cst_37 = arith.constant dense<0.000000e+00> : vector<1x8x8xf32>
    %117 = tpu.matmul %116, %104, %cst_37 {dimension_numbers = #tpu.dot_dimension_numbers<[2], [1], [1], [2], [0, 0, 0, 1, 1, 2], [0], [0]>} : vector<1x8x8xbf16>, vector<1x8x8xbf16>, vector<1x8x8xf32> -> vector<1x8x8xf32>
    "tpu.trace_stop"() : () -> ()
    %118 = vector.shape_cast %117 : vector<1x8x8xf32> to vector<8x8xf32>
    %119 = arith.truncf %118 : vector<8x8xf32> to vector<8x8xbf16>
    %c0_38 = arith.constant 0 : index
    %c24 = arith.constant 24 : index
    %120 = vector.load %arg16[%c0_38, %c24] : memref<8x32xbf16, #tpu.memory_space<vmem>>, vector<8x8xbf16>
    tpu.vector_store %arg16[%c0_38, %c24], %119 {strides = array<i32>} : memref<8x32xbf16, #tpu.memory_space<vmem>>, vector<8x8xbf16>,
    %c0_39 = arith.constant 0 : index
    %c0_40 = arith.constant 0 : index
    %121 = vector.load %arg16[%c0_39, %c0_40] : memref<8x32xbf16, #tpu.memory_space<vmem>>, vector<8x32xbf16>
    %c0_41 = arith.constant 0 : index
    %c0_42 = arith.constant 0 : index
    %122 = vector.load %arg7[%c0_41, %c0_42] : memref<32x32xbf16, #tpu.memory_space<vmem>>, vector<32x32xbf16>
    %cst_43 = arith.constant dense<0.000000e+00> : vector<8x32xf32>
    %123 = tpu.matmul %121, %122, %cst_43 {dimension_numbers = #tpu.dot_dimension_numbers<[1], [0], [0], [1], [0, 0, 1, 1], [], []>} : vector<8x32xbf16>, vector<32x32xbf16>, vector<8x32xf32> -> vector<8x32xf32>
    %c0_44 = arith.constant 0 : index
    %c0_45 = arith.constant 0 : index
    %124 = vector.load %arg8[%c0_44, %c0_45] : memref<1x32xf32, #tpu.memory_space<vmem>>, vector<1x32xf32>
    %125 = vector.broadcast %124 : vector<1x32xf32> to vector<8x32xf32>
    %126 = arith.addf %123, %125 : vector<8x32xf32>
    %127 = arith.addf %0, %126 : vector<8x32xf32>
    %c0_46 = arith.constant 0 : index
    %c0_47 = arith.constant 0 : index
    %128 = vector.load %arg9[%c0_46, %c0_47] : memref<1x32xf32, #tpu.memory_space<vmem>>, vector<1x32xf32>
    %c0_48 = arith.constant 0 : index
    %c0_49 = arith.constant 0 : index
    %129 = vector.load %arg10[%c0_48, %c0_49] : memref<1x32xf32, #tpu.memory_space<vmem>>, vector<1x32xf32>
    %cst_50 = arith.constant dense<0.000000e+00> : vector<8xf32>
    %130 = vector.multi_reduction <add>, %127, %cst_50 [1] : vector<8x32xf32> to vector<8xf32>
    %131 = vector.shape_cast %130 : vector<8xf32> to vector<8x1xf32>
    %cst_51 = arith.constant 3.200000e+01 : f32
    %132 = vector.broadcast %cst_51 : f32 to vector<8x1xf32>
    %133 = arith.divf %131, %132 : vector<8x1xf32>
    %134 = vector.broadcast %133 : vector<8x1xf32> to vector<8x32xf32>
    %135 = arith.subf %127, %134 : vector<8x32xf32>
    %136 = arith.mulf %135, %135 : vector<8x32xf32>
    %cst_52 = arith.constant dense<0.000000e+00> : vector<8xf32>
    %137 = vector.multi_reduction <add>, %136, %cst_52 [1] : vector<8x32xf32> to vector<8xf32>
    %138 = vector.shape_cast %137 : vector<8xf32> to vector<8x1xf32>
    %cst_53 = arith.constant 3.200000e+01 : f32
    %139 = vector.broadcast %cst_53 : f32 to vector<8x1xf32>
    %140 = arith.divf %138, %139 : vector<8x1xf32>
    %cst_54 = arith.constant 9.99999974E-6 : f32
    %141 = vector.broadcast %cst_54 : f32 to vector<8x1xf32>
    %142 = arith.addf %140, %141 : vector<8x1xf32>
    %143 = math.rsqrt %142 : vector<8x1xf32>
    %144 = vector.broadcast %143 : vector<8x1xf32> to vector<8x32xf32>
    %145 = arith.mulf %135, %144 : vector<8x32xf32>
    %146 = vector.broadcast %128 : vector<1x32xf32> to vector<8x32xf32>
    %147 = arith.mulf %145, %146 : vector<8x32xf32>
    %148 = vector.broadcast %129 : vector<1x32xf32> to vector<8x32xf32>
    %149 = arith.addf %147, %148 : vector<8x32xf32>
    %150 = arith.truncf %149 : vector<8x32xf32> to vector<8x32xbf16>
    %c0_55 = arith.constant 0 : index
    %c0_56 = arith.constant 0 : index
    %151 = vector.load %arg11[%c0_55, %c0_56] : memref<32x128xbf16, #tpu.memory_space<vmem>>, vector<32x128xbf16>
    %cst_57 = arith.constant dense<0.000000e+00> : vector<8x128xf32>
    %152 = tpu.matmul %150, %151, %cst_57 {dimension_numbers = #tpu.dot_dimension_numbers<[1], [0], [0], [1], [0, 0, 1, 1], [], []>} : vector<8x32xbf16>, vector<32x128xbf16>, vector<8x128xf32> -> vector<8x128xf32>
    %c0_58 = arith.constant 0 : index
    %c0_59 = arith.constant 0 : index
    %153 = vector.load %arg12[%c0_58, %c0_59] : memref<1x128xf32, #tpu.memory_space<vmem>>, vector<1x128xf32>
    %154 = vector.broadcast %153 : vector<1x128xf32> to vector<8x128xf32>
    %155 = arith.addf %152, %154 : vector<8x128xf32>
    %cst_60 = arith.constant 5.000000e-01 : f32
    %156 = vector.broadcast %cst_60 : f32 to vector<8x128xf32>
    %157 = arith.mulf %156, %155 : vector<8x128xf32>
    %cst_61 = arith.constant 4.471500e-02 : f32
    %158 = vector.broadcast %cst_61 : f32 to vector<8x128xf32>
    %159 = arith.mulf %158, %155 : vector<8x128xf32>
    %160 = arith.mulf %159, %155 : vector<8x128xf32>
    %161 = arith.mulf %160, %155 : vector<8x128xf32>
    %162 = arith.addf %155, %161 : vector<8x128xf32>
    %cst_62 = arith.constant 0.797884583 : f32
    %163 = vector.broadcast %cst_62 : f32 to vector<8x128xf32>
    %164 = arith.mulf %163, %162 : vector<8x128xf32>
    %165 = math.tanh %164 : vector<8x128xf32>
    %cst_63 = arith.constant 1.000000e+00 : f32
    %166 = vector.broadcast %cst_63 : f32 to vector<8x128xf32>
    %167 = arith.addf %166, %165 : vector<8x128xf32>
    %168 = arith.mulf %157, %167 : vector<8x128xf32>
    %169 = arith.truncf %168 : vector<8x128xf32> to vector<8x128xbf16>
    %c0_64 = arith.constant 0 : index
    %c0_65 = arith.constant 0 : index
    %170 = vector.load %arg13[%c0_64, %c0_65] : memref<128x32xbf16, #tpu.memory_space<vmem>>, vector<128x32xbf16>
    %cst_66 = arith.constant dense<0.000000e+00> : vector<8x32xf32>
    %171 = tpu.matmul %169, %170, %cst_66 {dimension_numbers = #tpu.dot_dimension_numbers<[1], [0], [0], [1], [0, 0, 1, 1], [], []>} : vector<8x128xbf16>, vector<128x32xbf16>, vector<8x32xf32> -> vector<8x32xf32>
    %c0_67 = arith.constant 0 : index
    %c0_68 = arith.constant 0 : index
    %172 = vector.load %arg14[%c0_67, %c0_68] : memref<1x32xf32, #tpu.memory_space<vmem>>, vector<1x32xf32>
    %173 = vector.broadcast %172 : vector<1x32xf32> to vector<8x32xf32>
    %174 = arith.addf %171, %173 : vector<8x32xf32>
    %175 = arith.addf %127, %174 : vector<8x32xf32>
    %c0_69 = arith.constant 0 : index
    %c0_70 = arith.constant 0 : index
    %176 = vector.load %arg15[%c0_69, %c0_70] : memref<8x32xf32, #tpu.memory_space<vmem>>, vector<8x32xf32>
    tpu.vector_store %arg15[%c0_69, %c0_70], %175 {strides = array<i32>} : memref<8x32xf32, #tpu.memory_space<vmem>>, vector<8x32xf32>,
    return
  }
  func.func @transform_0(%arg0: i32) -> (i32, i32) {
    %c0_i32 = arith.constant 0 : i32
    %c0_i32_0 = arith.constant 0 : i32
    return %arg0, %c0_i32 : i32, i32
  }
  func.func @transform_1(%arg0: i32) -> (i32, i32) {
    %c0_i32 = arith.constant 0 : i32
    %c0_i32_0 = arith.constant 0 : i32
    %c0_i32_1 = arith.constant 0 : i32
    return %c0_i32, %c0_i32_0 : i32, i32
  }
  func.func @transform_2(%arg0: i32) -> (i32, i32) {
    %c0_i32 = arith.constant 0 : i32
    %c0_i32_0 = arith.constant 0 : i32
    %c0_i32_1 = arith.constant 0 : i32
    return %c0_i32, %c0_i32_0 : i32, i32
  }
  func.func @transform_3(%arg0: i32) -> (i32, i32) {
    %c0_i32 = arith.constant 0 : i32
    %c0_i32_0 = arith.constant 0 : i32
    %c0_i32_1 = arith.constant 0 : i32
    return %c0_i32, %c0_i32_0 : i32, i32
  }
  func.func @transform_4(%arg0: i32) -> (i32, i32) {
    %c0_i32 = arith.constant 0 : i32
    %c0_i32_0 = arith.constant 0 : i32
    %c0_i32_1 = arith.constant 0 : i32
    return %c0_i32, %c0_i32_0 : i32, i32
  }
  func.func @transform_5(%arg0: i32) -> (i32, i32) {
    %c0_i32 = arith.constant 0 : i32
    %c0_i32_0 = arith.constant 0 : i32
    %c0_i32_1 = arith.constant 0 : i32
    return %c0_i32, %c0_i32_0 : i32, i32
  }
  func.func @transform_6(%arg0: i32) -> (i32, i32) {
    %c0_i32 = arith.constant 0 : i32
    %c0_i32_0 = arith.constant 0 : i32
    %c0_i32_1 = arith.constant 0 : i32
    return %c0_i32, %c0_i32_0 : i32, i32
  }
  func.func @transform_7(%arg0: i32) -> (i32, i32) {
    %c0_i32 = arith.constant 0 : i32
    %c0_i32_0 = arith.constant 0 : i32
    %c0_i32_1 = arith.constant 0 : i32
    return %c0_i32, %c0_i32_0 : i32, i32
  }
  func.func @transform_8(%arg0: i32) -> (i32, i32) {
    %c0_i32 = arith.constant 0 : i32
    %c0_i32_0 = arith.constant 0 : i32
    %c0_i32_1 = arith.constant 0 : i32
    return %c0_i32, %c0_i32_0 : i32, i32
  }
  func.func @transform_9(%arg0: i32) -> (i32, i32) {
    %c0_i32 = arith.constant 0 : i32
    %c0_i32_0 = arith.constant 0 : i32
    %c0_i32_1 = arith.constant 0 : i32
    return %c0_i32, %c0_i32_0 : i32, i32
  }
  func.func @transform_10(%arg0: i32) -> (i32, i32) {
    %c0_i32 = arith.constant 0 : i32
    %c0_i32_0 = arith.constant 0 : i32
    %c0_i32_1 = arith.constant 0 : i32
    return %c0_i32, %c0_i32_0 : i32, i32
  }
  func.func @transform_11(%arg0: i32) -> (i32, i32) {
    %c0_i32 = arith.constant 0 : i32
    %c0_i32_0 = arith.constant 0 : i32
    %c0_i32_1 = arith.constant 0 : i32
    return %c0_i32, %c0_i32_0 : i32, i32
  }
  func.func @transform_12(%arg0: i32) -> (i32, i32) {
    %c0_i32 = arith.constant 0 : i32
    %c0_i32_0 = arith.constant 0 : i32
    %c0_i32_1 = arith.constant 0 : i32
    return %c0_i32, %c0_i32_0 : i32, i32
  }
  func.func @transform_13(%arg0: i32) -> (i32, i32) {
    %c0_i32 = arith.constant 0 : i32
    %c0_i32_0 = arith.constant 0 : i32
    %c0_i32_1 = arith.constant 0 : i32
    return %c0_i32, %c0_i32_0 : i32, i32
  }
  func.func @transform_14(%arg0: i32) -> (i32, i32) {
    %c0_i32 = arith.constant 0 : i32
    %c0_i32_0 = arith.constant 0 : i32
    return %arg0, %c0_i32 : i32, i32
  }
}

</mosaic_0001>

<llo_original>
// kernel: tpu_custom_call.1
$region0: #{tpu_custom_call.1}
  #allocation0 [shape = 'u32[]', space=smem, size = 0x4, offset = 0x4, fixed_abs, tag = 'smem constant byte address 0x4 - core index']
  #allocation1 [shape = 'u32[144,128]{1,0:T(1,128)}', space=vmem, size = 0x12000, scoped, tag = 'internal scratch']
  #allocation2 [shape = 'bf16[8,32]{1,0:T(8,128)(2,1)}', space=vmem, size = 0x800, scoped, tag = 'scratch operand']
  %s0 = inlined_call_operand.vmem [shape: f32[16,32], index: 0, kind: input, shape index: {}]
  %s1 = inlined_call_operand.vmem [shape: f32[1,32], index: 1, kind: input, shape index: {}]
  %s2 = inlined_call_operand.vmem [shape: f32[1,32], index: 2, kind: input, shape index: {}]
  %s3 = inlined_call_operand.vmem [shape: bf16[32,32], index: 3, kind: input, shape index: {}]
  %s4 = inlined_call_operand.vmem [shape: bf16[32,32], index: 4, kind: input, shape index: {}]
  %s5 = inlined_call_operand.vmem [shape: bf16[32,32], index: 5, kind: input, shape index: {}]
  %s6 = inlined_call_operand.vmem [shape: bf16[32,32], index: 6, kind: input, shape index: {}]
  %s7 = inlined_call_operand.vmem [shape: f32[1,32], index: 7, kind: input, shape index: {}]
  %s8 = inlined_call_operand.vmem [shape: f32[1,32], index: 8, kind: input, shape index: {}]
  %s9 = inlined_call_operand.vmem [shape: f32[1,32], index: 9, kind: input, shape index: {}]
  %s10 = inlined_call_operand.hbm [shape: bf16[32,128], index: 10, kind: input, shape index: {}]
  %s11 = inlined_call_operand.hbm [shape: f32[1,128], index: 11, kind: input, shape index: {}]
  %s12 = inlined_call_operand.vmem [shape: bf16[128,32], index: 12, kind: input, shape index: {}]
  %s13 = inlined_call_operand.vmem [shape: f32[1,32], index: 13, kind: input, shape index: {}]
  %s14 = inlined_call_operand.hbm [shape: f32[16,32], index: 14, kind: output, shape index: {}]
  %s15 = sld [smem:[#allocation0]]
  $region97: #{tpu_custom_call.1} parent=0
    _
  %s17 = ssub.s32 1, %s15
  %s18 = scalar_select 0, %s17, %s15
  $region1: #{tpu_custom_call.1} parent=0
    #allocation3 [shape = 'u8[8192]{0}', space=vmem, size = 0x2000, scoped, tag = 'input window, operand 10, single buffered']
    #allocation4 [shape = 's32[2]{0}', space=sflag, size = 0x8, scoped, tag = 'scoped memory for tpu_custom_call.1']
    #allocation5 [shape = 's32[2]{0}', space=sflag, size = 0x8, scoped, tag = 'scoped memory for tpu_custom_call.1']
    #allocation6 [shape = 'u8[512]{0}', space=vmem, size = 0x400, scoped, tag = 'input window, operand 11, single buffered']
    #allocation7 [shape = 's32[1]{0}', space=sflag, size = 0x4, scoped, tag = 'scoped memory for tpu_custom_call.1']
    #allocation8 [shape = 'u8[8192]{0}', space=vmem, size = 0x2000, scoped, tag = 'output window, operand 0']
    %19 = vsyncpa [#allocation4], 0
    %20 = vsyncpa [#allocation7], 0
    %21 = vsyncpa [#allocation5], 0
    %s22 = scalar_lea.sflag [#allocation5], 1
    %23 = vsyncpa %s22, 0
    loop: start=0, step=1, limit=4
    $region2: #{tpu_custom_call.1} parent=1 // loop_pre_header
      _
    $region3: #{tpu_custom_call.1} parent=1 // loop_header
      %s25 = sphi 0, %s29
      %p26 = scmp.ge.s32.totalorder %s25, 4
      %s35 = sphi 0, %s37
      %s38 = sphi 0, %s35
      %s39 = sphi 0, %s38
      %s55 = sphi 0, %s39
      %s59 = sphi 0, %s59
      %s61 = sphi 0, %s59
      %s62 = sphi 0, %s61
      %s76 = sphi 0, %s62
      %s80 = sphi 0, %s80
      %s82 = sphi 0, %s80
      %s83 = sphi 0, %s82
      %s97 = sphi 0, %s83
      %s101 = sphi 0, %s101
      %s103 = sphi 0, %s101
      %s104 = sphi 0, %s103
      %s118 = sphi 0, %s104
      %s122 = sphi 0, %s122
      %s124 = sphi 0, %s122
      %s125 = sphi 0, %s124
      %s139 = sphi 0, %s125
      %s143 = sphi 0, %s143
      %s145 = sphi 0, %s143
      %s146 = sphi 0, %s145
      %s160 = sphi 0, %s146
      %s164 = sphi 0, %s164
      %s166 = sphi 0, %s164
      %s167 = sphi 0, %s166
      %s181 = sphi 0, %s167
      %s185 = sphi 0, %s185
      %s187 = sphi 0, %s185
      %s188 = sphi 0, %s187
      %s202 = sphi 0, %s188
      %s206 = sphi 0, %s206
      %s208 = sphi 0, %s206
      %s209 = sphi 0, %s208
      %s223 = sphi 0, %s209
      %s227 = sphi 0, %s227
      %s229 = sphi 0, %s227
      %s230 = sphi 0, %s229
      %s244 = sphi 0, %s230
      %s248 = sphi 0, %s248
      %s250 = sphi 0, %s248
      %s251 = sphi 0, %s250
      %s265 = sphi 0, %s251
      %s269 = sphi 0, %s269
      %s271 = sphi 0, %s269
      %s272 = sphi 0, %s271
      %s286 = sphi 0, %s272
      %s290 = sphi 0, %s290
      %s292 = sphi 0, %s290
      %s293 = sphi 0, %s292
      %s307 = sphi 0, %s293
      %s311 = sphi 0, %s311
      %s313 = sphi 0, %s311
      %s314 = sphi 0, %s313
      %s328 = sphi 0, %s314
      %s334 = sphi 0, %s336
      %s337 = sphi 0, %s334
      %s338 = sphi 0, %s337
      %s354 = sphi 0, %s338
    $region4: #{tpu_custom_call.1} parent=1 // loop_header_branch
      %28 = sbr.rel (%p26) target = $region8
    $region5: #{tpu_custom_call.1} parent=1 // loop_body
      %s30 = ssub.s32 %s25, 1
      %s31 = ssub.s32 %s25, 2
      %s32 = sadd.s32 %s25, 1
      %s33 = ssub.s32 %s25, %s32
      %p34 = scmp.eq.s32.totalorder %s33, 0
      %s36 = sadd.s32 %s35, 1
      %s37 = scalar_select %p34, %s35, %s36
      %p40 = pneg %p34
      %p41 = scmp.eq.s32.totalorder %s25, 1
      %p42 = por %p40, %p41
      %p43 = scmp.ne.s32.totalorder %s35, %s38
      %p44 = scmp.eq.s32.totalorder %s25, 0
      %p45 = por %p43, %p44
      %p46 = scmp.ne.s32.totalorder %s35, %s38
      %p47 = scmp.eq.s32.totalorder %s30, 1
      %p48 = por %p46, %p47
      %p49 = scmp.ne.s32.totalorder %s38, %s39
      %p50 = scmp.eq.s32.totalorder %s30, 0
      %p51 = por %p49, %p50
      %p52 = scmp.ne.s32.totalorder %s38, %s39
      %p53 = scmp.eq.s32.totalorder %s31, 1
      %p54 = por %p52, %p53
      %p56 = scmp.ne.s32.totalorder %s39, %s55
      %p57 = scmp.eq.s32.totalorder %s31, 0
      %p58 = por %p56, %p57
      %s60 = sadd.s32 %s59, 1
      %p63 = scmp.eq.s32.totalorder %s25, 1
      %p64 = scmp.ne.s32.totalorder %s59, %s61
      %p65 = scmp.eq.s32.totalorder %s25, 0
      %p66 = por %p64, %p65
      %p67 = scmp.ne.s32.totalorder %s59, %s61
      %p68 = scmp.eq.s32.totalorder %s30, 1
      %p69 = por %p67, %p68
      %p70 = scmp.ne.s32.totalorder %s61, %s62
      %p71 = scmp.eq.s32.totalorder %s30, 0
      %p72 = por %p70, %p71
      %p73 = scmp.ne.s32.totalorder %s61, %s62
      %p74 = scmp.eq.s32.totalorder %s31, 1
      %p75 = por %p73, %p74
      %p77 = scmp.ne.s32.totalorder %s62, %s76
      %p78 = scmp.eq.s32.totalorder %s31, 0
      %p79 = por %p77, %p78
      %s81 = sadd.s32 %s80, 1
      %p84 = scmp.eq.s32.totalorder %s25, 1
      %p85 = scmp.ne.s32.totalorder %s80, %s82
      %p86 = scmp.eq.s32.totalorder %s25, 0
      %p87 = por %p85, %p86
      %p88 = scmp.ne.s32.totalorder %s80, %s82
      %p89 = scmp.eq.s32.totalorder %s30, 1
      %p90 = por %p88, %p89
      %p91 = scmp.ne.s32.totalorder %s82, %s83
      %p92 = scmp.eq.s32.totalorder %s30, 0
      %p93 = por %p91, %p92
      %p94 = scmp.ne.s32.totalorder %s82, %s83
      %p95 = scmp.eq.s32.totalorder %s31, 1
      %p96 = por %p94, %p95
      %p98 = scmp.ne.s32.totalorder %s83, %s97
      %p99 = scmp.eq.s32.totalorder %s31, 0
      %p100 = por %p98, %p99
      %s102 = sadd.s32 %s101, 1
      %p105 = scmp.eq.s32.totalorder %s25, 1
      %p106 = scmp.ne.s32.totalorder %s101, %s103
      %p107 = scmp.eq.s32.totalorder %s25, 0
      %p108 = por %p106, %p107
      %p109 = scmp.ne.s32.totalorder %s101, %s103
      %p110 = scmp.eq.s32.totalorder %s30, 1
      %p111 = por %p109, %p110
      %p112 = scmp.ne.s32.totalorder %s103, %s104
      %p113 = scmp.eq.s32.totalorder %s30, 0
      %p114 = por %p112, %p113
      %p115 = scmp.ne.s32.totalorder %s103, %s104
      %p116 = scmp.eq.s32.totalorder %s31, 1
      %p117 = por %p115, %p116
      %p119 = scmp.ne.s32.totalorder %s104, %s118
      %p120 = scmp.eq.s32.totalorder %s31, 0
      %p121 = por %p119, %p120
      %s123 = sadd.s32 %s122, 1
      %p126 = scmp.eq.s32.totalorder %s25, 1
      %p127 = scmp.ne.s32.totalorder %s122, %s124
      %p128 = scmp.eq.s32.totalorder %s25, 0
      %p129 = por %p127, %p128
      %p130 = scmp.ne.s32.totalorder %s122, %s124
      %p131 = scmp.eq.s32.totalorder %s30, 1
      %p132 = por %p130, %p131
      %p133 = scmp.ne.s32.totalorder %s124, %s125
      %p134 = scmp.eq.s32.totalorder %s30, 0
      %p135 = por %p133, %p134
      %p136 = scmp.ne.s32.totalorder %s124, %s125
      %p137 = scmp.eq.s32.totalorder %s31, 1
      %p138 = por %p136, %p137
      %p140 = scmp.ne.s32.totalorder %s125, %s139
      %p141 = scmp.eq.s32.totalorder %s31, 0
      %p142 = por %p140, %p141
      %s144 = sadd.s32 %s143, 1
      %p147 = scmp.eq.s32.totalorder %s25, 1
      %p148 = scmp.ne.s32.totalorder %s143, %s145
      %p149 = scmp.eq.s32.totalorder %s25, 0
      %p150 = por %p148, %p149
      %p151 = scmp.ne.s32.totalorder %s143, %s145
      %p152 = scmp.eq.s32.totalorder %s30, 1
      %p153 = por %p151, %p152
      %p154 = scmp.ne.s32.totalorder %s145, %s146
      %p155 = scmp.eq.s32.totalorder %s30, 0
      %p156 = por %p154, %p155
      %p157 = scmp.ne.s32.totalorder %s145, %s146
      %p158 = scmp.eq.s32.totalorder %s31, 1
      %p159 = por %p157, %p158
      %p161 = scmp.ne.s32.totalorder %s146, %s160
      %p162 = scmp.eq.s32.totalorder %s31, 0
      %p163 = por %p161, %p162
      %s165 = sadd.s32 %s164, 1
      %p168 = scmp.eq.s32.totalorder %s25, 1
      %p169 = scmp.ne.s32.totalorder %s164, %s166
      %p170 = scmp.eq.s32.totalorder %s25, 0
      %p171 = por %p169, %p170
      %p172 = scmp.ne.s32.totalorder %s164, %s166
      %p173 = scmp.eq.s32.totalorder %s30, 1
      %p174 = por %p172, %p173
      %p175 = scmp.ne.s32.totalorder %s166, %s167
      %p176 = scmp.eq.s32.totalorder %s30, 0
      %p177 = por %p175, %p176
      %p178 = scmp.ne.s32.totalorder %s166, %s167
      %p179 = scmp.eq.s32.totalorder %s31, 1
      %p180 = por %p178, %p179
      %p182 = scmp.ne.s32.totalorder %s167, %s181
      %p183 = scmp.eq.s32.totalorder %s31, 0
      %p184 = por %p182, %p183
      %s186 = sadd.s32 %s185, 1
      %p189 = scmp.eq.s32.totalorder %s25, 1
      %p190 = scmp.ne.s32.totalorder %s185, %s187
      %p191 = scmp.eq.s32.totalorder %s25, 0
      %p192 = por %p190, %p191
      %p193 = scmp.ne.s32.totalorder %s185, %s187
      %p194 = scmp.eq.s32.totalorder %s30, 1
      %p195 = por %p193, %p194
      %p196 = scmp.ne.s32.totalorder %s187, %s188
      %p197 = scmp.eq.s32.totalorder %s30, 0
      %p198 = por %p196, %p197
      %p199 = scmp.ne.s32.totalorder %s187, %s188
      %p200 = scmp.eq.s32.totalorder %s31, 1
      %p201 = por %p199, %p200
      %p203 = scmp.ne.s32.totalorder %s188, %s202
      %p204 = scmp.eq.s32.totalorder %s31, 0
      %p205 = por %p203, %p204
      %s207 = sadd.s32 %s206, 1
      %p210 = scmp.eq.s32.totalorder %s25, 1
      %p211 = scmp.ne.s32.totalorder %s206, %s208
      %p212 = scmp.eq.s32.totalorder %s25, 0
      %p213 = por %p211, %p212
      %p214 = scmp.ne.s32.totalorder %s206, %s208
      %p215 = scmp.eq.s32.totalorder %s30, 1
      %p216 = por %p214, %p215
      %p217 = scmp.ne.s32.totalorder %s208, %s209
      %p218 = scmp.eq.s32.totalorder %s30, 0
      %p219 = por %p217, %p218
      %p220 = scmp.ne.s32.totalorder %s208, %s209
      %p221 = scmp.eq.s32.totalorder %s31, 1
      %p222 = por %p220, %p221
      %p224 = scmp.ne.s32.totalorder %s209, %s223
      %p225 = scmp.eq.s32.totalorder %s31, 0
      %p226 = por %p224, %p225
      %s228 = sadd.s32 %s227, 1
      %p231 = scmp.eq.s32.totalorder %s25, 1
      %p232 = scmp.ne.s32.totalorder %s227, %s229
      %p233 = scmp.eq.s32.totalorder %s25, 0
      %p234 = por %p232, %p233
      %p235 = scmp.ne.s32.totalorder %s227, %s229
      %p236 = scmp.eq.s32.totalorder %s30, 1
      %p237 = por %p235, %p236
      %p238 = scmp.ne.s32.totalorder %s229, %s230
      %p239 = scmp.eq.s32.totalorder %s30, 0
      %p240 = por %p238, %p239
      %p241 = scmp.ne.s32.totalorder %s229, %s230
      %p242 = scmp.eq.s32.totalorder %s31, 1
      %p243 = por %p241, %p242
      %p245 = scmp.ne.s32.totalorder %s230, %s244
      %p246 = scmp.eq.s32.totalorder %s31, 0
      %p247 = por %p245, %p246
      %s249 = sadd.s32 %s248, 1
      %p252 = scmp.eq.s32.totalorder %s25, 1
      %p253 = scmp.ne.s32.totalorder %s248, %s250
      %p254 = scmp.eq.s32.totalorder %s25, 0
      %p255 = por %p253, %p254
      %p256 = scmp.ne.s32.totalorder %s248, %s250
      %p257 = scmp.eq.s32.totalorder %s30, 1
      %p258 = por %p256, %p257
      %p259 = scmp.ne.s32.totalorder %s250, %s251
      %p260 = scmp.eq.s32.totalorder %s30, 0
      %p261 = por %p259, %p260
      %p262 = scmp.ne.s32.totalorder %s250, %s251
      %p263 = scmp.eq.s32.totalorder %s31, 1
      %p264 = por %p262, %p263
      %p266 = scmp.ne.s32.totalorder %s251, %s265
      %p267 = scmp.eq.s32.totalorder %s31, 0
      %p268 = por %p266, %p267
      %s270 = sadd.s32 %s269, 1
      %p273 = scmp.eq.s32.totalorder %s25, 1
      %p274 = scmp.ne.s32.totalorder %s269, %s271
      %p275 = scmp.eq.s32.totalorder %s25, 0
      %p276 = por %p274, %p275
      %p277 = scmp.ne.s32.totalorder %s269, %s271
      %p278 = scmp.eq.s32.totalorder %s30, 1
      %p279 = por %p277, %p278
      %p280 = scmp.ne.s32.totalorder %s271, %s272
      %p281 = scmp.eq.s32.totalorder %s30, 0
      %p282 = por %p280, %p281
      %p283 = scmp.ne.s32.totalorder %s271, %s272
      %p284 = scmp.eq.s32.totalorder %s31, 1
      %p285 = por %p283, %p284
      %p287 = scmp.ne.s32.totalorder %s272, %s286
      %p288 = scmp.eq.s32.totalorder %s31, 0
      %p289 = por %p287, %p288
      %s291 = sadd.s32 %s290, 1
      %p294 = scmp.eq.s32.totalorder %s25, 1
      %p295 = scmp.ne.s32.totalorder %s290, %s292
      %p296 = scmp.eq.s32.totalorder %s25, 0
      %p297 = por %p295, %p296
      %p298 = scmp.ne.s32.totalorder %s290, %s292
      %p299 = scmp.eq.s32.totalorder %s30, 1
      %p300 = por %p298, %p299
      %p301 = scmp.ne.s32.totalorder %s292, %s293
      %p302 = scmp.eq.s32.totalorder %s30, 0
      %p303 = por %p301, %p302
      %p304 = scmp.ne.s32.totalorder %s292, %s293
      %p305 = scmp.eq.s32.totalorder %s31, 1
      %p306 = por %p304, %p305
      %p308 = scmp.ne.s32.totalorder %s293, %s307
      %p309 = scmp.eq.s32.totalorder %s31, 0
      %p310 = por %p308, %p309
      %s312 = sadd.s32 %s311, 1
      %p315 = scmp.eq.s32.totalorder %s25, 1
      %p316 = scmp.ne.s32.totalorder %s311, %s313
      %p317 = scmp.eq.s32.totalorder %s25, 0
      %p318 = por %p316, %p317
      %p319 = scmp.ne.s32.totalorder %s311, %s313
      %p320 = scmp.eq.s32.totalorder %s30, 1
      %p321 = por %p319, %p320
      %p322 = scmp.ne.s32.totalorder %s313, %s314
      %p323 = scmp.eq.s32.totalorder %s30, 0
      %p324 = por %p322, %p323
      %p325 = scmp.ne.s32.totalorder %s313, %s314
      %p326 = scmp.eq.s32.totalorder %s31, 1
      %p327 = por %p325, %p326
      %p329 = scmp.ne.s32.totalorder %s314, %s328
      %p330 = scmp.eq.s32.totalorder %s31, 0
      %p331 = por %p329, %p330
      %s332 = ssub.s32 %s25, %s32
      %p333 = scmp.eq.s32.totalorder %s332, 0
      %s335 = sadd.s32 %s334, 1
      %s336 = scalar_select %p333, %s334, %s335
      %p339 = pneg %p333
      %p340 = scmp.eq.s32.totalorder %s25, 1
      %p341 = por %p339, %p340
      %p342 = scmp.ne.s32.totalorder %s334, %s337
      %p343 = scmp.eq.s32.totalorder %s25, 0
      %p344 = por %p342, %p343
      %p345 = scmp.ne.s32.totalorder %s334, %s337
      %p346 = scmp.eq.s32.totalorder %s30, 1
      %p347 = por %p345, %p346
      %p348 = scmp.ne.s32.totalorder %s337, %s338
      %p349 = scmp.eq.s32.totalorder %s30, 0
      %p350 = por %p348, %p349
      %p351 = scmp.ne.s32.totalorder %s337, %s338
      %p352 = scmp.eq.s32.totalorder %s31, 1
      %p353 = por %p351, %p352
      %p355 = scmp.ne.s32.totalorder %s338, %s354
      %p356 = scmp.eq.s32.totalorder %s31, 0
      %p357 = por %p355, %p356
      %p358 = scmp.le.s32.totalorder 1, %s25
      %p359 = scmp.lt.s32.totalorder %s25, 3
      %p360 = pnand %p358, %p359
      %p361 = pneg %p360
      // Predicated region
      $region9: #{tpu_custom_call.1} parent=5 // pred_check
        _
      $region10: #{tpu_custom_call.1} parent=5 // pred_check_branch
        %363 = sbr.rel (%p360) target = $region12
      $region11: #{tpu_custom_call.1} parent=5 // pred_region
        %s364 = ssub.s32 %s25, 1
        // Predicated region
        $region13: #{tpu_custom_call.1} parent=11 // pred_check
          %p365 = pneg %p72
        $region14: #{tpu_custom_call.1} parent=11 // pred_check_branch
          %367 = sbr.rel (%p365) target = $region16
        $region15: #{tpu_custom_call.1} parent=11 // pred_region
          _
        $region16: #{tpu_custom_call.1} parent=11 // pred_fallthru
          _
        // Predicated region
        $region17: #{tpu_custom_call.1} parent=11 // pred_check
          %p368 = pneg %p93
        $region18: #{tpu_custom_call.1} parent=11 // pred_check_branch
          %370 = sbr.rel (%p368) target = $region20
        $region19: #{tpu_custom_call.1} parent=11 // pred_region
          _
        $region20: #{tpu_custom_call.1} parent=11 // pred_fallthru
          _
        // Predicated region
        $region21: #{tpu_custom_call.1} parent=11 // pred_check
          %p371 = pneg %p114
        $region22: #{tpu_custom_call.1} parent=11 // pred_check_branch
          %373 = sbr.rel (%p371) target = $region24
        $region23: #{tpu_custom_call.1} parent=11 // pred_region
          _
        $region24: #{tpu_custom_call.1} parent=11 // pred_fallthru
          _
        // Predicated region
        $region25: #{tpu_custom_call.1} parent=11 // pred_check
          %p374 = pneg %p135
        $region26: #{tpu_custom_call.1} parent=11 // pred_check_branch
          %376 = sbr.rel (%p374) target = $region28
        $region27: #{tpu_custom_call.1} parent=11 // pred_region
          _
        $region28: #{tpu_custom_call.1} parent=11 // pred_fallthru
          _
        // Predicated region
        $region29: #{tpu_custom_call.1} parent=11 // pred_check
          %p377 = pneg %p156
        $region30: #{tpu_custom_call.1} parent=11 // pred_check_branch
          %379 = sbr.rel (%p377) target = $region32
        $region31: #{tpu_custom_call.1} parent=11 // pred_region
          _
        $region32: #{tpu_custom_call.1} parent=11 // pred_fallthru
          _
        // Predicated region
        $region33: #{tpu_custom_call.1} parent=11 // pred_check
          %p380 = pneg %p177
        $region34: #{tpu_custom_call.1} parent=11 // pred_check_branch
          %382 = sbr.rel (%p380) target = $region36
        $region35: #{tpu_custom_call.1} parent=11 // pred_region
          _
        $region36: #{tpu_custom_call.1} parent=11 // pred_fallthru
          _
        // Predicated region
        $region37: #{tpu_custom_call.1} parent=11 // pred_check
          %p383 = pneg %p198
        $region38: #{tpu_custom_call.1} parent=11 // pred_check_branch
          %385 = sbr.rel (%p383) target = $region40
        $region39: #{tpu_custom_call.1} parent=11 // pred_region
          _
        $region40: #{tpu_custom_call.1} parent=11 // pred_fallthru
          _
        // Predicated region
        $region41: #{tpu_custom_call.1} parent=11 // pred_check
          %p386 = pneg %p219
        $region42: #{tpu_custom_call.1} parent=11 // pred_check_branch
          %388 = sbr.rel (%p386) target = $region44
        $region43: #{tpu_custom_call.1} parent=11 // pred_region
          _
        $region44: #{tpu_custom_call.1} parent=11 // pred_fallthru
          _
        // Predicated region
        $region45: #{tpu_custom_call.1} parent=11 // pred_check
          %p389 = pneg %p240
        $region46: #{tpu_custom_call.1} parent=11 // pred_check_branch
          %391 = sbr.rel (%p389) target = $region48
        $region47: #{tpu_custom_call.1} parent=11 // pred_region
          _
        $region48: #{tpu_custom_call.1} parent=11 // pred_fallthru
          _
        // Predicated region
        $region49: #{tpu_custom_call.1} parent=11 // pred_check
          %p392 = pneg %p261
        $region50: #{tpu_custom_call.1} parent=11 // pred_check_branch
          %394 = sbr.rel (%p392) target = $region52
        $region51: #{tpu_custom_call.1} parent=11 // pred_region
          %s396 = ssub.s32 256, 256
          %397 = vsyncadd [#allocation4], %s396
          %s398 = sshll.u32 [#allocation3], 4
          %s399 = int_to_ptr.vmem [resolvable:$true] %s398
          %404 = dma.hbm_to_vmem [thread:$0]  %s10, 256, %s399, [#allocation4], 64, 64, 4
        $region52: #{tpu_custom_call.1} parent=11 // pred_fallthru
          _
        // Predicated region
        $region53: #{tpu_custom_call.1} parent=11 // pred_check
          %p405 = pneg %p282
        $region54: #{tpu_custom_call.1} parent=11 // pred_check_branch
          %407 = sbr.rel (%p405) target = $region56
        $region55: #{tpu_custom_call.1} parent=11 // pred_region
          %s409 = ssub.s32 16, 16
          %410 = vsyncadd [#allocation7], %s409
          %s412 = sshll.u32 [#allocation6], 4
          %s413 = int_to_ptr.vmem [resolvable:$true] %s412
          %415 = dma.hbm_to_vmem [thread:$0]  %s11, 16, %s413, [#allocation7]
        $region56: #{tpu_custom_call.1} parent=11 // pred_fallthru
          _
        // Predicated region
        $region57: #{tpu_custom_call.1} parent=11 // pred_check
          %p416 = pneg %p303
        $region58: #{tpu_custom_call.1} parent=11 // pred_check_branch
          %418 = sbr.rel (%p416) target = $region60
        $region59: #{tpu_custom_call.1} parent=11 // pred_region
          _
        $region60: #{tpu_custom_call.1} parent=11 // pred_fallthru
          _
        // Predicated region
        $region61: #{tpu_custom_call.1} parent=11 // pred_check
          %p419 = pneg %p324
        $region62: #{tpu_custom_call.1} parent=11 // pred_check_branch
          %421 = sbr.rel (%p419) target = $region64
        $region63: #{tpu_custom_call.1} parent=11 // pred_region
          _
        $region64: #{tpu_custom_call.1} parent=11 // pred_fallthru
          _
      $region12: #{tpu_custom_call.1} parent=5 // pred_fallthru
        _
      %p422 = scmp.lt.s32.totalorder %s25, 2
      // Predicated region
      $region65: #{tpu_custom_call.1} parent=5 // pred_check
        %p423 = pneg %p422
      $region66: #{tpu_custom_call.1} parent=5 // pred_check_branch
        %425 = sbr.rel (%p423) target = $region68
      $region67: #{tpu_custom_call.1} parent=5 // pred_region
        // Predicated region
        $region69: #{tpu_custom_call.1} parent=67 // pred_check
          %p426 = pneg %p45
        $region70: #{tpu_custom_call.1} parent=67 // pred_check_branch
          %428 = sbr.rel (%p426) target = $region72
        $region71: #{tpu_custom_call.1} parent=67 // pred_region
          %p429 = scmp.lt.s32.totalorder %s25, 1
          %s430 = scalar_select %p429, %s25, 1
          %s431 = smul.addr %s430, 8
          %s432 = scalar_lea.vmem %s0, %s431
        $region72: #{tpu_custom_call.1} parent=67 // pred_fallthru
          _
      $region68: #{tpu_custom_call.1} parent=5 // pred_fallthru
        _
      %p433 = scmp.le.s32.totalorder 1, %s25
      %p434 = scmp.lt.s32.totalorder %s25, 3
      %p435 = pnand %p433, %p434
      %p436 = pneg %p435
      // Predicated region
      $region73: #{tpu_custom_call.1} parent=5 // pred_check
        _
      $region74: #{tpu_custom_call.1} parent=5 // pred_check_branch
        %438 = sbr.rel (%p435) target = $region76
      $region75: #{tpu_custom_call.1} parent=5 // pred_region
        %s439 = ssub.s32 %s25, 1
        // Predicated region
        $region77: #{tpu_custom_call.1} parent=75 // pred_check
          %p440 = pneg %p261
        $region78: #{tpu_custom_call.1} parent=75 // pred_check_branch
          %442 = sbr.rel (%p440) target = $region80
        $region79: #{tpu_custom_call.1} parent=75 // pred_region
          %443 = dma.done [#allocation4], 256
        $region80: #{tpu_custom_call.1} parent=75 // pred_fallthru
          _
        // Predicated region
        $region81: #{tpu_custom_call.1} parent=75 // pred_check
          %p444 = pneg %p282
        $region82: #{tpu_custom_call.1} parent=75 // pred_check_branch
          %446 = sbr.rel (%p444) target = $region84
        $region83: #{tpu_custom_call.1} parent=75 // pred_region
          %447 = dma.done [#allocation7], 16
        $region84: #{tpu_custom_call.1} parent=75 // pred_fallthru
          _
        %p448 = scmp.lt.s32.totalorder %s30, 1
        %s449 = scalar_select %p448, %s30, 1
        %s450 = smul.addr %s449, 8
        %s451 = scalar_lea.vmem %s0, %s450
        %p452 = pneg %p51
        %p453 = pneg %p48
        %p454 = pneg %p72
        %p455 = pneg %p69
        %p456 = pneg %p93
        %p457 = pneg %p90
        %p458 = pneg %p114
        %p459 = pneg %p111
        %p460 = pneg %p135
        %p461 = pneg %p132
        %p462 = pneg %p156
        %p463 = pneg %p153
        %p464 = pneg %p177
        %p465 = pneg %p174
        %p466 = pneg %p198
        %p467 = pneg %p195
        %p468 = pneg %p219
        %p469 = pneg %p216
        %p470 = pneg %p240
        %p471 = pneg %p237
        %p472 = pneg %p261
        %p473 = pneg %p258
        %p474 = pneg %p282
        %p475 = pneg %p279
        %p476 = pneg %p303
        %p477 = pneg %p300
        %p478 = pneg %p324
        %p479 = pneg %p321
        %p480 = pneg %p350
        %p481 = pneg %p347
        %s482 = sand.u32 %s337, 1
        %s483 = scalar_lea.sflag [#allocation5], %s482
        %s484 = sand.u32 %s337, 1
        %s485 = smul.addr %s484, 8
        %s486 = scalar_lea.vmem [#allocation8], %s485
        %p487 = scmp.lt.s32.totalorder %s30, 1
        %s488 = scalar_select %p487, %s30, 1
        %s489 = smul.addr %s488, 8
        %s490 = scalar_lea.vmem %s0, %s489
        %v492 = vld [vmem:[%s490] sm:$0xff]
        %v493 = vld [vmem:[%s1] sm:$0x1]
        %v494 = vld [vmem:[%s2] sm:$0x1]
        %vm495 = vcmask 261120
        %v496 = vsel %vm495, %v492, 0.0
        %497 = vadd.xlane.f32.xlu0 %v496
        %v498 = vpop.xlane.xlu0 %497
        %v499 = vrcp.pop 32.0
        %v500 = vmul.f32 %v498, %v499
        %v501 = vsub.f32 %v492, %v500
        %v502 = vmul.f32 %v501, %v501
        %v503 = vsel %vm495, %v502, 0.0
        %504 = vadd.xlane.f32.xlu0 %v503
        %v505 = vpop.xlane.xlu0 %504
        %v506 = vmul.f32 %v505, %v499
        %v507 = vadd.f32 %v506, 1e-05
        %v508 = vrsqrt.pop %v507
        %v509 = vmul.f32 %v501, %v508
        %v511 = vlaneseq
        %v512 = vshrl.u32 %v511, 7
        %v513 = vsub.s32 0, %v512
        %v514 = vrot.slane %v493, %v513
        %v516 = vmul.f32 %v509, %v514
        %v518 = vlaneseq
        %v519 = vshrl.u32 %v518, 7
        %v520 = vsub.s32 0, %v519
        %v521 = vrot.slane %v494, %v520
        %v523 = vadd.f32 %v516, %v521
        %v524 = vpack.c.bf16 %v523, %v523
        %v525 = vld [vmem:[%s3] sm:$0xf]
        %v526 = vld [vmem:[%s3 + $0x4] sm:$0xf]
        %v527 = vld [vmem:[%s3 + $0x8] sm:$0xf]
        %v528 = vld [vmem:[%s3 + $0xc] sm:$0xf]
        %v533 = vunpack.c.l.b16 %v525
        %v534 = vunpack.c.l.b16 %v526
        %v535 = vunpack.c.l.b16 %v527
        %v536 = vunpack.c.l.b16 %v528
        %v537 = vpack.c.b16 %v534, %v533
        %v538 = vpack.c.b16 %v536, %v535
        %v542 = vsel %vm495, %v524, 0
        %544 = vmatprep.subr.bf16.mxu0 0
        %545 = vmatpush1.bf16.msra.mxu0 0
        %546 = vmatprep.subr.bf16.mxu0 0
        %547 = vmatpush1.bf16.msra.mxu0 0
        %548 = vmatprep.subr.bf16.mxu0 0
        %549 = vmatpush1.bf16.msra.mxu0 0
        %550 = vmatprep.subr.bf16.mxu0 0
        %551 = vmatpush1.bf16.msra.mxu0 0
        %552 = vmatprep.subr.bf16.mxu0 0
        %553 = vmatpush1.bf16.msra.mxu0 0
        %554 = vmatprep.subr.bf16.mxu0 0
        %555 = vmatpush1.bf16.msra.mxu0 0
        %556 = vmatprep.subr.bf16.mxu0 0
        %557 = vmatpush1.bf16.msra.mxu0 %v538
        %558 = vmatprep.subr.bf16.mxu0 0
        %559 = vmatpush1.bf16.msra.mxu0 %v537
        %560 = vmatprep.subr.bf16.mxu0 0
        %561 = vmatpush2.bf16.msra.mxu0 0
        %562 = vmatprep.subr.bf16.mxu0 0
        %563 = vmatpush2.bf16.msra.mxu0 0
        %564 = vmatprep.subr.bf16.mxu0 0
        %565 = vmatpush2.bf16.msra.mxu0 0
        %566 = vmatprep.subr.bf16.mxu0 0
        %567 = vmatpush2.bf16.msra.mxu0 0
        %568 = vmatprep.subr.bf16.mxu0 0
        %569 = vmatpush2.bf16.msra.mxu0 0
        %570 = vmatprep.subr.bf16.mxu0 0
        %571 = vmatpush2.bf16.msra.mxu0 0
        %572 = vmatprep.subr.bf16.mxu0 0
        %573 = vmatpush2.bf16.msra.mxu0 0
        %574 = vmatprep.subr.bf16.mxu0 0
        %575 = vmatpush2.bf16.msra.mxu0 0
        %576 = vmatprep.mubr.bf16.mxu0 0
        %577 = vmatmul.mubr.bf16.gmra.mxu0 %v542
        %v578 = vpop.f32.mrf.mxu0
        %v579 = vadd.f32 0.0, %v578
        %v580 = vpop.f32.mrf.mxu0
        %v581 = vpop.f32.mrf.mxu0
        %v582 = vpop.f32.mrf.mxu0
        %583 = vdwg.mxu0
        %v584 = vpack.c.bf16 %v579, %v579
        %v585 = vld [vmem:[%s4] sm:$0xf]
        %v586 = vld [vmem:[%s4 + $0x4] sm:$0xf]
        %v587 = vld [vmem:[%s4 + $0x8] sm:$0xf]
        %v588 = vld [vmem:[%s4 + $0xc] sm:$0xf]
        %v593 = vunpack.c.l.b16 %v585
        %v594 = vunpack.c.l.b16 %v586
        %v595 = vunpack.c.l.b16 %v587
        %v596 = vunpack.c.l.b16 %v588
        %v597 = vpack.c.b16 %v594, %v593
        %v598 = vpack.c.b16 %v596, %v595
        %601 = vmatprep.subr.bf16.mxu0 0
        %602 = vmatpush1.bf16.msra.mxu0 0
        %603 = vmatprep.subr.bf16.mxu0 0
        %604 = vmatpush1.bf16.msra.mxu0 0
        %605 = vmatprep.subr.bf16.mxu0 0
        %606 = vmatpush1.bf16.msra.mxu0 0
        %607 = vmatprep.subr.bf16.mxu0 0
        %608 = vmatpush1.bf16.msra.mxu0 0
        %609 = vmatprep.subr.bf16.mxu0 0
        %610 = vmatpush1.bf16.msra.mxu0 0
        %611 = vmatprep.subr.bf16.mxu0 0
        %612 = vmatpush1.bf16.msra.mxu0 0
        %613 = vmatprep.subr.bf16.mxu0 0
        %614 = vmatpush1.bf16.msra.mxu0 %v598
        %615 = vmatprep.subr.bf16.mxu0 0
        %616 = vmatpush1.bf16.msra.mxu0 %v597
        %617 = vmatprep.subr.bf16.mxu0 0
        %618 = vmatpush2.bf16.msra.mxu0 0
        %619 = vmatprep.subr.bf16.mxu0 0
        %620 = vmatpush2.bf16.msra.mxu0 0
        %621 = vmatprep.subr.bf16.mxu0 0
        %622 = vmatpush2.bf16.msra.mxu0 0
        %623 = vmatprep.subr.bf16.mxu0 0
        %624 = vmatpush2.bf16.msra.mxu0 0
        %625 = vmatprep.subr.bf16.mxu0 0
        %626 = vmatpush2.bf16.msra.mxu0 0
        %627 = vmatprep.subr.bf16.mxu0 0
        %628 = vmatpush2.bf16.msra.mxu0 0
        %629 = vmatprep.subr.bf16.mxu0 0
        %630 = vmatpush2.bf16.msra.mxu0 0
        %631 = vmatprep.subr.bf16.mxu0 0
        %632 = vmatpush2.bf16.msra.mxu0 0
        %633 = vmatprep.mubr.bf16.mxu0 0
        %634 = vmatmul.mubr.bf16.gmra.mxu0 %v542
        %v635 = vpop.f32.mrf.mxu0
        %v636 = vadd.f32 0.0, %v635
        %v637 = vpop.f32.mrf.mxu0
        %v638 = vpop.f32.mrf.mxu0
        %v639 = vpop.f32.mrf.mxu0
        %640 = vdwg.mxu0
        %v641 = vpack.c.bf16 %v636, %v636
        %v642 = vld [vmem:[%s5] sm:$0xf]
        %v643 = vld [vmem:[%s5 + $0x4] sm:$0xf]
        %v644 = vld [vmem:[%s5 + $0x8] sm:$0xf]
        %v645 = vld [vmem:[%s5 + $0xc] sm:$0xf]
        %v650 = vunpack.c.l.b16 %v642
        %v651 = vunpack.c.l.b16 %v643
        %v652 = vunpack.c.l.b16 %v644
        %v653 = vunpack.c.l.b16 %v645
        %v654 = vpack.c.b16 %v651, %v650
        %v655 = vpack.c.b16 %v653, %v652
        %658 = vmatprep.subr.bf16.mxu0 0
        %659 = vmatpush1.bf16.msra.mxu0 0
        %660 = vmatprep.subr.bf16.mxu0 0
        %661 = vmatpush1.bf16.msra.mxu0 0
        %662 = vmatprep.subr.bf16.mxu0 0
        %663 = vmatpush1.bf16.msra.mxu0 0
        %664 = vmatprep.subr.bf16.mxu0 0
        %665 = vmatpush1.bf16.msra.mxu0 0
        %666 = vmatprep.subr.bf16.mxu0 0
        %667 = vmatpush1.bf16.msra.mxu0 0
        %668 = vmatprep.subr.bf16.mxu0 0
        %669 = vmatpush1.bf16.msra.mxu0 0
        %670 = vmatprep.subr.bf16.mxu0 0
        %671 = vmatpush1.bf16.msra.mxu0 %v655
        %672 = vmatprep.subr.bf16.mxu0 0
        %673 = vmatpush1.bf16.msra.mxu0 %v654
        %674 = vmatprep.subr.bf16.mxu0 0
        %675 = vmatpush2.bf16.msra.mxu0 0
        %676 = vmatprep.subr.bf16.mxu0 0
        %677 = vmatpush2.bf16.msra.mxu0 0
        %678 = vmatprep.subr.bf16.mxu0 0
        %679 = vmatpush2.bf16.msra.mxu0 0
        %680 = vmatprep.subr.bf16.mxu0 0
        %681 = vmatpush2.bf16.msra.mxu0 0
        %682 = vmatprep.subr.bf16.mxu0 0
        %683 = vmatpush2.bf16.msra.mxu0 0
        %684 = vmatprep.subr.bf16.mxu0 0
        %685 = vmatpush2.bf16.msra.mxu0 0
        %686 = vmatprep.subr.bf16.mxu0 0
        %687 = vmatpush2.bf16.msra.mxu0 0
        %688 = vmatprep.subr.bf16.mxu0 0
        %689 = vmatpush2.bf16.msra.mxu0 0
        %690 = vmatprep.mubr.bf16.mxu0 0
        %691 = vmatmul.mubr.bf16.gmra.mxu0 %v542
        %v692 = vpop.f32.mrf.mxu0
        %v693 = vadd.f32 0.0, %v692
        %v694 = vpop.f32.mrf.mxu0
        %v695 = vpop.f32.mrf.mxu0
        %v696 = vpop.f32.mrf.mxu0
        %697 = vdwg.mxu0
        %v698 = vpack.c.bf16 %v693, %v693
        %vm699 = vcmask 64512
        %v701 = vsel %vm699, %v584, 0
        %v704 = vsel %vm699, %v641, 0
        %706 = vmatprep.subr.bf16.mxu0 0
        %707 = vmatpush1.bf16.xpose.msra.mxu0 0
        %708 = vmatprep.subr.bf16.mxu0 0
        %709 = vmatpush1.bf16.xpose.msra.mxu0 0
        %710 = vmatprep.subr.bf16.mxu0 0
        %711 = vmatpush1.bf16.xpose.msra.mxu0 0
        %712 = vmatprep.subr.bf16.mxu0 0
        %713 = vmatpush1.bf16.xpose.msra.mxu0 0
        %714 = vmatprep.subr.bf16.mxu0 0
        %715 = vmatpush1.bf16.xpose.msra.mxu0 0
        %716 = vmatprep.subr.bf16.mxu0 0
        %717 = vmatpush1.bf16.xpose.msra.mxu0 0
        %718 = vmatprep.subr.bf16.mxu0 0
        %719 = vmatpush1.bf16.xpose.msra.mxu0 0
        %720 = vmatprep.subr.bf16.mxu0 0
        %721 = vmatpush1.bf16.xpose.msra.mxu0 %v704
        %722 = vmatprep.subr.bf16.mxu0 0
        %723 = vmatpush2.bf16.xpose.msra.mxu0 0
        %724 = vmatprep.subr.bf16.mxu0 0
        %725 = vmatpush2.bf16.xpose.msra.mxu0 0
        %726 = vmatprep.subr.bf16.mxu0 0
        %727 = vmatpush2.bf16.xpose.msra.mxu0 0
        %728 = vmatprep.subr.bf16.mxu0 0
        %729 = vmatpush2.bf16.xpose.msra.mxu0 0
        %730 = vmatprep.subr.bf16.mxu0 0
        %731 = vmatpush2.bf16.xpose.msra.mxu0 0
        %732 = vmatprep.subr.bf16.mxu0 0
        %733 = vmatpush2.bf16.xpose.msra.mxu0 0
        %734 = vmatprep.subr.bf16.mxu0 0
        %735 = vmatpush2.bf16.xpose.msra.mxu0 0
        %736 = vmatprep.subr.bf16.mxu0 0
        %737 = vmatpush2.bf16.xpose.msra.mxu0 0
        %738 = vmatprep.mubr.bf16.mxu0 0
        %739 = vmatmul.mubr.bf16.gmra.mxu0 %v701
        %v740 = vpop.f32.mrf.mxu0
        %v741 = vadd.f32 0.0, %v740
        %v742 = vpop.f32.mrf.mxu0
        %v743 = vpop.f32.mrf.mxu0
        %v744 = vpop.f32.mrf.mxu0
        %745 = vdwg.mxu0
        %v746 = vsel %vm699, %v741, -inf
        %747 = vmax.xlane.f32.xlu0 %v746
        %v748 = vpop.xlane.xlu0 %747
        %v749 = vsub.f32 %v741, %v748
        %v750 = vmul.f32 %v749, 1.442695
        %v751 = vpow.pop %v750
        %v752 = vsel %vm699, %v751, 0.0
        %753 = vadd.xlane.f32.xlu0 %v752
        %v754 = vpop.xlane.xlu0 %753
        %v755 = vrcp.pop %v754
        %v756 = vmul.f32 %v751, %v755
        %v757 = vpack.c.bf16 %v756, %v756
        %v759 = vsel %vm699, %v757, 0
        %vm761 = vcmask 1043456
        %v763 = vsel %vm761, %v698, 0
        %765 = vmatprep.subr.bf16.mxu0 0
        %766 = vmatpush1.bf16.msra.mxu0 0
        %767 = vmatprep.subr.bf16.mxu0 0
        %768 = vmatpush1.bf16.msra.mxu0 0
        %769 = vmatprep.subr.bf16.mxu0 0
        %770 = vmatpush1.bf16.msra.mxu0 0
        %771 = vmatprep.subr.bf16.mxu0 0
        %772 = vmatpush1.bf16.msra.mxu0 0
        %773 = vmatprep.subr.bf16.mxu0 0
        %774 = vmatpush1.bf16.msra.mxu0 0
        %775 = vmatprep.subr.bf16.mxu0 0
        %776 = vmatpush1.bf16.msra.mxu0 0
        %777 = vmatprep.subr.bf16.mxu0 0
        %778 = vmatpush1.bf16.msra.mxu0 0
        %779 = vmatprep.subr.bf16.mxu0 0
        %780 = vmatpush1.bf16.msra.mxu0 %v763
        %781 = vmatprep.subr.bf16.mxu0 0
        %782 = vmatpush2.bf16.msra.mxu0 0
        %783 = vmatprep.subr.bf16.mxu0 0
        %784 = vmatpush2.bf16.msra.mxu0 0
        %785 = vmatprep.subr.bf16.mxu0 0
        %786 = vmatpush2.bf16.msra.mxu0 0
        %787 = vmatprep.subr.bf16.mxu0 0
        %788 = vmatpush2.bf16.msra.mxu0 0
        %789 = vmatprep.subr.bf16.mxu0 0
        %790 = vmatpush2.bf16.msra.mxu0 0
        %791 = vmatprep.subr.bf16.mxu0 0
        %792 = vmatpush2.bf16.msra.mxu0 0
        %793 = vmatprep.subr.bf16.mxu0 0
        %794 = vmatpush2.bf16.msra.mxu0 0
        %795 = vmatprep.subr.bf16.mxu0 0
        %796 = vmatpush2.bf16.msra.mxu0 0
        %797 = vmatprep.mubr.bf16.mxu0 0
        %798 = vmatmul.mubr.bf16.gmra.mxu0 %v759
        %v799 = vpop.f32.mrf.mxu0
        %v800 = vadd.f32 0.0, %v799
        %v801 = vpop.f32.mrf.mxu0
        %v802 = vpop.f32.mrf.mxu0
        %v803 = vpop.f32.mrf.mxu0
        %804 = vdwg.mxu0
        %v805 = vpack.c.bf16 %v800, %v800
        %vm806 = vcmask 60416
        %807 = vst.msk [vmem:[#allocation2] sm:$0xf] %vm806, %v805
        %809 = vrot.lane.b32.xlu0 %v584, 120
        %v810 = vpop.permute.xlu0 %809
        %812 = vrot.lane.b32.xlu0 %v641, 120
        %v813 = vpop.permute.xlu0 %812
        %v815 = vsel %vm699, %v810, 0
        %v818 = vsel %vm699, %v813, 0
        %820 = vmatprep.subr.bf16.mxu0 0
        %821 = vmatpush1.bf16.xpose.msra.mxu0 0
        %822 = vmatprep.subr.bf16.mxu0 0
        %823 = vmatpush1.bf16.xpose.msra.mxu0 0
        %824 = vmatprep.subr.bf16.mxu0 0
        %825 = vmatpush1.bf16.xpose.msra.mxu0 0
        %826 = vmatprep.subr.bf16.mxu0 0
        %827 = vmatpush1.bf16.xpose.msra.mxu0 0
        %828 = vmatprep.subr.bf16.mxu0 0
        %829 = vmatpush1.bf16.xpose.msra.mxu0 0
        %830 = vmatprep.subr.bf16.mxu0 0
        %831 = vmatpush1.bf16.xpose.msra.mxu0 0
        %832 = vmatprep.subr.bf16.mxu0 0
        %833 = vmatpush1.bf16.xpose.msra.mxu0 0
        %834 = vmatprep.subr.bf16.mxu0 0
        %835 = vmatpush1.bf16.xpose.msra.mxu0 %v818
        %836 = vmatprep.subr.bf16.mxu0 0
        %837 = vmatpush2.bf16.xpose.msra.mxu0 0
        %838 = vmatprep.subr.bf16.mxu0 0
        %839 = vmatpush2.bf16.xpose.msra.mxu0 0
        %840 = vmatprep.subr.bf16.mxu0 0
        %841 = vmatpush2.bf16.xpose.msra.mxu0 0
        %842 = vmatprep.subr.bf16.mxu0 0
        %843 = vmatpush2.bf16.xpose.msra.mxu0 0
        %844 = vmatprep.subr.bf16.mxu0 0
        %845 = vmatpush2.bf16.xpose.msra.mxu0 0
        %846 = vmatprep.subr.bf16.mxu0 0
        %847 = vmatpush2.bf16.xpose.msra.mxu0 0
        %848 = vmatprep.subr.bf16.mxu0 0
        %849 = vmatpush2.bf16.xpose.msra.mxu0 0
        %850 = vmatprep.subr.bf16.mxu0 0
        %851 = vmatpush2.bf16.xpose.msra.mxu0 0
        %852 = vmatprep.mubr.bf16.mxu0 0
        %853 = vmatmul.mubr.bf16.gmra.mxu0 %v815
        %v854 = vpop.f32.mrf.mxu0
        %v855 = vadd.f32 0.0, %v854
        %v856 = vpop.f32.mrf.mxu0
        %v857 = vpop.f32.mrf.mxu0
        %v858 = vpop.f32.mrf.mxu0
        %859 = vdwg.mxu0
        %v860 = vsel %vm699, %v855, -inf
        %861 = vmax.xlane.f32.xlu0 %v860
        %v862 = vpop.xlane.xlu0 %861
        %v863 = vsub.f32 %v855, %v862
        %v864 = vmul.f32 %v863, 1.442695
        %v865 = vpow.pop %v864
        %v866 = vsel %vm699, %v865, 0.0
        %867 = vadd.xlane.f32.xlu0 %v866
        %v868 = vpop.xlane.xlu0 %867
        %v869 = vrcp.pop %v868
        %v870 = vmul.f32 %v865, %v869
        %v871 = vpack.c.bf16 %v870, %v870
        %873 = vrot.lane.b32.xlu0 %v698, 120
        %v874 = vpop.permute.xlu0 %873
        %v876 = vsel %vm699, %v871, 0
        %v879 = vsel %vm761, %v874, 0
        %881 = vmatprep.subr.bf16.mxu0 0
        %882 = vmatpush1.bf16.msra.mxu0 0
        %883 = vmatprep.subr.bf16.mxu0 0
        %884 = vmatpush1.bf16.msra.mxu0 0
        %885 = vmatprep.subr.bf16.mxu0 0
        %886 = vmatpush1.bf16.msra.mxu0 0
        %887 = vmatprep.subr.bf16.mxu0 0
        %888 = vmatpush1.bf16.msra.mxu0 0
        %889 = vmatprep.subr.bf16.mxu0 0
        %890 = vmatpush1.bf16.msra.mxu0 0
        %891 = vmatprep.subr.bf16.mxu0 0
        %892 = vmatpush1.bf16.msra.mxu0 0
        %893 = vmatprep.subr.bf16.mxu0 0
        %894 = vmatpush1.bf16.msra.mxu0 0
        %895 = vmatprep.subr.bf16.mxu0 0
        %896 = vmatpush1.bf16.msra.mxu0 %v879
        %897 = vmatprep.subr.bf16.mxu0 0
        %898 = vmatpush2.bf16.msra.mxu0 0
        %899 = vmatprep.subr.bf16.mxu0 0
        %900 = vmatpush2.bf16.msra.mxu0 0
        %901 = vmatprep.subr.bf16.mxu0 0
        %902 = vmatpush2.bf16.msra.mxu0 0
        %903 = vmatprep.subr.bf16.mxu0 0
        %904 = vmatpush2.bf16.msra.mxu0 0
        %905 = vmatprep.subr.bf16.mxu0 0
        %906 = vmatpush2.bf16.msra.mxu0 0
        %907 = vmatprep.subr.bf16.mxu0 0
        %908 = vmatpush2.bf16.msra.mxu0 0
        %909 = vmatprep.subr.bf16.mxu0 0
        %910 = vmatpush2.bf16.msra.mxu0 0
        %911 = vmatprep.subr.bf16.mxu0 0
        %912 = vmatpush2.bf16.msra.mxu0 0
        %913 = vmatprep.mubr.bf16.mxu0 0
        %914 = vmatmul.mubr.bf16.gmra.mxu0 %v876
        %v915 = vpop.f32.mrf.mxu0
        %v916 = vadd.f32 0.0, %v915
        %v917 = vpop.f32.mrf.mxu0
        %v918 = vpop.f32.mrf.mxu0
        %v919 = vpop.f32.mrf.mxu0
        %920 = vdwg.mxu0
        %v921 = vpack.c.bf16 %v916, %v916
        %v923 = vunpack.c.l.b16 %v921
        %v924 = vpack.c.b16 %v923, %v923
        %925 = vrot.lane.b32.xlu0 %v924, 8
        %v926 = vpop.permute.xlu0 %925
        %vm928 = vcmask 126016
        %929 = vst.msk [vmem:[#allocation2] sm:$0xf] %vm928, %v926
        %930 = vrot.lane.b32.xlu0 %v584, 112
        %v931 = vpop.permute.xlu0 %930
        %932 = vrot.lane.b32.xlu0 %v641, 112
        %v933 = vpop.permute.xlu0 %932
        %v935 = vsel %vm699, %v931, 0
        %v938 = vsel %vm699, %v933, 0
        %940 = vmatprep.subr.bf16.mxu0 0
        %941 = vmatpush1.bf16.xpose.msra.mxu0 0
        %942 = vmatprep.subr.bf16.mxu0 0
        %943 = vmatpush1.bf16.xpose.msra.mxu0 0
        %944 = vmatprep.subr.bf16.mxu0 0
        %945 = vmatpush1.bf16.xpose.msra.mxu0 0
        %946 = vmatprep.subr.bf16.mxu0 0
        %947 = vmatpush1.bf16.xpose.msra.mxu0 0
        %948 = vmatprep.subr.bf16.mxu0 0
        %949 = vmatpush1.bf16.xpose.msra.mxu0 0
        %950 = vmatprep.subr.bf16.mxu0 0
        %951 = vmatpush1.bf16.xpose.msra.mxu0 0
        %952 = vmatprep.subr.bf16.mxu0 0
        %953 = vmatpush1.bf16.xpose.msra.mxu0 0
        %954 = vmatprep.subr.bf16.mxu0 0
        %955 = vmatpush1.bf16.xpose.msra.mxu0 %v938
        %956 = vmatprep.subr.bf16.mxu0 0
        %957 = vmatpush2.bf16.xpose.msra.mxu0 0
        %958 = vmatprep.subr.bf16.mxu0 0
        %959 = vmatpush2.bf16.xpose.msra.mxu0 0
        %960 = vmatprep.subr.bf16.mxu0 0
        %961 = vmatpush2.bf16.xpose.msra.mxu0 0
        %962 = vmatprep.subr.bf16.mxu0 0
        %963 = vmatpush2.bf16.xpose.msra.mxu0 0
        %964 = vmatprep.subr.bf16.mxu0 0
        %965 = vmatpush2.bf16.xpose.msra.mxu0 0
        %966 = vmatprep.subr.bf16.mxu0 0
        %967 = vmatpush2.bf16.xpose.msra.mxu0 0
        %968 = vmatprep.subr.bf16.mxu0 0
        %969 = vmatpush2.bf16.xpose.msra.mxu0 0
        %970 = vmatprep.subr.bf16.mxu0 0
        %971 = vmatpush2.bf16.xpose.msra.mxu0 0
        %972 = vmatprep.mubr.bf16.mxu0 0
        %973 = vmatmul.mubr.bf16.gmra.mxu0 %v935
        %v974 = vpop.f32.mrf.mxu0
        %v975 = vadd.f32 0.0, %v974
        %v976 = vpop.f32.mrf.mxu0
        %v977 = vpop.f32.mrf.mxu0
        %v978 = vpop.f32.mrf.mxu0
        %979 = vdwg.mxu0
        %v980 = vsel %vm699, %v975, -inf
        %981 = vmax.xlane.f32.xlu0 %v980
        %v982 = vpop.xlane.xlu0 %981
        %v983 = vsub.f32 %v975, %v982
        %v984 = vmul.f32 %v983, 1.442695
        %v985 = vpow.pop %v984
        %v986 = vsel %vm699, %v985, 0.0
        %987 = vadd.xlane.f32.xlu0 %v986
        %v988 = vpop.xlane.xlu0 %987
        %v989 = vrcp.pop %v988
        %v990 = vmul.f32 %v985, %v989
        %v991 = vpack.c.bf16 %v990, %v990
        %992 = vrot.lane.b32.xlu0 %v698, 112
        %v993 = vpop.permute.xlu0 %992
        %v995 = vsel %vm699, %v991, 0
        %v998 = vsel %vm761, %v993, 0
        %1000 = vmatprep.subr.bf16.mxu0 0
        %1001 = vmatpush1.bf16.msra.mxu0 0
        %1002 = vmatprep.subr.bf16.mxu0 0
        %1003 = vmatpush1.bf16.msra.mxu0 0
        %1004 = vmatprep.subr.bf16.mxu0 0
        %1005 = vmatpush1.bf16.msra.mxu0 0
        %1006 = vmatprep.subr.bf16.mxu0 0
        %1007 = vmatpush1.bf16.msra.mxu0 0
        %1008 = vmatprep.subr.bf16.mxu0 0
        %1009 = vmatpush1.bf16.msra.mxu0 0
        %1010 = vmatprep.subr.bf16.mxu0 0
        %1011 = vmatpush1.bf16.msra.mxu0 0
        %1012 = vmatprep.subr.bf16.mxu0 0
        %1013 = vmatpush1.bf16.msra.mxu0 0
        %1014 = vmatprep.subr.bf16.mxu0 0
        %1015 = vmatpush1.bf16.msra.mxu0 %v998
        %1016 = vmatprep.subr.bf16.mxu0 0
        %1017 = vmatpush2.bf16.msra.mxu0 0
        %1018 = vmatprep.subr.bf16.mxu0 0
        %1019 = vmatpush2.bf16.msra.mxu0 0
        %1020 = vmatprep.subr.bf16.mxu0 0
        %1021 = vmatpush2.bf16.msra.mxu0 0
        %1022 = vmatprep.subr.bf16.mxu0 0
        %1023 = vmatpush2.bf16.msra.mxu0 0
        %1024 = vmatprep.subr.bf16.mxu0 0
        %1025 = vmatpush2.bf16.msra.mxu0 0
        %1026 = vmatprep.subr.bf16.mxu0 0
        %1027 = vmatpush2.bf16.msra.mxu0 0
        %1028 = vmatprep.subr.bf16.mxu0 0
        %1029 = vmatpush2.bf16.msra.mxu0 0
        %1030 = vmatprep.subr.bf16.mxu0 0
        %1031 = vmatpush2.bf16.msra.mxu0 0
        %1032 = vmatprep.mubr.bf16.mxu0 0
        %1033 = vmatmul.mubr.bf16.gmra.mxu0 %v995
        %v1034 = vpop.f32.mrf.mxu0
        %v1035 = vadd.f32 0.0, %v1034
        %v1036 = vpop.f32.mrf.mxu0
        %v1037 = vpop.f32.mrf.mxu0
        %v1038 = vpop.f32.mrf.mxu0
        %1039 = vdwg.mxu0
        %v1040 = vpack.c.bf16 %v1035, %v1035
        %v1042 = vunpack.c.l.b16 %v1040
        %v1043 = vpack.c.b16 %v1042, %v1042
        %1044 = vrot.lane.b32.xlu0 %v1043, 16
        %v1045 = vpop.permute.xlu0 %1044
        %vm1047 = vcmask 191616
        %1048 = vst.msk [vmem:[#allocation2] sm:$0xf] %vm1047, %v1045
        %1049 = vrot.lane.b32.xlu0 %v584, 104
        %v1050 = vpop.permute.xlu0 %1049
        %1051 = vrot.lane.b32.xlu0 %v641, 104
        %v1052 = vpop.permute.xlu0 %1051
        %v1054 = vsel %vm699, %v1050, 0
        %v1057 = vsel %vm699, %v1052, 0
        %1059 = vmatprep.subr.bf16.mxu0 0
        %1060 = vmatpush1.bf16.xpose.msra.mxu0 0
        %1061 = vmatprep.subr.bf16.mxu0 0
        %1062 = vmatpush1.bf16.xpose.msra.mxu0 0
        %1063 = vmatprep.subr.bf16.mxu0 0
        %1064 = vmatpush1.bf16.xpose.msra.mxu0 0
        %1065 = vmatprep.subr.bf16.mxu0 0
        %1066 = vmatpush1.bf16.xpose.msra.mxu0 0
        %1067 = vmatprep.subr.bf16.mxu0 0
        %1068 = vmatpush1.bf16.xpose.msra.mxu0 0
        %1069 = vmatprep.subr.bf16.mxu0 0
        %1070 = vmatpush1.bf16.xpose.msra.mxu0 0
        %1071 = vmatprep.subr.bf16.mxu0 0
        %1072 = vmatpush1.bf16.xpose.msra.mxu0 0
        %1073 = vmatprep.subr.bf16.mxu0 0
        %1074 = vmatpush1.bf16.xpose.msra.mxu0 %v1057
        %1075 = vmatprep.subr.bf16.mxu0 0
        %1076 = vmatpush2.bf16.xpose.msra.mxu0 0
        %1077 = vmatprep.subr.bf16.mxu0 0
        %1078 = vmatpush2.bf16.xpose.msra.mxu0 0
        %1079 = vmatprep.subr.bf16.mxu0 0
        %1080 = vmatpush2.bf16.xpose.msra.mxu0 0
        %1081 = vmatprep.subr.bf16.mxu0 0
        %1082 = vmatpush2.bf16.xpose.msra.mxu0 0
        %1083 = vmatprep.subr.bf16.mxu0 0
        %1084 = vmatpush2.bf16.xpose.msra.mxu0 0
        %1085 = vmatprep.subr.bf16.mxu0 0
        %1086 = vmatpush2.bf16.xpose.msra.mxu0 0
        %1087 = vmatprep.subr.bf16.mxu0 0
        %1088 = vmatpush2.bf16.xpose.msra.mxu0 0
        %1089 = vmatprep.subr.bf16.mxu0 0
        %1090 = vmatpush2.bf16.xpose.msra.mxu0 0
        %1091 = vmatprep.mubr.bf16.mxu0 0
        %1092 = vmatmul.mubr.bf16.gmra.mxu0 %v1054
        %v1093 = vpop.f32.mrf.mxu0
        %v1094 = vadd.f32 0.0, %v1093
        %v1095 = vpop.f32.mrf.mxu0
        %v1096 = vpop.f32.mrf.mxu0
        %v1097 = vpop.f32.mrf.mxu0
        %1098 = vdwg.mxu0
        %v1099 = vsel %vm699, %v1094, -inf
        %1100 = vmax.xlane.f32.xlu0 %v1099
        %v1101 = vpop.xlane.xlu0 %1100
        %v1102 = vsub.f32 %v1094, %v1101
        %v1103 = vmul.f32 %v1102, 1.442695
        %v1104 = vpow.pop %v1103
        %v1105 = vsel %vm699, %v1104, 0.0
        %1106 = vadd.xlane.f32.xlu0 %v1105
        %v1107 = vpop.xlane.xlu0 %1106
        %v1108 = vrcp.pop %v1107
        %v1109 = vmul.f32 %v1104, %v1108
        %v1110 = vpack.c.bf16 %v1109, %v1109
        %1111 = vrot.lane.b32.xlu0 %v698, 104
        %v1112 = vpop.permute.xlu0 %1111
        %v1114 = vsel %vm699, %v1110, 0
        %v1117 = vsel %vm761, %v1112, 0
        %1119 = vmatprep.subr.bf16.mxu0 0
        %1120 = vmatpush1.bf16.msra.mxu0 0
        %1121 = vmatprep.subr.bf16.mxu0 0
        %1122 = vmatpush1.bf16.msra.mxu0 0
        %1123 = vmatprep.subr.bf16.mxu0 0
        %1124 = vmatpush1.bf16.msra.mxu0 0
        %1125 = vmatprep.subr.bf16.mxu0 0
        %1126 = vmatpush1.bf16.msra.mxu0 0
        %1127 = vmatprep.subr.bf16.mxu0 0
        %1128 = vmatpush1.bf16.msra.mxu0 0
        %1129 = vmatprep.subr.bf16.mxu0 0
        %1130 = vmatpush1.bf16.msra.mxu0 0
        %1131 = vmatprep.subr.bf16.mxu0 0
        %1132 = vmatpush1.bf16.msra.mxu0 0
        %1133 = vmatprep.subr.bf16.mxu0 0
        %1134 = vmatpush1.bf16.msra.mxu0 %v1117
        %1135 = vmatprep.subr.bf16.mxu0 0
        %1136 = vmatpush2.bf16.msra.mxu0 0
        %1137 = vmatprep.subr.bf16.mxu0 0
        %1138 = vmatpush2.bf16.msra.mxu0 0
        %1139 = vmatprep.subr.bf16.mxu0 0
        %1140 = vmatpush2.bf16.msra.mxu0 0
        %1141 = vmatprep.subr.bf16.mxu0 0
        %1142 = vmatpush2.bf16.msra.mxu0 0
        %1143 = vmatprep.subr.bf16.mxu0 0
        %1144 = vmatpush2.bf16.msra.mxu0 0
        %1145 = vmatprep.subr.bf16.mxu0 0
        %1146 = vmatpush2.bf16.msra.mxu0 0
        %1147 = vmatprep.subr.bf16.mxu0 0
        %1148 = vmatpush2.bf16.msra.mxu0 0
        %1149 = vmatprep.subr.bf16.mxu0 0
        %1150 = vmatpush2.bf16.msra.mxu0 0
        %1151 = vmatprep.mubr.bf16.mxu0 0
        %1152 = vmatmul.mubr.bf16.gmra.mxu0 %v1114
        %v1153 = vpop.f32.mrf.mxu0
        %v1154 = vadd.f32 0.0, %v1153
        %v1155 = vpop.f32.mrf.mxu0
        %v1156 = vpop.f32.mrf.mxu0
        %v1157 = vpop.f32.mrf.mxu0
        %1158 = vdwg.mxu0
        %v1159 = vpack.c.bf16 %v1154, %v1154
        %v1161 = vunpack.c.l.b16 %v1159
        %v1162 = vpack.c.b16 %v1161, %v1161
        %1163 = vrot.lane.b32.xlu0 %v1162, 24
        %v1164 = vpop.permute.xlu0 %1163
        %vm1166 = vcmask 257216
        %1167 = vst.msk [vmem:[#allocation2] sm:$0xf] %vm1166, %v1164
        %v1168 = vld [vmem:[#allocation2] sm:$0xf]
        %v1169 = vld [vmem:[%s6] sm:$0xf]
        %v1170 = vld [vmem:[%s6 + $0x4] sm:$0xf]
        %v1171 = vld [vmem:[%s6 + $0x8] sm:$0xf]
        %v1172 = vld [vmem:[%s6 + $0xc] sm:$0xf]
        %v1173 = vld [vmem:[%s7] sm:$0x1]
        %v1175 = vlaneseq
        %v1176 = vshrl.u32 %v1175, 7
        %v1177 = vsub.s32 0, %v1176
        %v1178 = vrot.slane %v1173, %v1177
        %v1184 = vunpack.c.l.b16 %v1169
        %v1185 = vunpack.c.l.b16 %v1170
        %v1186 = vunpack.c.l.b16 %v1171
        %v1187 = vunpack.c.l.b16 %v1172
        %v1188 = vpack.c.b16 %v1185, %v1184
        %v1189 = vpack.c.b16 %v1187, %v1186
        %v1193 = vsel %vm495, %v1168, 0
        %1195 = vmatprep.subr.bf16.mxu0 0
        %1196 = vmatpush1.bf16.msra.mxu0 0
        %1197 = vmatprep.subr.bf16.mxu0 0
        %1198 = vmatpush1.bf16.msra.mxu0 0
        %1199 = vmatprep.subr.bf16.mxu0 0
        %1200 = vmatpush1.bf16.msra.mxu0 0
        %1201 = vmatprep.subr.bf16.mxu0 0
        %1202 = vmatpush1.bf16.msra.mxu0 0
        %1203 = vmatprep.subr.bf16.mxu0 0
        %1204 = vmatpush1.bf16.msra.mxu0 0
        %1205 = vmatprep.subr.bf16.mxu0 0
        %1206 = vmatpush1.bf16.msra.mxu0 0
        %1207 = vmatprep.subr.bf16.mxu0 0
        %1208 = vmatpush1.bf16.msra.mxu0 %v1189
        %1209 = vmatprep.subr.bf16.mxu0 0
        %1210 = vmatpush1.bf16.msra.mxu0 %v1188
        %1211 = vmatprep.subr.bf16.mxu0 0
        %1212 = vmatpush2.bf16.msra.mxu0 0
        %1213 = vmatprep.subr.bf16.mxu0 0
        %1214 = vmatpush2.bf16.msra.mxu0 0
        %1215 = vmatprep.subr.bf16.mxu0 0
        %1216 = vmatpush2.bf16.msra.mxu0 0
        %1217 = vmatprep.subr.bf16.mxu0 0
        %1218 = vmatpush2.bf16.msra.mxu0 0
        %1219 = vmatprep.subr.bf16.mxu0 0
        %1220 = vmatpush2.bf16.msra.mxu0 0
        %1221 = vmatprep.subr.bf16.mxu0 0
        %1222 = vmatpush2.bf16.msra.mxu0 0
        %1223 = vmatprep.subr.bf16.mxu0 0
        %1224 = vmatpush2.bf16.msra.mxu0 0
        %1225 = vmatprep.subr.bf16.mxu0 0
        %1226 = vmatpush2.bf16.msra.mxu0 0
        %1227 = vmatprep.mubr.bf16.mxu0 0
        %1228 = vmatmul.mubr.bf16.gmra.mxu0 %v1193
        %v1229 = vpop.f32.mrf.mxu0
        %v1230 = vadd.f32 %v1178, %v1229
        %v1231 = vpop.f32.mrf.mxu0
        %v1232 = vpop.f32.mrf.mxu0
        %v1233 = vpop.f32.mrf.mxu0
        %1234 = vdwg.mxu0
        %v1235 = vadd.f32 %v492, %v1230
        %v1236 = vld [vmem:[%s8] sm:$0x1]
        %v1237 = vld [vmem:[%s9] sm:$0x1]
        %v1238 = vsel %vm495, %v1235, 0.0
        %1239 = vadd.xlane.f32.xlu0 %v1238
        %v1240 = vpop.xlane.xlu0 %1239
        %v1241 = vmul.f32 %v1240, %v499
        %v1242 = vsub.f32 %v1235, %v1241
        %v1243 = vmul.f32 %v1242, %v1242
        %v1244 = vsel %vm495, %v1243, 0.0
        %1245 = vadd.xlane.f32.xlu0 %v1244
        %v1246 = vpop.xlane.xlu0 %1245
        %v1247 = vmul.f32 %v1246, %v499
        %v1248 = vadd.f32 %v1247, 1e-05
        %v1249 = vrsqrt.pop %v1248
        %v1250 = vmul.f32 %v1242, %v1249
        %v1252 = vlaneseq
        %v1253 = vshrl.u32 %v1252, 7
        %v1254 = vsub.s32 0, %v1253
        %v1255 = vrot.slane %v1236, %v1254
        %v1257 = vmul.f32 %v1250, %v1255
        %v1259 = vlaneseq
        %v1260 = vshrl.u32 %v1259, 7
        %v1261 = vsub.s32 0, %v1260
        %v1262 = vrot.slane %v1237, %v1261
        %v1264 = vadd.f32 %v1257, %v1262
        %v1265 = vpack.c.bf16 %v1264, %v1264
        %v1266 = vld [vmem:[#allocation3] sm:$0xf]
        %v1267 = vld [vmem:[#allocation3 + $0x4] sm:$0xf]
        %v1268 = vld [vmem:[#allocation3 + $0x8] sm:$0xf]
        %v1269 = vld [vmem:[#allocation3 + $0xc] sm:$0xf]
        %v1270 = vld [vmem:[#allocation6] sm:$0x1]
        %v1272 = vlaneseq
        %v1273 = vshrl.u32 %v1272, 7
        %v1274 = vsub.s32 0, %v1273
        %v1275 = vrot.slane %v1270, %v1274
        %v1281 = vunpack.c.l.b16 %v1266
        %v1282 = vunpack.c.l.b16 %v1267
        %v1283 = vunpack.c.l.b16 %v1268
        %v1284 = vunpack.c.l.b16 %v1269
        %v1285 = vpack.c.b16 %v1282, %v1281
        %v1286 = vpack.c.b16 %v1284, %v1283
        %v1290 = vsel %vm495, %v1265, 0
        %1292 = vmatprep.subr.bf16.mxu0 0
        %1293 = vmatpush1.bf16.msra.mxu0 0
        %1294 = vmatprep.subr.bf16.mxu0 0
        %1295 = vmatpush1.bf16.msra.mxu0 0
        %1296 = vmatprep.subr.bf16.mxu0 0
        %1297 = vmatpush1.bf16.msra.mxu0 0
        %1298 = vmatprep.subr.bf16.mxu0 0
        %1299 = vmatpush1.bf16.msra.mxu0 0
        %1300 = vmatprep.subr.bf16.mxu0 0
        %1301 = vmatpush1.bf16.msra.mxu0 0
        %1302 = vmatprep.subr.bf16.mxu0 0
        %1303 = vmatpush1.bf16.msra.mxu0 0
        %1304 = vmatprep.subr.bf16.mxu0 0
        %1305 = vmatpush1.bf16.msra.mxu0 %v1286
        %1306 = vmatprep.subr.bf16.mxu0 0
        %1307 = vmatpush1.bf16.msra.mxu0 %v1285
        %1308 = vmatprep.subr.bf16.mxu0 0
        %1309 = vmatpush2.bf16.msra.mxu0 0
        %1310 = vmatprep.subr.bf16.mxu0 0
        %1311 = vmatpush2.bf16.msra.mxu0 0
        %1312 = vmatprep.subr.bf16.mxu0 0
        %1313 = vmatpush2.bf16.msra.mxu0 0
        %1314 = vmatprep.subr.bf16.mxu0 0
        %1315 = vmatpush2.bf16.msra.mxu0 0
        %1316 = vmatprep.subr.bf16.mxu0 0
        %1317 = vmatpush2.bf16.msra.mxu0 0
        %1318 = vmatprep.subr.bf16.mxu0 0
        %1319 = vmatpush2.bf16.msra.mxu0 0
        %1320 = vmatprep.subr.bf16.mxu0 0
        %1321 = vmatpush2.bf16.msra.mxu0 0
        %1322 = vmatprep.subr.bf16.mxu0 0
        %1323 = vmatpush2.bf16.msra.mxu0 0
        %1324 = vmatprep.mubr.bf16.mxu0 0
        %1325 = vmatmul.mubr.bf16.gmra.mxu0 %v1290
        %v1326 = vpop.f32.mrf.mxu0
        %v1327 = vadd.f32 %v1275, %v1326
        %v1328 = vpop.f32.mrf.mxu0
        %v1329 = vpop.f32.mrf.mxu0
        %v1330 = vpop.f32.mrf.mxu0
        %1331 = vdwg.mxu0
        %v1332 = vmul.f32 %v1327, 0.5
        %v1333 = vmul.f32 %v1327, 0.044715
        %v1334 = vmul.f32 %v1333, %v1327
        %v1335 = vmul.f32 %v1334, %v1327
        %v1336 = vadd.f32 %v1327, %v1335
        %v1337 = vmul.f32 %v1336, 0.7978846
        %v1338 = vtanh.pop %v1337
        %v1339 = vadd.f32 %v1338, 1.0
        %v1340 = vmul.f32 %v1332, %v1339
        %v1341 = vpack.c.bf16 %v1340, %v1340
        %v1342 = vld [vmem:[%s12] sm:$0xf]
        %v1343 = vld [vmem:[%s12 + $0x4] sm:$0xf]
        %v1344 = vld [vmem:[%s12 + $0x8] sm:$0xf]
        %v1345 = vld [vmem:[%s12 + $0xc] sm:$0xf]
        %v1346 = vld [vmem:[%s12 + $0x10] sm:$0xf]
        %v1347 = vld [vmem:[%s12 + $0x14] sm:$0xf]
        %v1348 = vld [vmem:[%s12 + $0x18] sm:$0xf]
        %v1349 = vld [vmem:[%s12 + $0x1c] sm:$0xf]
        %v1350 = vld [vmem:[%s12 + $0x20] sm:$0xf]
        %v1351 = vld [vmem:[%s12 + $0x24] sm:$0xf]
        %v1352 = vld [vmem:[%s12 + $0x28] sm:$0xf]
        %v1353 = vld [vmem:[%s12 + $0x2c] sm:$0xf]
        %v1354 = vld [vmem:[%s12 + $0x30] sm:$0xf]
        %v1355 = vld [vmem:[%s12 + $0x34] sm:$0xf]
        %v1356 = vld [vmem:[%s12 + $0x38] sm:$0xf]
        %v1357 = vld [vmem:[%s12 + $0x3c] sm:$0xf]
        %v1358 = vld [vmem:[%s13] sm:$0x1]
        %v1360 = vlaneseq
        %v1361 = vshrl.u32 %v1360, 7
        %v1362 = vsub.s32 0, %v1361
        %v1363 = vrot.slane %v1358, %v1362
        %v1381 = vunpack.c.l.b16 %v1342
        %v1382 = vunpack.c.l.b16 %v1343
        %v1383 = vunpack.c.l.b16 %v1344
        %v1384 = vunpack.c.l.b16 %v1345
        %v1385 = vunpack.c.l.b16 %v1346
        %v1386 = vunpack.c.l.b16 %v1347
        %v1387 = vunpack.c.l.b16 %v1348
        %v1388 = vunpack.c.l.b16 %v1349
        %v1389 = vunpack.c.l.b16 %v1350
        %v1390 = vunpack.c.l.b16 %v1351
        %v1391 = vunpack.c.l.b16 %v1352
        %v1392 = vunpack.c.l.b16 %v1353
        %v1393 = vunpack.c.l.b16 %v1354
        %v1394 = vunpack.c.l.b16 %v1355
        %v1395 = vunpack.c.l.b16 %v1356
        %v1396 = vunpack.c.l.b16 %v1357
        %v1397 = vpack.c.b16 %v1382, %v1381
        %v1398 = vpack.c.b16 %v1384, %v1383
        %v1399 = vpack.c.b16 %v1386, %v1385
        %v1400 = vpack.c.b16 %v1388, %v1387
        %v1401 = vpack.c.b16 %v1390, %v1389
        %v1402 = vpack.c.b16 %v1392, %v1391
        %v1403 = vpack.c.b16 %v1394, %v1393
        %v1404 = vpack.c.b16 %v1396, %v1395
        %1413 = vmatprep.subr.bf16.mxu0 0
        %1414 = vmatpush1.bf16.msra.mxu0 %v1404
        %1415 = vmatprep.subr.bf16.mxu0 0
        %1416 = vmatpush1.bf16.msra.mxu0 %v1403
        %1417 = vmatprep.subr.bf16.mxu0 0
        %1418 = vmatpush1.bf16.msra.mxu0 %v1402
        %1419 = vmatprep.subr.bf16.mxu0 0
        %1420 = vmatpush1.bf16.msra.mxu0 %v1401
        %1421 = vmatprep.subr.bf16.mxu0 0
        %1422 = vmatpush1.bf16.msra.mxu0 %v1400
        %1423 = vmatprep.subr.bf16.mxu0 0
        %1424 = vmatpush1.bf16.msra.mxu0 %v1399
        %1425 = vmatprep.subr.bf16.mxu0 0
        %1426 = vmatpush1.bf16.msra.mxu0 %v1398
        %1427 = vmatprep.subr.bf16.mxu0 0
        %1428 = vmatpush1.bf16.msra.mxu0 %v1397
        %1429 = vmatprep.subr.bf16.mxu0 0
        %1430 = vmatpush2.bf16.msra.mxu0 0
        %1431 = vmatprep.subr.bf16.mxu0 0
        %1432 = vmatpush2.bf16.msra.mxu0 0
        %1433 = vmatprep.subr.bf16.mxu0 0
        %1434 = vmatpush2.bf16.msra.mxu0 0
        %1435 = vmatprep.subr.bf16.mxu0 0
        %1436 = vmatpush2.bf16.msra.mxu0 0
        %1437 = vmatprep.subr.bf16.mxu0 0
        %1438 = vmatpush2.bf16.msra.mxu0 0
        %1439 = vmatprep.subr.bf16.mxu0 0
        %1440 = vmatpush2.bf16.msra.mxu0 0
        %1441 = vmatprep.subr.bf16.mxu0 0
        %1442 = vmatpush2.bf16.msra.mxu0 0
        %1443 = vmatprep.subr.bf16.mxu0 0
        %1444 = vmatpush2.bf16.msra.mxu0 0
        %1445 = vmatprep.mubr.bf16.mxu0 0
        %1446 = vmatmul.mubr.bf16.gmra.mxu0 %v1341
        %v1447 = vpop.f32.mrf.mxu0
        %v1448 = vadd.f32 %v1363, %v1447
        %v1449 = vpop.f32.mrf.mxu0
        %v1450 = vpop.f32.mrf.mxu0
        %v1451 = vpop.f32.mrf.mxu0
        %1452 = vdwg.mxu0
        %v1453 = vadd.f32 %v1235, %v1448
        %1454 = vst.msk [vmem:[%s486] sm:$0xff] %vm495, %v1453
        %s1455 = sand.u32 %s337, 1
        %s1456 = scalar_lea.sflag [#allocation5], %s1455
        %s1457 = sand.u32 %s337, 1
        %s1458 = smul.addr %s1457, 8
        %s1459 = scalar_lea.vmem [#allocation8], %s1458
        // Predicated region
        $region85: #{tpu_custom_call.1} parent=75 // pred_check
          %p1460 = pneg %p347
        $region86: #{tpu_custom_call.1} parent=75 // pred_check_branch
          %1462 = sbr.rel (%p1460) target = $region88
        $region87: #{tpu_custom_call.1} parent=75 // pred_region
          %s1464 = ssub.s32 128, 128
          %1465 = vsyncadd %s1456, %s1464
          %s1466 = smul.addr %s30, 128
          %s1467 = scalar_lea.hbm %s14, %s1466
          %s1469 = sshll.u32 %s1459, 4
          %s1470 = int_to_ptr.vmem [resolvable:$true] %s1469
          %1472 = dma.vmem_to_hbm [thread:$0]  %s1470, 128, %s1467, %s1456
        $region88: #{tpu_custom_call.1} parent=75 // pred_fallthru
          _
      $region76: #{tpu_custom_call.1} parent=5 // pred_fallthru
        _
      %p1473 = scmp.le.s32.totalorder 2, %s25
      // Predicated region
      $region89: #{tpu_custom_call.1} parent=5 // pred_check
        %p1474 = pneg %p1473
      $region90: #{tpu_custom_call.1} parent=5 // pred_check_branch
        %1476 = sbr.rel (%p1474) target = $region92
      $region91: #{tpu_custom_call.1} parent=5 // pred_region
        %s1477 = ssub.s32 %s25, 2
        // Predicated region
        $region93: #{tpu_custom_call.1} parent=91 // pred_check
          %p1478 = pneg %p353
        $region94: #{tpu_custom_call.1} parent=91 // pred_check_branch
          %1480 = sbr.rel (%p1478) target = $region96
        $region95: #{tpu_custom_call.1} parent=91 // pred_region
          %s1481 = sand.u32 %s338, 1
          %s1482 = scalar_lea.sflag [#allocation5], %s1481
          %s1483 = sand.u32 %s338, 1
          %s1484 = smul.addr %s1483, 8
          %s1485 = scalar_lea.vmem [#allocation8], %s1484
          %1486 = dma.done %s1482, 128
        $region96: #{tpu_custom_call.1} parent=91 // pred_fallthru
          _
      $region92: #{tpu_custom_call.1} parent=5 // pred_fallthru
        _
    $region6: #{tpu_custom_call.1} parent=1 // loop_footer
      %s29 = sadd.s32 1, %s25
    $region7: #{tpu_custom_call.1} parent=1 // loop_footer_branch
      %24 = sbr.rel target = $region3
    $region8: #{tpu_custom_call.1} parent=1 // loop_exit
      _
    %1487 = vsyncpa [#allocation4], 1
    %s1488 = scalar_lea.sflag [#allocation4], 1
    %1489 = vsyncpa %s1488, 1
    %1490 = vsyncpa [#allocation7], 1
    %1491 = vsyncpa [#allocation5], 1
    %s1492 = scalar_lea.sflag [#allocation5], 1
    %1493 = vsyncpa %s1492, 1

// kernel: tpu_custom_call.1
$region0: #{tpu_custom_call.1}
  #allocation0 [shape = 'u32[]', space=smem, size = 0x4, offset = 0x4, fixed_abs, tag = 'smem constant byte address 0x4 - core index']
  #allocation1 [shape = 'u32[144,128]{1,0:T(1,128)}', space=vmem, size = 0x12000, scoped, tag = 'internal scratch']
  #allocation2 [shape = 'bf16[8,32]{1,0:T(8,128)(2,1)}', space=vmem, size = 0x800, scoped, tag = 'scratch operand']
  %s0 = inlined_call_operand.vmem [shape: f32[16,32], index: 0, kind: input, shape index: {}]
  %s1 = inlined_call_operand.vmem [shape: f32[1,32], index: 1, kind: input, shape index: {}]
  %s2 = inlined_call_operand.vmem [shape: f32[1,32], index: 2, kind: input, shape index: {}]
  %s3 = inlined_call_operand.vmem [shape: bf16[32,32], index: 3, kind: input, shape index: {}]
  %s4 = inlined_call_operand.vmem [shape: bf16[32,32], index: 4, kind: input, shape index: {}]
  %s5 = inlined_call_operand.vmem [shape: bf16[32,32], index: 5, kind: input, shape index: {}]
  %s6 = inlined_call_operand.vmem [shape: bf16[32,32], index: 6, kind: input, shape index: {}]
  %s7 = inlined_call_operand.vmem [shape: f32[1,32], index: 7, kind: input, shape index: {}]
  %s8 = inlined_call_operand.vmem [shape: f32[1,32], index: 8, kind: input, shape index: {}]
  %s9 = inlined_call_operand.vmem [shape: f32[1,32], index: 9, kind: input, shape index: {}]
  %s10 = inlined_call_operand.hbm [shape: bf16[32,128], index: 10, kind: input, shape index: {}]
  %s11 = inlined_call_operand.hbm [shape: f32[1,128], index: 11, kind: input, shape index: {}]
  %s12 = inlined_call_operand.vmem [shape: bf16[128,32], index: 12, kind: input, shape index: {}]
  %s13 = inlined_call_operand.vmem [shape: f32[1,32], index: 13, kind: input, shape index: {}]
  %s14 = inlined_call_operand.hbm [shape: f32[16,32], index: 14, kind: output, shape index: {}]
  %s15 = sld [smem:[#allocation0]]
  $region97: #{tpu_custom_call.1} parent=0
    _
  %s17 = ssub.s32 1, %s15
  %s18 = scalar_select 0, %s17, %s15
  $region1: #{tpu_custom_call.1} parent=0
    #allocation3 [shape = 'u8[8192]{0}', space=vmem, size = 0x2000, scoped, tag = 'input window, operand 10, single buffered']
    #allocation4 [shape = 's32[2]{0}', space=sflag, size = 0x8, scoped, tag = 'scoped memory for tpu_custom_call.1']
    #allocation5 [shape = 's32[2]{0}', space=sflag, size = 0x8, scoped, tag = 'scoped memory for tpu_custom_call.1']
    #allocation6 [shape = 'u8[512]{0}', space=vmem, size = 0x400, scoped, tag = 'input window, operand 11, single buffered']
    #allocation7 [shape = 's32[1]{0}', space=sflag, size = 0x4, scoped, tag = 'scoped memory for tpu_custom_call.1']
    #allocation8 [shape = 'u8[8192]{0}', space=vmem, size = 0x2000, scoped, tag = 'output window, operand 0']
    %19 = vsyncpa [#allocation4], 0
    %20 = vsyncpa [#allocation7], 0
    %21 = vsyncpa [#allocation5], 0
    %s22 = scalar_lea.sflag [#allocation5], 1
    %23 = vsyncpa %s22, 0
    loop: start=0, step=1, limit=4
    $region2: #{tpu_custom_call.1} parent=1 // loop_pre_header
      _
    $region3: #{tpu_custom_call.1} parent=1 // loop_header
      %s25 = sphi 0, %s29
      %p26 = scmp.ge.s32.totalorder %s25, 4
      %s35 = sphi 0, %s37
      %s38 = sphi 0, %s35
      %s39 = sphi 0, %s38
      %s55 = sphi 0, %s39
      %s59 = sphi 0, %s59
      %s61 = sphi 0, %s59
      %s62 = sphi 0, %s61
      %s76 = sphi 0, %s62
      %s80 = sphi 0, %s80
      %s82 = sphi 0, %s80
      %s83 = sphi 0, %s82
      %s97 = sphi 0, %s83
      %s101 = sphi 0, %s101
      %s103 = sphi 0, %s101
      %s104 = sphi 0, %s103
      %s118 = sphi 0, %s104
      %s122 = sphi 0, %s122
      %s124 = sphi 0, %s122
      %s125 = sphi 0, %s124
      %s139 = sphi 0, %s125
      %s143 = sphi 0, %s143
      %s145 = sphi 0, %s143
      %s146 = sphi 0, %s145
      %s160 = sphi 0, %s146
      %s164 = sphi 0, %s164
      %s166 = sphi 0, %s164
      %s167 = sphi 0, %s166
      %s181 = sphi 0, %s167
      %s185 = sphi 0, %s185
      %s187 = sphi 0, %s185
      %s188 = sphi 0, %s187
      %s202 = sphi 0, %s188
      %s206 = sphi 0, %s206
      %s208 = sphi 0, %s206
      %s209 = sphi 0, %s208
      %s223 = sphi 0, %s209
      %s227 = sphi 0, %s227
      %s229 = sphi 0, %s227
      %s230 = sphi 0, %s229
      %s244 = sphi 0, %s230
      %s248 = sphi 0, %s248
      %s250 = sphi 0, %s248
      %s251 = sphi 0, %s250
      %s265 = sphi 0, %s251
      %s269 = sphi 0, %s269
      %s271 = sphi 0, %s269
      %s272 = sphi 0, %s271
      %s286 = sphi 0, %s272
      %s290 = sphi 0, %s290
      %s292 = sphi 0, %s290
      %s293 = sphi 0, %s292
      %s307 = sphi 0, %s293
      %s311 = sphi 0, %s311
      %s313 = sphi 0, %s311
      %s314 = sphi 0, %s313
      %s328 = sphi 0, %s314
      %s334 = sphi 0, %s336
      %s337 = sphi 0, %s334
      %s338 = sphi 0, %s337
      %s354 = sphi 0, %s338
    $region4: #{tpu_custom_call.1} parent=1 // loop_header_branch
      %28 = sbr.rel (%p26) target = $region8
    $region5: #{tpu_custom_call.1} parent=1 // loop_body
      %s30 = ssub.s32 %s25, 1
      %s31 = ssub.s32 %s25, 2
      %s32 = sadd.s32 %s25, 1
      %s33 = ssub.s32 %s25, %s32
      %p34 = scmp.eq.s32.totalorder %s33, 0
      %s36 = sadd.s32 %s35, 1
      %s37 = scalar_select %p34, %s35, %s36
      %p40 = pneg %p34
      %p41 = scmp.eq.s32.totalorder %s25, 1
      %p42 = por %p40, %p41
      %p43 = scmp.ne.s32.totalorder %s35, %s38
      %p44 = scmp.eq.s32.totalorder %s25, 0
      %p45 = por %p43, %p44
      %p46 = scmp.ne.s32.totalorder %s35, %s38
      %p47 = scmp.eq.s32.totalorder %s30, 1
      %p48 = por %p46, %p47
      %p49 = scmp.ne.s32.totalorder %s38, %s39
      %p50 = scmp.eq.s32.totalorder %s30, 0
      %p51 = por %p49, %p50
      %p52 = scmp.ne.s32.totalorder %s38, %s39
      %p53 = scmp.eq.s32.totalorder %s31, 1
      %p54 = por %p52, %p53
      %p56 = scmp.ne.s32.totalorder %s39, %s55
      %p57 = scmp.eq.s32.totalorder %s31, 0
      %p58 = por %p56, %p57
      %s60 = sadd.s32 %s59, 1
      %p63 = scmp.eq.s32.totalorder %s25, 1
      %p64 = scmp.ne.s32.totalorder %s59, %s61
      %p65 = scmp.eq.s32.totalorder %s25, 0
      %p66 = por %p64, %p65
      %p67 = scmp.ne.s32.totalorder %s59, %s61
      %p68 = scmp.eq.s32.totalorder %s30, 1
      %p69 = por %p67, %p68
      %p70 = scmp.ne.s32.totalorder %s61, %s62
      %p71 = scmp.eq.s32.totalorder %s30, 0
      %p72 = por %p70, %p71
      %p73 = scmp.ne.s32.totalorder %s61, %s62
      %p74 = scmp.eq.s32.totalorder %s31, 1
      %p75 = por %p73, %p74
      %p77 = scmp.ne.s32.totalorder %s62, %s76
      %p78 = scmp.eq.s32.totalorder %s31, 0
      %p79 = por %p77, %p78
      %s81 = sadd.s32 %s80, 1
      %p84 = scmp.eq.s32.totalorder %s25, 1
      %p85 = scmp.ne.s32.totalorder %s80, %s82
      %p86 = scmp.eq.s32.totalorder %s25, 0
      %p87 = por %p85, %p86
      %p88 = scmp.ne.s32.totalorder %s80, %s82
      %p89 = scmp.eq.s32.totalorder %s30, 1
      %p90 = por %p88, %p89
      %p91 = scmp.ne.s32.totalorder %s82, %s83
      %p92 = scmp.eq.s32.totalorder %s30, 0
      %p93 = por %p91, %p92
      %p94 = scmp.ne.s32.totalorder %s82, %s83
      %p95 = scmp.eq.s32.totalorder %s31, 1
      %p96 = por %p94, %p95
      %p98 = scmp.ne.s32.totalorder %s83, %s97
      %p99 = scmp.eq.s32.totalorder %s31, 0
      %p100 = por %p98, %p99
      %s102 = sadd.s32 %s101, 1
      %p105 = scmp.eq.s32.totalorder %s25, 1
      %p106 = scmp.ne.s32.totalorder %s101, %s103
      %p107 = scmp.eq.s32.totalorder %s25, 0
      %p108 = por %p106, %p107
      %p109 = scmp.ne.s32.totalorder %s101, %s103
      %p110 = scmp.eq.s32.totalorder %s30, 1
      %p111 = por %p109, %p110
      %p112 = scmp.ne.s32.totalorder %s103, %s104
      %p113 = scmp.eq.s32.totalorder %s30, 0
      %p114 = por %p112, %p113
      %p115 = scmp.ne.s32.totalorder %s103, %s104
      %p116 = scmp.eq.s32.totalorder %s31, 1
      %p117 = por %p115, %p116
      %p119 = scmp.ne.s32.totalorder %s104, %s118
      %p120 = scmp.eq.s32.totalorder %s31, 0
      %p121 = por %p119, %p120
      %s123 = sadd.s32 %s122, 1
      %p126 = scmp.eq.s32.totalorder %s25, 1
      %p127 = scmp.ne.s32.totalorder %s122, %s124
      %p128 = scmp.eq.s32.totalorder %s25, 0
      %p129 = por %p127, %p128
      %p130 = scmp.ne.s32.totalorder %s122, %s124
      %p131 = scmp.eq.s32.totalorder %s30, 1
      %p132 = por %p130, %p131
      %p133 = scmp.ne.s32.totalorder %s124, %s125
      %p134 = scmp.eq.s32.totalorder %s30, 0
      %p135 = por %p133, %p134
      %p136 = scmp.ne.s32.totalorder %s124, %s125
      %p137 = scmp.eq.s32.totalorder %s31, 1
      %p138 = por %p136, %p137
      %p140 = scmp.ne.s32.totalorder %s125, %s139
      %p141 = scmp.eq.s32.totalorder %s31, 0
      %p142 = por %p140, %p141
      %s144 = sadd.s32 %s143, 1
      %p147 = scmp.eq.s32.totalorder %s25, 1
      %p148 = scmp.ne.s32.totalorder %s143, %s145
      %p149 = scmp.eq.s32.totalorder %s25, 0
      %p150 = por %p148, %p149
      %p151 = scmp.ne.s32.totalorder %s143, %s145
      %p152 = scmp.eq.s32.totalorder %s30, 1
      %p153 = por %p151, %p152
      %p154 = scmp.ne.s32.totalorder %s145, %s146
      %p155 = scmp.eq.s32.totalorder %s30, 0
      %p156 = por %p154, %p155
      %p157 = scmp.ne.s32.totalorder %s145, %s146
      %p158 = scmp.eq.s32.totalorder %s31, 1
      %p159 = por %p157, %p158
      %p161 = scmp.ne.s32.totalorder %s146, %s160
      %p162 = scmp.eq.s32.totalorder %s31, 0
      %p163 = por %p161, %p162
      %s165 = sadd.s32 %s164, 1
      %p168 = scmp.eq.s32.totalorder %s25, 1
      %p169 = scmp.ne.s32.totalorder %s164, %s166
      %p170 = scmp.eq.s32.totalorder %s25, 0
      %p171 = por %p169, %p170
      %p172 = scmp.ne.s32.totalorder %s164, %s166
      %p173 = scmp.eq.s32.totalorder %s30, 1
      %p174 = por %p172, %p173
      %p175 = scmp.ne.s32.totalorder %s166, %s167
      %p176 = scmp.eq.s32.totalorder %s30, 0
      %p177 = por %p175, %p176
      %p178 = scmp.ne.s32.totalorder %s166, %s167
      %p179 = scmp.eq.s32.totalorder %s31, 1
      %p180 = por %p178, %p179
      %p182 = scmp.ne.s32.totalorder %s167, %s181
      %p183 = scmp.eq.s32.totalorder %s31, 0
      %p184 = por %p182, %p183
      %s186 = sadd.s32 %s185, 1
      %p189 = scmp.eq.s32.totalorder %s25, 1
      %p190 = scmp.ne.s32.totalorder %s185, %s187
      %p191 = scmp.eq.s32.totalorder %s25, 0
      %p192 = por %p190, %p191
      %p193 = scmp.ne.s32.totalorder %s185, %s187
      %p194 = scmp.eq.s32.totalorder %s30, 1
      %p195 = por %p193, %p194
      %p196 = scmp.ne.s32.totalorder %s187, %s188
      %p197 = scmp.eq.s32.totalorder %s30, 0
      %p198 = por %p196, %p197
      %p199 = scmp.ne.s32.totalorder %s187, %s188
      %p200 = scmp.eq.s32.totalorder %s31, 1
      %p201 = por %p199, %p200
      %p203 = scmp.ne.s32.totalorder %s188, %s202
      %p204 = scmp.eq.s32.totalorder %s31, 0
      %p205 = por %p203, %p204
      %s207 = sadd.s32 %s206, 1
      %p210 = scmp.eq.s32.totalorder %s25, 1
      %p211 = scmp.ne.s32.totalorder %s206, %s208
      %p212 = scmp.eq.s32.totalorder %s25, 0
      %p213 = por %p211, %p212
      %p214 = scmp.ne.s32.totalorder %s206, %s208
      %p215 = scmp.eq.s32.totalorder %s30, 1
      %p216 = por %p214, %p215
      %p217 = scmp.ne.s32.totalorder %s208, %s209
      %p218 = scmp.eq.s32.totalorder %s30, 0
      %p219 = por %p217, %p218
      %p220 = scmp.ne.s32.totalorder %s208, %s209
      %p221 = scmp.eq.s32.totalorder %s31, 1
      %p222 = por %p220, %p221
      %p224 = scmp.ne.s32.totalorder %s209, %s223
      %p225 = scmp.eq.s32.totalorder %s31, 0
      %p226 = por %p224, %p225
      %s228 = sadd.s32 %s227, 1
      %p231 = scmp.eq.s32.totalorder %s25, 1
      %p232 = scmp.ne.s32.totalorder %s227, %s229
      %p233 = scmp.eq.s32.totalorder %s25, 0
      %p234 = por %p232, %p233
      %p235 = scmp.ne.s32.totalorder %s227, %s229
      %p236 = scmp.eq.s32.totalorder %s30, 1
      %p237 = por %p235, %p236
      %p238 = scmp.ne.s32.totalorder %s229, %s230
      %p239 = scmp.eq.s32.totalorder %s30, 0
      %p240 = por %p238, %p239
      %p241 = scmp.ne.s32.totalorder %s229, %s230
      %p242 = scmp.eq.s32.totalorder %s31, 1
      %p243 = por %p241, %p242
      %p245 = scmp.ne.s32.totalorder %s230, %s244
      %p246 = scmp.eq.s32.totalorder %s31, 0
      %p247 = por %p245, %p246
      %s249 = sadd.s32 %s248, 1
      %p252 = scmp.eq.s32.totalorder %s25, 1
      %p253 = scmp.ne.s32.totalorder %s248, %s250
      %p254 = scmp.eq.s32.totalorder %s25, 0
      %p255 = por %p253, %p254
      %p256 = scmp.ne.s32.totalorder %s248, %s250
      %p257 = scmp.eq.s32.totalorder %s30, 1
      %p258 = por %p256, %p257
      %p259 = scmp.ne.s32.totalorder %s250, %s251
      %p260 = scmp.eq.s32.totalorder %s30, 0
      %p261 = por %p259, %p260
      %p262 = scmp.ne.s32.totalorder %s250, %s251
      %p263 = scmp.eq.s32.totalorder %s31, 1
      %p264 = por %p262, %p263
      %p266 = scmp.ne.s32.totalorder %s251, %s265
      %p267 = scmp.eq.s32.totalorder %s31, 0
      %p268 = por %p266, %p267
      %s270 = sadd.s32 %s269, 1
      %p273 = scmp.eq.s32.totalorder %s25, 1
      %p274 = scmp.ne.s32.totalorder %s269, %s271
      %p275 = scmp.eq.s32.totalorder %s25, 0
      %p276 = por %p274, %p275
      %p277 = scmp.ne.s32.totalorder %s269, %s271
      %p278 = scmp.eq.s32.totalorder %s30, 1
      %p279 = por %p277, %p278
      %p280 = scmp.ne.s32.totalorder %s271, %s272
      %p281 = scmp.eq.s32.totalorder %s30, 0
      %p282 = por %p280, %p281
      %p283 = scmp.ne.s32.totalorder %s271, %s272
      %p284 = scmp.eq.s32.totalorder %s31, 1
      %p285 = por %p283, %p284
      %p287 = scmp.ne.s32.totalorder %s272, %s286
      %p288 = scmp.eq.s32.totalorder %s31, 0
      %p289 = por %p287, %p288
      %s291 = sadd.s32 %s290, 1
      %p294 = scmp.eq.s32.totalorder %s25, 1
      %p295 = scmp.ne.s32.totalorder %s290, %s292
      %p296 = scmp.eq.s32.totalorder %s25, 0
      %p297 = por %p295, %p296
      %p298 = scmp.ne.s32.totalorder %s290, %s292
      %p299 = scmp.eq.s32.totalorder %s30, 1
      %p300 = por %p298, %p299
      %p301 = scmp.ne.s32.totalorder %s292, %s293
      %p302 = scmp.eq.s32.totalorder %s30, 0
      %p303 = por %p301, %p302
      %p304 = scmp.ne.s32.totalorder %s292, %s293
      %p305 = scmp.eq.s32.totalorder %s31, 1
      %p306 = por %p304, %p305
      %p308 = scmp.ne.s32.totalorder %s293, %s307
      %p309 = scmp.eq.s32.totalorder %s31, 0
      %p310 = por %p308, %p309
      %s312 = sadd.s32 %s311, 1
      %p315 = scmp.eq.s32.totalorder %s25, 1
      %p316 = scmp.ne.s32.totalorder %s311, %s313
      %p317 = scmp.eq.s32.totalorder %s25, 0
      %p318 = por %p316, %p317
      %p319 = scmp.ne.s32.totalorder %s311, %s313
      %p320 = scmp.eq.s32.totalorder %s30, 1
      %p321 = por %p319, %p320
      %p322 = scmp.ne.s32.totalorder %s313, %s314
      %p323 = scmp.eq.s32.totalorder %s30, 0
      %p324 = por %p322, %p323
      %p325 = scmp.ne.s32.totalorder %s313, %s314
      %p326 = scmp.eq.s32.totalorder %s31, 1
      %p327 = por %p325, %p326
      %p329 = scmp.ne.s32.totalorder %s314, %s328
      %p330 = scmp.eq.s32.totalorder %s31, 0
      %p331 = por %p329, %p330
      %s332 = ssub.s32 %s25, %s32
      %p333 = scmp.eq.s32.totalorder %s332, 0
      %s335 = sadd.s32 %s334, 1
      %s336 = scalar_select %p333, %s334, %s335
      %p339 = pneg %p333
      %p340 = scmp.eq.s32.totalorder %s25, 1
      %p341 = por %p339, %p340
      %p342 = scmp.ne.s32.totalorder %s334, %s337
      %p343 = scmp.eq.s32.totalorder %s25, 0
      %p344 = por %p342, %p343
      %p345 = scmp.ne.s32.totalorder %s334, %s337
      %p346 = scmp.eq.s32.totalorder %s30, 1
      %p347 = por %p345, %p346
      %p348 = scmp.ne.s32.totalorder %s337, %s338
      %p349 = scmp.eq.s32.totalorder %s30, 0
      %p350 = por %p348, %p349
      %p351 = scmp.ne.s32.totalorder %s337, %s338
      %p352 = scmp.eq.s32.totalorder %s31, 1
      %p353 = por %p351, %p352
      %p355 = scmp.ne.s32.totalorder %s338, %s354
      %p356 = scmp.eq.s32.totalorder %s31, 0
      %p357 = por %p355, %p356
      %p358 = scmp.le.s32.totalorder 1, %s25
      %p359 = scmp.lt.s32.totalorder %s25, 3
      %p360 = pnand %p358, %p359
      %p361 = pneg %p360
      // Predicated region
      $region9: #{tpu_custom_call.1} parent=5 // pred_check
        _
      $region10: #{tpu_custom_call.1} parent=5 // pred_check_branch
        %363 = sbr.rel (%p360) target = $region12
      $region11: #{tpu_custom_call.1} parent=5 // pred_region
        %s364 = ssub.s32 %s25, 1
        // Predicated region
        $region13: #{tpu_custom_call.1} parent=11 // pred_check
          %p365 = pneg %p72
        $region14: #{tpu_custom_call.1} parent=11 // pred_check_branch
          %367 = sbr.rel (%p365) target = $region16
        $region15: #{tpu_custom_call.1} parent=11 // pred_region
          _
        $region16: #{tpu_custom_call.1} parent=11 // pred_fallthru
          _
        // Predicated region
        $region17: #{tpu_custom_call.1} parent=11 // pred_check
          %p368 = pneg %p93
        $region18: #{tpu_custom_call.1} parent=11 // pred_check_branch
          %370 = sbr.rel (%p368) target = $region20
        $region19: #{tpu_custom_call.1} parent=11 // pred_region
          _
        $region20: #{tpu_custom_call.1} parent=11 // pred_fallthru
          _
        // Predicated region
        $region21: #{tpu_custom_call.1} parent=11 // pred_check
          %p371 = pneg %p114
        $region22: #{tpu_custom_call.1} parent=11 // pred_check_branch
          %373 = sbr.rel (%p371) target = $region24
        $region23: #{tpu_custom_call.1} parent=11 // pred_region
          _
        $region24: #{tpu_custom_call.1} parent=11 // pred_fallthru
          _
        // Predicated region
        $region25: #{tpu_custom_call.1} parent=11 // pred_check
          %p374 = pneg %p135
        $region26: #{tpu_custom_call.1} parent=11 // pred_check_branch
          %376 = sbr.rel (%p374) target = $region28
        $region27: #{tpu_custom_call.1} parent=11 // pred_region
          _
        $region28: #{tpu_custom_call.1} parent=11 // pred_fallthru
          _
        // Predicated region
        $region29: #{tpu_custom_call.1} parent=11 // pred_check
          %p377 = pneg %p156
        $region30: #{tpu_custom_call.1} parent=11 // pred_check_branch
          %379 = sbr.rel (%p377) target = $region32
        $region31: #{tpu_custom_call.1} parent=11 // pred_region
          _
        $region32: #{tpu_custom_call.1} parent=11 // pred_fallthru
          _
        // Predicated region
        $region33: #{tpu_custom_call.1} parent=11 // pred_check
          %p380 = pneg %p177
        $region34: #{tpu_custom_call.1} parent=11 // pred_check_branch
          %382 = sbr.rel (%p380) target = $region36
        $region35: #{tpu_custom_call.1} parent=11 // pred_region
          _
        $region36: #{tpu_custom_call.1} parent=11 // pred_fallthru
          _
        // Predicated region
        $region37: #{tpu_custom_call.1} parent=11 // pred_check
          %p383 = pneg %p198
        $region38: #{tpu_custom_call.1} parent=11 // pred_check_branch
          %385 = sbr.rel (%p383) target = $region40
        $region39: #{tpu_custom_call.1} parent=11 // pred_region
          _
        $region40: #{tpu_custom_call.1} parent=11 // pred_fallthru
          _
        // Predicated region
        $region41: #{tpu_custom_call.1} parent=11 // pred_check
          %p386 = pneg %p219
        $region42: #{tpu_custom_call.1} parent=11 // pred_check_branch
          %388 = sbr.rel (%p386) target = $region44
        $region43: #{tpu_custom_call.1} parent=11 // pred_region
          _
        $region44: #{tpu_custom_call.1} parent=11 // pred_fallthru
          _
        // Predicated region
        $region45: #{tpu_custom_call.1} parent=11 // pred_check
          %p389 = pneg %p240
        $region46: #{tpu_custom_call.1} parent=11 // pred_check_branch
          %391 = sbr.rel (%p389) target = $region48
        $region47: #{tpu_custom_call.1} parent=11 // pred_region
          _
        $region48: #{tpu_custom_call.1} parent=11 // pred_fallthru
          _
        // Predicated region
        $region49: #{tpu_custom_call.1} parent=11 // pred_check
          %p392 = pneg %p261
        $region50: #{tpu_custom_call.1} parent=11 // pred_check_branch
          %394 = sbr.rel (%p392) target = $region52
        $region51: #{tpu_custom_call.1} parent=11 // pred_region
          %s396 = ssub.s32 256, 256
          %397 = vsyncadd [#allocation4], %s396
          %s398 = sshll.u32 [#allocation3], 4
          %s399 = int_to_ptr.vmem [resolvable:$true] %s398
          %404 = dma.hbm_to_vmem [thread:$0]  %s10, 256, %s399, [#allocation4], 64, 64, 4
        $region52: #{tpu_custom_call.1} parent=11 // pred_fallthru
          _
        // Predicated region
        $region53: #{tpu_custom_call.1} parent=11 // pred_check
          %p405 = pneg %p282
        $region54: #{tpu_custom_call.1} parent=11 // pred_check_branch
          %407 = sbr.rel (%p405) target = $region56
        $region55: #{tpu_custom_call.1} parent=11 // pred_region
          %s409 = ssub.s32 16, 16
          %410 = vsyncadd [#allocation7], %s409
          %s412 = sshll.u32 [#allocation6], 4
          %s413 = int_to_ptr.vmem [resolvable:$true] %s412
          %415 = dma.hbm_to_vmem [thread:$0]  %s11, 16, %s413, [#allocation7]
        $region56: #{tpu_custom_call.1} parent=11 // pred_fallthru
          _
        // Predicated region
        $region57: #{tpu_custom_call.1} parent=11 // pred_check
          %p416 = pneg %p303
        $region58: #{tpu_custom_call.1} parent=11 // pred_check_branch
          %418 = sbr.rel (%p416) target = $region60
        $region59: #{tpu_custom_call.1} parent=11 // pred_region
          _
        $region60: #{tpu_custom_call.1} parent=11 // pred_fallthru
          _
        // Predicated region
        $region61: #{tpu_custom_call.1} parent=11 // pred_check
          %p419 = pneg %p324
        $region62: #{tpu_custom_call.1} parent=11 // pred_check_branch
          %421 = sbr.rel (%p419) target = $region64
        $region63: #{tpu_custom_call.1} parent=11 // pred_region
          _
        $region64: #{tpu_custom_call.1} parent=11 // pred_fallthru
          _
      $region12: #{tpu_custom_call.1} parent=5 // pred_fallthru
        _
      %p422 = scmp.lt.s32.totalorder %s25, 2
      // Predicated region
      $region65: #{tpu_custom_call.1} parent=5 // pred_check
        %p423 = pneg %p422
      $region66: #{tpu_custom_call.1} parent=5 // pred_check_branch
        %425 = sbr.rel (%p423) target = $region68
      $region67: #{tpu_custom_call.1} parent=5 // pred_region
        // Predicated region
        $region69: #{tpu_custom_call.1} parent=67 // pred_check
          %p426 = pneg %p45
        $region70: #{tpu_custom_call.1} parent=67 // pred_check_branch
          %428 = sbr.rel (%p426) target = $region72
        $region71: #{tpu_custom_call.1} parent=67 // pred_region
          %p429 = scmp.lt.s32.totalorder %s25, 1
          %s430 = scalar_select %p429, %s25, 1
          %s431 = smul.addr %s430, 8
          %s432 = scalar_lea.vmem %s0, %s431
        $region72: #{tpu_custom_call.1} parent=67 // pred_fallthru
          _
      $region68: #{tpu_custom_call.1} parent=5 // pred_fallthru
        _
      %p433 = scmp.le.s32.totalorder 1, %s25
      %p434 = scmp.lt.s32.totalorder %s25, 3
      %p435 = pnand %p433, %p434
      %p436 = pneg %p435
      // Predicated region
      $region73: #{tpu_custom_call.1} parent=5 // pred_check
        _
      $region74: #{tpu_custom_call.1} parent=5 // pred_check_branch
        %438 = sbr.rel (%p435) target = $region76
      $region75: #{tpu_custom_call.1} parent=5 // pred_region
        %s439 = ssub.s32 %s25, 1
        // Predicated region
        $region77: #{tpu_custom_call.1} parent=75 // pred_check
          %p440 = pneg %p261
        $region78: #{tpu_custom_call.1} parent=75 // pred_check_branch
          %442 = sbr.rel (%p440) target = $region80
        $region79: #{tpu_custom_call.1} parent=75 // pred_region
          %443 = dma.done [#allocation4], 256
        $region80: #{tpu_custom_call.1} parent=75 // pred_fallthru
          _
        // Predicated region
        $region81: #{tpu_custom_call.1} parent=75 // pred_check
          %p444 = pneg %p282
        $region82: #{tpu_custom_call.1} parent=75 // pred_check_branch
          %446 = sbr.rel (%p444) target = $region84
        $region83: #{tpu_custom_call.1} parent=75 // pred_region
          %447 = dma.done [#allocation7], 16
        $region84: #{tpu_custom_call.1} parent=75 // pred_fallthru
          _
        %p448 = scmp.lt.s32.totalorder %s30, 1
        %s449 = scalar_select %p448, %s30, 1
        %s450 = smul.addr %s449, 8
        %s451 = scalar_lea.vmem %s0, %s450
        %p452 = pneg %p51
        %p453 = pneg %p48
        %p454 = pneg %p72
        %p455 = pneg %p69
        %p456 = pneg %p93
        %p457 = pneg %p90
        %p458 = pneg %p114
        %p459 = pneg %p111
        %p460 = pneg %p135
        %p461 = pneg %p132
        %p462 = pneg %p156
        %p463 = pneg %p153
        %p464 = pneg %p177
        %p465 = pneg %p174
        %p466 = pneg %p198
        %p467 = pneg %p195
        %p468 = pneg %p219
        %p469 = pneg %p216
        %p470 = pneg %p240
        %p471 = pneg %p237
        %p472 = pneg %p261
        %p473 = pneg %p258
        %p474 = pneg %p282
        %p475 = pneg %p279
        %p476 = pneg %p303
        %p477 = pneg %p300
        %p478 = pneg %p324
        %p479 = pneg %p321
        %p480 = pneg %p350
        %p481 = pneg %p347
        %s482 = sand.u32 %s337, 1
        %s483 = scalar_lea.sflag [#allocation5], %s482
        %s484 = sand.u32 %s337, 1
        %s485 = smul.addr %s484, 8
        %s486 = scalar_lea.vmem [#allocation8], %s485
        %p487 = scmp.lt.s32.totalorder %s30, 1
        %s488 = scalar_select %p487, %s30, 1
        %s489 = smul.addr %s488, 8
        %s490 = scalar_lea.vmem %s0, %s489
        %v492 = vld [vmem:[%s490] sm:$0xff]
        %v493 = vld [vmem:[%s1] sm:$0x1]
        %v494 = vld [vmem:[%s2] sm:$0x1]
        %vm495 = vcmask 261120
        %v496 = vsel %vm495, %v492, 0.0
        %497 = vadd.xlane.f32.xlu0 %v496
        %v498 = vpop.xlane.xlu0 %497
        %v499 = vrcp.pop 32.0
        %v500 = vmul.f32 %v498, %v499
        %v501 = vsub.f32 %v492, %v500
        %v502 = vmul.f32 %v501, %v501
        %v503 = vsel %vm495, %v502, 0.0
        %504 = vadd.xlane.f32.xlu0 %v503
        %v505 = vpop.xlane.xlu0 %504
        %v506 = vmul.f32 %v505, %v499
        %v507 = vadd.f32 %v506, 1e-05
        %v508 = vrsqrt.pop %v507
        %v509 = vmul.f32 %v501, %v508
        %v511 = vlaneseq
        %v512 = vshrl.u32 %v511, 7
        %v513 = vsub.s32 0, %v512
        %v514 = vrot.slane %v493, %v513
        %v516 = vmul.f32 %v509, %v514
        %v518 = vlaneseq
        %v519 = vshrl.u32 %v518, 7
        %v520 = vsub.s32 0, %v519
        %v521 = vrot.slane %v494, %v520
        %v523 = vadd.f32 %v516, %v521
        %v524 = vpack.c.bf16 %v523, %v523
        %v525 = vld [vmem:[%s3] sm:$0xf]
        %v526 = vld [vmem:[%s3 + $0x4] sm:$0xf]
        %v527 = vld [vmem:[%s3 + $0x8] sm:$0xf]
        %v528 = vld [vmem:[%s3 + $0xc] sm:$0xf]
        %v533 = vunpack.c.l.b16 %v525
        %v534 = vunpack.c.l.b16 %v526
        %v535 = vunpack.c.l.b16 %v527
        %v536 = vunpack.c.l.b16 %v528
        %v537 = vpack.c.b16 %v534, %v533
        %v538 = vpack.c.b16 %v536, %v535
        %v542 = vsel %vm495, %v524, 0
        %544 = vmatprep.subr.bf16.mxu0 0
        %545 = vmatpush1.bf16.msra.mxu0 0
        %546 = vmatprep.subr.bf16.mxu0 0
        %547 = vmatpush1.bf16.msra.mxu0 0
        %548 = vmatprep.subr.bf16.mxu0 0
        %549 = vmatpush1.bf16.msra.mxu0 0
        %550 = vmatprep.subr.bf16.mxu0 0
        %551 = vmatpush1.bf16.msra.mxu0 0
        %552 = vmatprep.subr.bf16.mxu0 0
        %553 = vmatpush1.bf16.msra.mxu0 0
        %554 = vmatprep.subr.bf16.mxu0 0
        %555 = vmatpush1.bf16.msra.mxu0 0
        %556 = vmatprep.subr.bf16.mxu0 0
        %557 = vmatpush1.bf16.msra.mxu0 %v538
        %558 = vmatprep.subr.bf16.mxu0 0
        %559 = vmatpush1.bf16.msra.mxu0 %v537
        %560 = vmatprep.subr.bf16.mxu0 0
        %561 = vmatpush2.bf16.msra.mxu0 0
        %562 = vmatprep.subr.bf16.mxu0 0
        %563 = vmatpush2.bf16.msra.mxu0 0
        %564 = vmatprep.subr.bf16.mxu0 0
        %565 = vmatpush2.bf16.msra.mxu0 0
        %566 = vmatprep.subr.bf16.mxu0 0
        %567 = vmatpush2.bf16.msra.mxu0 0
        %568 = vmatprep.subr.bf16.mxu0 0
        %569 = vmatpush2.bf16.msra.mxu0 0
        %570 = vmatprep.subr.bf16.mxu0 0
        %571 = vmatpush2.bf16.msra.mxu0 0
        %572 = vmatprep.subr.bf16.mxu0 0
        %573 = vmatpush2.bf16.msra.mxu0 0
        %574 = vmatprep.subr.bf16.mxu0 0
        %575 = vmatpush2.bf16.msra.mxu0 0
        %576 = vmatprep.mubr.bf16.mxu0 0
        %577 = vmatmul.mubr.bf16.gmra.mxu0 %v542
        %v578 = vpop.f32.mrf.mxu0
        %v579 = vadd.f32 0.0, %v578
        %v580 = vpop.f32.mrf.mxu0
        %v581 = vpop.f32.mrf.mxu0
        %v582 = vpop.f32.mrf.mxu0
        %583 = vdwg.mxu0
        %v584 = vpack.c.bf16 %v579, %v579
        %v585 = vld [vmem:[%s4] sm:$0xf]
        %v586 = vld [vmem:[%s4 + $0x4] sm:$0xf]
        %v587 = vld [vmem:[%s4 + $0x8] sm:$0xf]
        %v588 = vld [vmem:[%s4 + $0xc] sm:$0xf]
        %v593 = vunpack.c.l.b16 %v585
        %v594 = vunpack.c.l.b16 %v586
        %v595 = vunpack.c.l.b16 %v587
        %v596 = vunpack.c.l.b16 %v588
        %v597 = vpack.c.b16 %v594, %v593
        %v598 = vpack.c.b16 %v596, %v595
        %601 = vmatprep.subr.bf16.mxu0 0
        %602 = vmatpush1.bf16.msra.mxu0 0
        %603 = vmatprep.subr.bf16.mxu0 0
        %604 = vmatpush1.bf16.msra.mxu0 0
        %605 = vmatprep.subr.bf16.mxu0 0
        %606 = vmatpush1.bf16.msra.mxu0 0
        %607 = vmatprep.subr.bf16.mxu0 0
        %608 = vmatpush1.bf16.msra.mxu0 0
        %609 = vmatprep.subr.bf16.mxu0 0
        %610 = vmatpush1.bf16.msra.mxu0 0
        %611 = vmatprep.subr.bf16.mxu0 0
        %612 = vmatpush1.bf16.msra.mxu0 0
        %613 = vmatprep.subr.bf16.mxu0 0
        %614 = vmatpush1.bf16.msra.mxu0 %v598
        %615 = vmatprep.subr.bf16.mxu0 0
        %616 = vmatpush1.bf16.msra.mxu0 %v597
        %617 = vmatprep.subr.bf16.mxu0 0
        %618 = vmatpush2.bf16.msra.mxu0 0
        %619 = vmatprep.subr.bf16.mxu0 0
        %620 = vmatpush2.bf16.msra.mxu0 0
        %621 = vmatprep.subr.bf16.mxu0 0
        %622 = vmatpush2.bf16.msra.mxu0 0
        %623 = vmatprep.subr.bf16.mxu0 0
        %624 = vmatpush2.bf16.msra.mxu0 0
        %625 = vmatprep.subr.bf16.mxu0 0
        %626 = vmatpush2.bf16.msra.mxu0 0
        %627 = vmatprep.subr.bf16.mxu0 0
        %628 = vmatpush2.bf16.msra.mxu0 0
        %629 = vmatprep.subr.bf16.mxu0 0
        %630 = vmatpush2.bf16.msra.mxu0 0
        %631 = vmatprep.subr.bf16.mxu0 0
        %632 = vmatpush2.bf16.msra.mxu0 0
        %633 = vmatprep.mubr.bf16.mxu0 0
        %634 = vmatmul.mubr.bf16.gmra.mxu0 %v542
        %v635 = vpop.f32.mrf.mxu0
        %v636 = vadd.f32 0.0, %v635
        %v637 = vpop.f32.mrf.mxu0
        %v638 = vpop.f32.mrf.mxu0
        %v639 = vpop.f32.mrf.mxu0
        %640 = vdwg.mxu0
        %v641 = vpack.c.bf16 %v636, %v636
        %v642 = vld [vmem:[%s5] sm:$0xf]
        %v643 = vld [vmem:[%s5 + $0x4] sm:$0xf]
        %v644 = vld [vmem:[%s5 + $0x8] sm:$0xf]
        %v645 = vld [vmem:[%s5 + $0xc] sm:$0xf]
        %v650 = vunpack.c.l.b16 %v642
        %v651 = vunpack.c.l.b16 %v643
        %v652 = vunpack.c.l.b16 %v644
        %v653 = vunpack.c.l.b16 %v645
        %v654 = vpack.c.b16 %v651, %v650
        %v655 = vpack.c.b16 %v653, %v652
        %658 = vmatprep.subr.bf16.mxu0 0
        %659 = vmatpush1.bf16.msra.mxu0 0
        %660 = vmatprep.subr.bf16.mxu0 0
        %661 = vmatpush1.bf16.msra.mxu0 0
        %662 = vmatprep.subr.bf16.mxu0 0
        %663 = vmatpush1.bf16.msra.mxu0 0
        %664 = vmatprep.subr.bf16.mxu0 0
        %665 = vmatpush1.bf16.msra.mxu0 0
        %666 = vmatprep.subr.bf16.mxu0 0
        %667 = vmatpush1.bf16.msra.mxu0 0
        %668 = vmatprep.subr.bf16.mxu0 0
        %669 = vmatpush1.bf16.msra.mxu0 0
        %670 = vmatprep.subr.bf16.mxu0 0
        %671 = vmatpush1.bf16.msra.mxu0 %v655
        %672 = vmatprep.subr.bf16.mxu0 0
        %673 = vmatpush1.bf16.msra.mxu0 %v654
        %674 = vmatprep.subr.bf16.mxu0 0
        %675 = vmatpush2.bf16.msra.mxu0 0
        %676 = vmatprep.subr.bf16.mxu0 0
        %677 = vmatpush2.bf16.msra.mxu0 0
        %678 = vmatprep.subr.bf16.mxu0 0
        %679 = vmatpush2.bf16.msra.mxu0 0
        %680 = vmatprep.subr.bf16.mxu0 0
        %681 = vmatpush2.bf16.msra.mxu0 0
        %682 = vmatprep.subr.bf16.mxu0 0
        %683 = vmatpush2.bf16.msra.mxu0 0
        %684 = vmatprep.subr.bf16.mxu0 0
        %685 = vmatpush2.bf16.msra.mxu0 0
        %686 = vmatprep.subr.bf16.mxu0 0
        %687 = vmatpush2.bf16.msra.mxu0 0
        %688 = vmatprep.subr.bf16.mxu0 0
        %689 = vmatpush2.bf16.msra.mxu0 0
        %690 = vmatprep.mubr.bf16.mxu0 0
        %691 = vmatmul.mubr.bf16.gmra.mxu0 %v542
        %v692 = vpop.f32.mrf.mxu0
        %v693 = vadd.f32 0.0, %v692
        %v694 = vpop.f32.mrf.mxu0
        %v695 = vpop.f32.mrf.mxu0
        %v696 = vpop.f32.mrf.mxu0
        %697 = vdwg.mxu0
        %v698 = vpack.c.bf16 %v693, %v693
        %vm699 = vcmask 64512
        %v701 = vsel %vm699, %v584, 0
        %v704 = vsel %vm699, %v641, 0
        %706 = vmatprep.subr.bf16.mxu0 0
        %707 = vmatpush1.bf16.xpose.msra.mxu0 0
        %708 = vmatprep.subr.bf16.mxu0 0
        %709 = vmatpush1.bf16.xpose.msra.mxu0 0
        %710 = vmatprep.subr.bf16.mxu0 0
        %711 = vmatpush1.bf16.xpose.msra.mxu0 0
        %712 = vmatprep.subr.bf16.mxu0 0
        %713 = vmatpush1.bf16.xpose.msra.mxu0 0
        %714 = vmatprep.subr.bf16.mxu0 0
        %715 = vmatpush1.bf16.xpose.msra.mxu0 0
        %716 = vmatprep.subr.bf16.mxu0 0
        %717 = vmatpush1.bf16.xpose.msra.mxu0 0
        %718 = vmatprep.subr.bf16.mxu0 0
        %719 = vmatpush1.bf16.xpose.msra.mxu0 0
        %720 = vmatprep.subr.bf16.mxu0 0
        %721 = vmatpush1.bf16.xpose.msra.mxu0 %v704
        %722 = vmatprep.subr.bf16.mxu0 0
        %723 = vmatpush2.bf16.xpose.msra.mxu0 0
        %724 = vmatprep.subr.bf16.mxu0 0
        %725 = vmatpush2.bf16.xpose.msra.mxu0 0
        %726 = vmatprep.subr.bf16.mxu0 0
        %727 = vmatpush2.bf16.xpose.msra.mxu0 0
        %728 = vmatprep.subr.bf16.mxu0 0
        %729 = vmatpush2.bf16.xpose.msra.mxu0 0
        %730 = vmatprep.subr.bf16.mxu0 0
        %731 = vmatpush2.bf16.xpose.msra.mxu0 0
        %732 = vmatprep.subr.bf16.mxu0 0
        %733 = vmatpush2.bf16.xpose.msra.mxu0 0
        %734 = vmatprep.subr.bf16.mxu0 0
        %735 = vmatpush2.bf16.xpose.msra.mxu0 0
        %736 = vmatprep.subr.bf16.mxu0 0
        %737 = vmatpush2.bf16.xpose.msra.mxu0 0
        %738 = vmatprep.mubr.bf16.mxu0 0
        %739 = vmatmul.mubr.bf16.gmra.mxu0 %v701
        %v740 = vpop.f32.mrf.mxu0
        %v741 = vadd.f32 0.0, %v740
        %v742 = vpop.f32.mrf.mxu0
        %v743 = vpop.f32.mrf.mxu0
        %v744 = vpop.f32.mrf.mxu0
        %745 = vdwg.mxu0
        %v746 = vsel %vm699, %v741, -inf
        %747 = vmax.xlane.f32.xlu0 %v746
        %v748 = vpop.xlane.xlu0 %747
        %v749 = vsub.f32 %v741, %v748
        %v750 = vmul.f32 %v749, 1.442695
        %v751 = vpow.pop %v750
        %v752 = vsel %vm699, %v751, 0.0
        %753 = vadd.xlane.f32.xlu0 %v752
        %v754 = vpop.xlane.xlu0 %753
        %v755 = vrcp.pop %v754
        %v756 = vmul.f32 %v751, %v755
        %v757 = vpack.c.bf16 %v756, %v756
        %v759 = vsel %vm699, %v757, 0
        %vm761 = vcmask 1043456
        %v763 = vsel %vm761, %v698, 0
        %765 = vmatprep.subr.bf16.mxu0 0
        %766 = vmatpush1.bf16.msra.mxu0 0
        %767 = vmatprep.subr.bf16.mxu0 0
        %768 = vmatpush1.bf16.msra.mxu0 0
        %769 = vmatprep.subr.bf16.mxu0 0
        %770 = vmatpush1.bf16.msra.mxu0 0
        %771 = vmatprep.subr.bf16.mxu0 0
        %772 = vmatpush1.bf16.msra.mxu0 0
        %773 = vmatprep.subr.bf16.mxu0 0
        %774 = vmatpush1.bf16.msra.mxu0 0
        %775 = vmatprep.subr.bf16.mxu0 0
        %776 = vmatpush1.bf16.msra.mxu0 0
        %777 = vmatprep.subr.bf16.mxu0 0
        %778 = vmatpush1.bf16.msra.mxu0 0
        %779 = vmatprep.subr.bf16.mxu0 0
        %780 = vmatpush1.bf16.msra.mxu0 %v763
        %781 = vmatprep.subr.bf16.mxu0 0
        %782 = vmatpush2.bf16.msra.mxu0 0
        %783 = vmatprep.subr.bf16.mxu0 0
        %784 = vmatpush2.bf16.msra.mxu0 0
        %785 = vmatprep.subr.bf16.mxu0 0
        %786 = vmatpush2.bf16.msra.mxu0 0
        %787 = vmatprep.subr.bf16.mxu0 0
        %788 = vmatpush2.bf16.msra.mxu0 0
        %789 = vmatprep.subr.bf16.mxu0 0
        %790 = vmatpush2.bf16.msra.mxu0 0
        %791 = vmatprep.subr.bf16.mxu0 0
        %792 = vmatpush2.bf16.msra.mxu0 0
        %793 = vmatprep.subr.bf16.mxu0 0
        %794 = vmatpush2.bf16.msra.mxu0 0
        %795 = vmatprep.subr.bf16.mxu0 0
        %796 = vmatpush2.bf16.msra.mxu0 0
        %797 = vmatprep.mubr.bf16.mxu0 0
        %798 = vmatmul.mubr.bf16.gmra.mxu0 %v759
        %v799 = vpop.f32.mrf.mxu0
        %v800 = vadd.f32 0.0, %v799
        %v801 = vpop.f32.mrf.mxu0
        %v802 = vpop.f32.mrf.mxu0
        %v803 = vpop.f32.mrf.mxu0
        %804 = vdwg.mxu0
        %v805 = vpack.c.bf16 %v800, %v800
        %vm806 = vcmask 60416
        %807 = vst.msk [vmem:[#allocation2] sm:$0xf] %vm806, %v805
        %809 = vrot.lane.b32.xlu0 %v584, 120
        %v810 = vpop.permute.xlu0 %809
        %812 = vrot.lane.b32.xlu0 %v641, 120
        %v813 = vpop.permute.xlu0 %812
        %v815 = vsel %vm699, %v810, 0
        %v818 = vsel %vm699, %v813, 0
        %820 = vmatprep.subr.bf16.mxu0 0
        %821 = vmatpush1.bf16.xpose.msra.mxu0 0
        %822 = vmatprep.subr.bf16.mxu0 0
        %823 = vmatpush1.bf16.xpose.msra.mxu0 0
        %824 = vmatprep.subr.bf16.mxu0 0
        %825 = vmatpush1.bf16.xpose.msra.mxu0 0
        %826 = vmatprep.subr.bf16.mxu0 0
        %827 = vmatpush1.bf16.xpose.msra.mxu0 0
        %828 = vmatprep.subr.bf16.mxu0 0
        %829 = vmatpush1.bf16.xpose.msra.mxu0 0
        %830 = vmatprep.subr.bf16.mxu0 0
        %831 = vmatpush1.bf16.xpose.msra.mxu0 0
        %832 = vmatprep.subr.bf16.mxu0 0
        %833 = vmatpush1.bf16.xpose.msra.mxu0 0
        %834 = vmatprep.subr.bf16.mxu0 0
        %835 = vmatpush1.bf16.xpose.msra.mxu0 %v818
        %836 = vmatprep.subr.bf16.mxu0 0
        %837 = vmatpush2.bf16.xpose.msra.mxu0 0
        %838 = vmatprep.subr.bf16.mxu0 0
        %839 = vmatpush2.bf16.xpose.msra.mxu0 0
        %840 = vmatprep.subr.bf16.mxu0 0
        %841 = vmatpush2.bf16.xpose.msra.mxu0 0
        %842 = vmatprep.subr.bf16.mxu0 0
        %843 = vmatpush2.bf16.xpose.msra.mxu0 0
        %844 = vmatprep.subr.bf16.mxu0 0
        %845 = vmatpush2.bf16.xpose.msra.mxu0 0
        %846 = vmatprep.subr.bf16.mxu0 0
        %847 = vmatpush2.bf16.xpose.msra.mxu0 0
        %848 = vmatprep.subr.bf16.mxu0 0
        %849 = vmatpush2.bf16.xpose.msra.mxu0 0
        %850 = vmatprep.subr.bf16.mxu0 0
        %851 = vmatpush2.bf16.xpose.msra.mxu0 0
        %852 = vmatprep.mubr.bf16.mxu0 0
        %853 = vmatmul.mubr.bf16.gmra.mxu0 %v815
        %v854 = vpop.f32.mrf.mxu0
        %v855 = vadd.f32 0.0, %v854
        %v856 = vpop.f32.mrf.mxu0
        %v857 = vpop.f32.mrf.mxu0
        %v858 = vpop.f32.mrf.mxu0
        %859 = vdwg.mxu0
        %v860 = vsel %vm699, %v855, -inf
        %861 = vmax.xlane.f32.xlu0 %v860
        %v862 = vpop.xlane.xlu0 %861
        %v863 = vsub.f32 %v855, %v862
        %v864 = vmul.f32 %v863, 1.442695
        %v865 = vpow.pop %v864
        %v866 = vsel %vm699, %v865, 0.0
        %867 = vadd.xlane.f32.xlu0 %v866
        %v868 = vpop.xlane.xlu0 %867
        %v869 = vrcp.pop %v868
        %v870 = vmul.f32 %v865, %v869
        %v871 = vpack.c.bf16 %v870, %v870
        %873 = vrot.lane.b32.xlu0 %v698, 120
        %v874 = vpop.permute.xlu0 %873
        %v876 = vsel %vm699, %v871, 0
        %v879 = vsel %vm761, %v874, 0
        %881 = vmatprep.subr.bf16.mxu0 0
        %882 = vmatpush1.bf16.msra.mxu0 0
        %883 = vmatprep.subr.bf16.mxu0 0
        %884 = vmatpush1.bf16.msra.mxu0 0
        %885 = vmatprep.subr.bf16.mxu0 0
        %886 = vmatpush1.bf16.msra.mxu0 0
        %887 = vmatprep.subr.bf16.mxu0 0
        %888 = vmatpush1.bf16.msra.mxu0 0
        %889 = vmatprep.subr.bf16.mxu0 0
        %890 = vmatpush1.bf16.msra.mxu0 0
        %891 = vmatprep.subr.bf16.mxu0 0
        %892 = vmatpush1.bf16.msra.mxu0 0
        %893 = vmatprep.subr.bf16.mxu0 0
        %894 = vmatpush1.bf16.msra.mxu0 0
        %895 = vmatprep.subr.bf16.mxu0 0
        %896 = vmatpush1.bf16.msra.mxu0 %v879
        %897 = vmatprep.subr.bf16.mxu0 0
        %898 = vmatpush2.bf16.msra.mxu0 0
        %899 = vmatprep.subr.bf16.mxu0 0
        %900 = vmatpush2.bf16.msra.mxu0 0
        %901 = vmatprep.subr.bf16.mxu0 0
        %902 = vmatpush2.bf16.msra.mxu0 0
        %903 = vmatprep.subr.bf16.mxu0 0
        %904 = vmatpush2.bf16.msra.mxu0 0
        %905 = vmatprep.subr.bf16.mxu0 0
        %906 = vmatpush2.bf16.msra.mxu0 0
        %907 = vmatprep.subr.bf16.mxu0 0
        %908 = vmatpush2.bf16.msra.mxu0 0
        %909 = vmatprep.subr.bf16.mxu0 0
        %910 = vmatpush2.bf16.msra.mxu0 0
        %911 = vmatprep.subr.bf16.mxu0 0
        %912 = vmatpush2.bf16.msra.mxu0 0
        %913 = vmatprep.mubr.bf16.mxu0 0
        %914 = vmatmul.mubr.bf16.gmra.mxu0 %v876
        %v915 = vpop.f32.mrf.mxu0
        %v916 = vadd.f32 0.0, %v915
        %v917 = vpop.f32.mrf.mxu0
        %v918 = vpop.f32.mrf.mxu0
        %v919 = vpop.f32.mrf.mxu0
        %920 = vdwg.mxu0
        %v921 = vpack.c.bf16 %v916, %v916
        %v923 = vunpack.c.l.b16 %v921
        %v924 = vpack.c.b16 %v923, %v923
        %925 = vrot.lane.b32.xlu0 %v924, 8
        %v926 = vpop.permute.xlu0 %925
        %vm928 = vcmask 126016
        %929 = vst.msk [vmem:[#allocation2] sm:$0xf] %vm928, %v926
        %930 = vrot.lane.b32.xlu0 %v584, 112
        %v931 = vpop.permute.xlu0 %930
        %932 = vrot.lane.b32.xlu0 %v641, 112
        %v933 = vpop.permute.xlu0 %932
        %v935 = vsel %vm699, %v931, 0
        %v938 = vsel %vm699, %v933, 0
        %940 = vmatprep.subr.bf16.mxu0 0
        %941 = vmatpush1.bf16.xpose.msra.mxu0 0
        %942 = vmatprep.subr.bf16.mxu0 0
        %943 = vmatpush1.bf16.xpose.msra.mxu0 0
        %944 = vmatprep.subr.bf16.mxu0 0
        %945 = vmatpush1.bf16.xpose.msra.mxu0 0
        %946 = vmatprep.subr.bf16.mxu0 0
        %947 = vmatpush1.bf16.xpose.msra.mxu0 0
        %948 = vmatprep.subr.bf16.mxu0 0
        %949 = vmatpush1.bf16.xpose.msra.mxu0 0
        %950 = vmatprep.subr.bf16.mxu0 0
        %951 = vmatpush1.bf16.xpose.msra.mxu0 0
        %952 = vmatprep.subr.bf16.mxu0 0
        %953 = vmatpush1.bf16.xpose.msra.mxu0 0
        %954 = vmatprep.subr.bf16.mxu0 0
        %955 = vmatpush1.bf16.xpose.msra.mxu0 %v938
        %956 = vmatprep.subr.bf16.mxu0 0
        %957 = vmatpush2.bf16.xpose.msra.mxu0 0
        %958 = vmatprep.subr.bf16.mxu0 0
        %959 = vmatpush2.bf16.xpose.msra.mxu0 0
        %960 = vmatprep.subr.bf16.mxu0 0
        %961 = vmatpush2.bf16.xpose.msra.mxu0 0
        %962 = vmatprep.subr.bf16.mxu0 0
        %963 = vmatpush2.bf16.xpose.msra.mxu0 0
        %964 = vmatprep.subr.bf16.mxu0 0
        %965 = vmatpush2.bf16.xpose.msra.mxu0 0
        %966 = vmatprep.subr.bf16.mxu0 0
        %967 = vmatpush2.bf16.xpose.msra.mxu0 0
        %968 = vmatprep.subr.bf16.mxu0 0
        %969 = vmatpush2.bf16.xpose.msra.mxu0 0
        %970 = vmatprep.subr.bf16.mxu0 0
        %971 = vmatpush2.bf16.xpose.msra.mxu0 0
        %972 = vmatprep.mubr.bf16.mxu0 0
        %973 = vmatmul.mubr.bf16.gmra.mxu0 %v935
        %v974 = vpop.f32.mrf.mxu0
        %v975 = vadd.f32 0.0, %v974
        %v976 = vpop.f32.mrf.mxu0
        %v977 = vpop.f32.mrf.mxu0
        %v978 = vpop.f32.mrf.mxu0
        %979 = vdwg.mxu0
        %v980 = vsel %vm699, %v975, -inf
        %981 = vmax.xlane.f32.xlu0 %v980
        %v982 = vpop.xlane.xlu0 %981
        %v983 = vsub.f32 %v975, %v982
        %v984 = vmul.f32 %v983, 1.442695
        %v985 = vpow.pop %v984
        %v986 = vsel %vm699, %v985, 0.0
        %987 = vadd.xlane.f32.xlu0 %v986
        %v988 = vpop.xlane.xlu0 %987
        %v989 = vrcp.pop %v988
        %v990 = vmul.f32 %v985, %v989
        %v991 = vpack.c.bf16 %v990, %v990
        %992 = vrot.lane.b32.xlu0 %v698, 112
        %v993 = vpop.permute.xlu0 %992
        %v995 = vsel %vm699, %v991, 0
        %v998 = vsel %vm761, %v993, 0
        %1000 = vmatprep.subr.bf16.mxu0 0
        %1001 = vmatpush1.bf16.msra.mxu0 0
        %1002 = vmatprep.subr.bf16.mxu0 0
        %1003 = vmatpush1.bf16.msra.mxu0 0
        %1004 = vmatprep.subr.bf16.mxu0 0
        %1005 = vmatpush1.bf16.msra.mxu0 0
        %1006 = vmatprep.subr.bf16.mxu0 0
        %1007 = vmatpush1.bf16.msra.mxu0 0
        %1008 = vmatprep.subr.bf16.mxu0 0
        %1009 = vmatpush1.bf16.msra.mxu0 0
        %1010 = vmatprep.subr.bf16.mxu0 0
        %1011 = vmatpush1.bf16.msra.mxu0 0
        %1012 = vmatprep.subr.bf16.mxu0 0
        %1013 = vmatpush1.bf16.msra.mxu0 0
        %1014 = vmatprep.subr.bf16.mxu0 0
        %1015 = vmatpush1.bf16.msra.mxu0 %v998
        %1016 = vmatprep.subr.bf16.mxu0 0
        %1017 = vmatpush2.bf16.msra.mxu0 0
        %1018 = vmatprep.subr.bf16.mxu0 0
        %1019 = vmatpush2.bf16.msra.mxu0 0
        %1020 = vmatprep.subr.bf16.mxu0 0
        %1021 = vmatpush2.bf16.msra.mxu0 0
        %1022 = vmatprep.subr.bf16.mxu0 0
        %1023 = vmatpush2.bf16.msra.mxu0 0
        %1024 = vmatprep.subr.bf16.mxu0 0
        %1025 = vmatpush2.bf16.msra.mxu0 0
        %1026 = vmatprep.subr.bf16.mxu0 0
        %1027 = vmatpush2.bf16.msra.mxu0 0
        %1028 = vmatprep.subr.bf16.mxu0 0
        %1029 = vmatpush2.bf16.msra.mxu0 0
        %1030 = vmatprep.subr.bf16.mxu0 0
        %1031 = vmatpush2.bf16.msra.mxu0 0
        %1032 = vmatprep.mubr.bf16.mxu0 0
        %1033 = vmatmul.mubr.bf16.gmra.mxu0 %v995
        %v1034 = vpop.f32.mrf.mxu0
        %v1035 = vadd.f32 0.0, %v1034
        %v1036 = vpop.f32.mrf.mxu0
        %v1037 = vpop.f32.mrf.mxu0
        %v1038 = vpop.f32.mrf.mxu0
        %1039 = vdwg.mxu0
        %v1040 = vpack.c.bf16 %v1035, %v1035
        %v1042 = vunpack.c.l.b16 %v1040
        %v1043 = vpack.c.b16 %v1042, %v1042
        %1044 = vrot.lane.b32.xlu0 %v1043, 16
        %v1045 = vpop.permute.xlu0 %1044
        %vm1047 = vcmask 191616
        %1048 = vst.msk [vmem:[#allocation2] sm:$0xf] %vm1047, %v1045
        %1049 = vrot.lane.b32.xlu0 %v584, 104
        %v1050 = vpop.permute.xlu0 %1049
        %1051 = vrot.lane.b32.xlu0 %v641, 104
        %v1052 = vpop.permute.xlu0 %1051
        %v1054 = vsel %vm699, %v1050, 0
        %v1057 = vsel %vm699, %v1052, 0
        %1059 = vmatprep.subr.bf16.mxu0 0
        %1060 = vmatpush1.bf16.xpose.msra.mxu0 0
        %1061 = vmatprep.subr.bf16.mxu0 0
        %1062 = vmatpush1.bf16.xpose.msra.mxu0 0
        %1063 = vmatprep.subr.bf16.mxu0 0
        %1064 = vmatpush1.bf16.xpose.msra.mxu0 0
        %1065 = vmatprep.subr.bf16.mxu0 0
        %1066 = vmatpush1.bf16.xpose.msra.mxu0 0
        %1067 = vmatprep.subr.bf16.mxu0 0
        %1068 = vmatpush1.bf16.xpose.msra.mxu0 0
        %1069 = vmatprep.subr.bf16.mxu0 0
        %1070 = vmatpush1.bf16.xpose.msra.mxu0 0
        %1071 = vmatprep.subr.bf16.mxu0 0
        %1072 = vmatpush1.bf16.xpose.msra.mxu0 0
        %1073 = vmatprep.subr.bf16.mxu0 0
        %1074 = vmatpush1.bf16.xpose.msra.mxu0 %v1057
        %1075 = vmatprep.subr.bf16.mxu0 0
        %1076 = vmatpush2.bf16.xpose.msra.mxu0 0
        %1077 = vmatprep.subr.bf16.mxu0 0
        %1078 = vmatpush2.bf16.xpose.msra.mxu0 0
        %1079 = vmatprep.subr.bf16.mxu0 0
        %1080 = vmatpush2.bf16.xpose.msra.mxu0 0
        %1081 = vmatprep.subr.bf16.mxu0 0
        %1082 = vmatpush2.bf16.xpose.msra.mxu0 0
        %1083 = vmatprep.subr.bf16.mxu0 0
        %1084 = vmatpush2.bf16.xpose.msra.mxu0 0
        %1085 = vmatprep.subr.bf16.mxu0 0
        %1086 = vmatpush2.bf16.xpose.msra.mxu0 0
        %1087 = vmatprep.subr.bf16.mxu0 0
        %1088 = vmatpush2.bf16.xpose.msra.mxu0 0
        %1089 = vmatprep.subr.bf16.mxu0 0
        %1090 = vmatpush2.bf16.xpose.msra.mxu0 0
        %1091 = vmatprep.mubr.bf16.mxu0 0
        %1092 = vmatmul.mubr.bf16.gmra.mxu0 %v1054
        %v1093 = vpop.f32.mrf.mxu0
        %v1094 = vadd.f32 0.0, %v1093
        %v1095 = vpop.f32.mrf.mxu0
        %v1096 = vpop.f32.mrf.mxu0
        %v1097 = vpop.f32.mrf.mxu0
        %1098 = vdwg.mxu0
        %v1099 = vsel %vm699, %v1094, -inf
        %1100 = vmax.xlane.f32.xlu0 %v1099
        %v1101 = vpop.xlane.xlu0 %1100
        %v1102 = vsub.f32 %v1094, %v1101
        %v1103 = vmul.f32 %v1102, 1.442695
        %v1104 = vpow.pop %v1103
        %v1105 = vsel %vm699, %v1104, 0.0
        %1106 = vadd.xlane.f32.xlu0 %v1105
        %v1107 = vpop.xlane.xlu0 %1106
        %v1108 = vrcp.pop %v1107
        %v1109 = vmul.f32 %v1104, %v1108
        %v1110 = vpack.c.bf16 %v1109, %v1109
        %1111 = vrot.lane.b32.xlu0 %v698, 104
        %v1112 = vpop.permute.xlu0 %1111
        %v1114 = vsel %vm699, %v1110, 0
        %v1117 = vsel %vm761, %v1112, 0
        %1119 = vmatprep.subr.bf16.mxu0 0
        %1120 = vmatpush1.bf16.msra.mxu0 0
        %1121 = vmatprep.subr.bf16.mxu0 0
        %1122 = vmatpush1.bf16.msra.mxu0 0
        %1123 = vmatprep.subr.bf16.mxu0 0
        %1124 = vmatpush1.bf16.msra.mxu0 0
        %1125 = vmatprep.subr.bf16.mxu0 0
        %1126 = vmatpush1.bf16.msra.mxu0 0
        %1127 = vmatprep.subr.bf16.mxu0 0
        %1128 = vmatpush1.bf16.msra.mxu0 0
        %1129 = vmatprep.subr.bf16.mxu0 0
        %1130 = vmatpush1.bf16.msra.mxu0 0
        %1131 = vmatprep.subr.bf16.mxu0 0
        %1132 = vmatpush1.bf16.msra.mxu0 0
        %1133 = vmatprep.subr.bf16.mxu0 0
        %1134 = vmatpush1.bf16.msra.mxu0 %v1117
        %1135 = vmatprep.subr.bf16.mxu0 0
        %1136 = vmatpush2.bf16.msra.mxu0 0
        %1137 = vmatprep.subr.bf16.mxu0 0
        %1138 = vmatpush2.bf16.msra.mxu0 0
        %1139 = vmatprep.subr.bf16.mxu0 0
        %1140 = vmatpush2.bf16.msra.mxu0 0
        %1141 = vmatprep.subr.bf16.mxu0 0
        %1142 = vmatpush2.bf16.msra.mxu0 0
        %1143 = vmatprep.subr.bf16.mxu0 0
        %1144 = vmatpush2.bf16.msra.mxu0 0
        %1145 = vmatprep.subr.bf16.mxu0 0
        %1146 = vmatpush2.bf16.msra.mxu0 0
        %1147 = vmatprep.subr.bf16.mxu0 0
        %1148 = vmatpush2.bf16.msra.mxu0 0
        %1149 = vmatprep.subr.bf16.mxu0 0
        %1150 = vmatpush2.bf16.msra.mxu0 0
        %1151 = vmatprep.mubr.bf16.mxu0 0
        %1152 = vmatmul.mubr.bf16.gmra.mxu0 %v1114
        %v1153 = vpop.f32.mrf.mxu0
        %v1154 = vadd.f32 0.0, %v1153
        %v1155 = vpop.f32.mrf.mxu0
        %v1156 = vpop.f32.mrf.mxu0
        %v1157 = vpop.f32.mrf.mxu0
        %1158 = vdwg.mxu0
        %v1159 = vpack.c.bf16 %v1154, %v1154
        %v1161 = vunpack.c.l.b16 %v1159
        %v1162 = vpack.c.b16 %v1161, %v1161
        %1163 = vrot.lane.b32.xlu0 %v1162, 24
        %v1164 = vpop.permute.xlu0 %1163
        %vm1166 = vcmask 257216
        %1167 = vst.msk [vmem:[#allocation2] sm:$0xf] %vm1166, %v1164
        %v1168 = vld [vmem:[#allocation2] sm:$0xf]
        %v1169 = vld [vmem:[%s6] sm:$0xf]
        %v1170 = vld [vmem:[%s6 + $0x4] sm:$0xf]
        %v1171 = vld [vmem:[%s6 + $0x8] sm:$0xf]
        %v1172 = vld [vmem:[%s6 + $0xc] sm:$0xf]
        %v1173 = vld [vmem:[%s7] sm:$0x1]
        %v1175 = vlaneseq
        %v1176 = vshrl.u32 %v1175, 7
        %v1177 = vsub.s32 0, %v1176
        %v1178 = vrot.slane %v1173, %v1177
        %v1184 = vunpack.c.l.b16 %v1169
        %v1185 = vunpack.c.l.b16 %v1170
        %v1186 = vunpack.c.l.b16 %v1171
        %v1187 = vunpack.c.l.b16 %v1172
        %v1188 = vpack.c.b16 %v1185, %v1184
        %v1189 = vpack.c.b16 %v1187, %v1186
        %v1193 = vsel %vm495, %v1168, 0
        %1195 = vmatprep.subr.bf16.mxu0 0
        %1196 = vmatpush1.bf16.msra.mxu0 0
        %1197 = vmatprep.subr.bf16.mxu0 0
        %1198 = vmatpush1.bf16.msra.mxu0 0
        %1199 = vmatprep.subr.bf16.mxu0 0
        %1200 = vmatpush1.bf16.msra.mxu0 0
        %1201 = vmatprep.subr.bf16.mxu0 0
        %1202 = vmatpush1.bf16.msra.mxu0 0
        %1203 = vmatprep.subr.bf16.mxu0 0
        %1204 = vmatpush1.bf16.msra.mxu0 0
        %1205 = vmatprep.subr.bf16.mxu0 0
        %1206 = vmatpush1.bf16.msra.mxu0 0
        %1207 = vmatprep.subr.bf16.mxu0 0
        %1208 = vmatpush1.bf16.msra.mxu0 %v1189
        %1209 = vmatprep.subr.bf16.mxu0 0
        %1210 = vmatpush1.bf16.msra.mxu0 %v1188
        %1211 = vmatprep.subr.bf16.mxu0 0
        %1212 = vmatpush2.bf16.msra.mxu0 0
        %1213 = vmatprep.subr.bf16.mxu0 0
        %1214 = vmatpush2.bf16.msra.mxu0 0
        %1215 = vmatprep.subr.bf16.mxu0 0
        %1216 = vmatpush2.bf16.msra.mxu0 0
        %1217 = vmatprep.subr.bf16.mxu0 0
        %1218 = vmatpush2.bf16.msra.mxu0 0
        %1219 = vmatprep.subr.bf16.mxu0 0
        %1220 = vmatpush2.bf16.msra.mxu0 0
        %1221 = vmatprep.subr.bf16.mxu0 0
        %1222 = vmatpush2.bf16.msra.mxu0 0
        %1223 = vmatprep.subr.bf16.mxu0 0
        %1224 = vmatpush2.bf16.msra.mxu0 0
        %1225 = vmatprep.subr.bf16.mxu0 0
        %1226 = vmatpush2.bf16.msra.mxu0 0
        %1227 = vmatprep.mubr.bf16.mxu0 0
        %1228 = vmatmul.mubr.bf16.gmra.mxu0 %v1193
        %v1229 = vpop.f32.mrf.mxu0
        %v1230 = vadd.f32 %v1178, %v1229
        %v1231 = vpop.f32.mrf.mxu0
        %v1232 = vpop.f32.mrf.mxu0
        %v1233 = vpop.f32.mrf.mxu0
        %1234 = vdwg.mxu0
        %v1235 = vadd.f32 %v492, %v1230
        %v1236 = vld [vmem:[%s8] sm:$0x1]
        %v1237 = vld [vmem:[%s9] sm:$0x1]
        %v1238 = vsel %vm495, %v1235, 0.0
        %1239 = vadd.xlane.f32.xlu0 %v1238
        %v1240 = vpop.xlane.xlu0 %1239
        %v1241 = vmul.f32 %v1240, %v499
        %v1242 = vsub.f32 %v1235, %v1241
        %v1243 = vmul.f32 %v1242, %v1242
        %v1244 = vsel %vm495, %v1243, 0.0
        %1245 = vadd.xlane.f32.xlu0 %v1244
        %v1246 = vpop.xlane.xlu0 %1245
        %v1247 = vmul.f32 %v1246, %v499
        %v1248 = vadd.f32 %v1247, 1e-05
        %v1249 = vrsqrt.pop %v1248
        %v1250 = vmul.f32 %v1242, %v1249
        %v1252 = vlaneseq
        %v1253 = vshrl.u32 %v1252, 7
        %v1254 = vsub.s32 0, %v1253
        %v1255 = vrot.slane %v1236, %v1254
        %v1257 = vmul.f32 %v1250, %v1255
        %v1259 = vlaneseq
        %v1260 = vshrl.u32 %v1259, 7
        %v1261 = vsub.s32 0, %v1260
        %v1262 = vrot.slane %v1237, %v1261
        %v1264 = vadd.f32 %v1257, %v1262
        %v1265 = vpack.c.bf16 %v1264, %v1264
        %v1266 = vld [vmem:[#allocation3] sm:$0xf]
        %v1267 = vld [vmem:[#allocation3 + $0x4] sm:$0xf]
        %v1268 = vld [vmem:[#allocation3 + $0x8] sm:$0xf]
        %v1269 = vld [vmem:[#allocation3 + $0xc] sm:$0xf]
        %v1270 = vld [vmem:[#allocation6] sm:$0x1]
        %v1272 = vlaneseq
        %v1273 = vshrl.u32 %v1272, 7
        %v1274 = vsub.s32 0, %v1273
        %v1275 = vrot.slane %v1270, %v1274
        %v1281 = vunpack.c.l.b16 %v1266
        %v1282 = vunpack.c.l.b16 %v1267
        %v1283 = vunpack.c.l.b16 %v1268
        %v1284 = vunpack.c.l.b16 %v1269
        %v1285 = vpack.c.b16 %v1282, %v1281
        %v1286 = vpack.c.b16 %v1284, %v1283
        %v1290 = vsel %vm495, %v1265, 0
        %1292 = vmatprep.subr.bf16.mxu0 0
        %1293 = vmatpush1.bf16.msra.mxu0 0
        %1294 = vmatprep.subr.bf16.mxu0 0
        %1295 = vmatpush1.bf16.msra.mxu0 0
        %1296 = vmatprep.subr.bf16.mxu0 0
        %1297 = vmatpush1.bf16.msra.mxu0 0
        %1298 = vmatprep.subr.bf16.mxu0 0
        %1299 = vmatpush1.bf16.msra.mxu0 0
        %1300 = vmatprep.subr.bf16.mxu0 0
        %1301 = vmatpush1.bf16.msra.mxu0 0
        %1302 = vmatprep.subr.bf16.mxu0 0
        %1303 = vmatpush1.bf16.msra.mxu0 0
        %1304 = vmatprep.subr.bf16.mxu0 0
        %1305 = vmatpush1.bf16.msra.mxu0 %v1286
        %1306 = vmatprep.subr.bf16.mxu0 0
        %1307 = vmatpush1.bf16.msra.mxu0 %v1285
        %1308 = vmatprep.subr.bf16.mxu0 0
        %1309 = vmatpush2.bf16.msra.mxu0 0
        %1310 = vmatprep.subr.bf16.mxu0 0
        %1311 = vmatpush2.bf16.msra.mxu0 0
        %1312 = vmatprep.subr.bf16.mxu0 0
        %1313 = vmatpush2.bf16.msra.mxu0 0
        %1314 = vmatprep.subr.bf16.mxu0 0
        %1315 = vmatpush2.bf16.msra.mxu0 0
        %1316 = vmatprep.subr.bf16.mxu0 0
        %1317 = vmatpush2.bf16.msra.mxu0 0
        %1318 = vmatprep.subr.bf16.mxu0 0
        %1319 = vmatpush2.bf16.msra.mxu0 0
        %1320 = vmatprep.subr.bf16.mxu0 0
        %1321 = vmatpush2.bf16.msra.mxu0 0
        %1322 = vmatprep.subr.bf16.mxu0 0
        %1323 = vmatpush2.bf16.msra.mxu0 0
        %1324 = vmatprep.mubr.bf16.mxu0 0
        %1325 = vmatmul.mubr.bf16.gmra.mxu0 %v1290
        %v1326 = vpop.f32.mrf.mxu0
        %v1327 = vadd.f32 %v1275, %v1326
        %v1328 = vpop.f32.mrf.mxu0
        %v1329 = vpop.f32.mrf.mxu0
        %v1330 = vpop.f32.mrf.mxu0
        %1331 = vdwg.mxu0
        %v1332 = vmul.f32 %v1327, 0.5
        %v1333 = vmul.f32 %v1327, 0.044715
        %v1334 = vmul.f32 %v1333, %v1327
        %v1335 = vmul.f32 %v1334, %v1327
        %v1336 = vadd.f32 %v1327, %v1335
        %v1337 = vmul.f32 %v1336, 0.7978846
        %v1338 = vtanh.pop %v1337
        %v1339 = vadd.f32 %v1338, 1.0
        %v1340 = vmul.f32 %v1332, %v1339
        %v1341 = vpack.c.bf16 %v1340, %v1340
        %v1342 = vld [vmem:[%s12] sm:$0xf]
        %v1343 = vld [vmem:[%s12 + $0x4] sm:$0xf]
        %v1344 = vld [vmem:[%s12 + $0x8] sm:$0xf]
        %v1345 = vld [vmem:[%s12 + $0xc] sm:$0xf]
        %v1346 = vld [vmem:[%s12 + $0x10] sm:$0xf]
        %v1347 = vld [vmem:[%s12 + $0x14] sm:$0xf]
        %v1348 = vld [vmem:[%s12 + $0x18] sm:$0xf]
        %v1349 = vld [vmem:[%s12 + $0x1c] sm:$0xf]
        %v1350 = vld [vmem:[%s12 + $0x20] sm:$0xf]
        %v1351 = vld [vmem:[%s12 + $0x24] sm:$0xf]
        %v1352 = vld [vmem:[%s12 + $0x28] sm:$0xf]
        %v1353 = vld [vmem:[%s12 + $0x2c] sm:$0xf]
        %v1354 = vld [vmem:[%s12 + $0x30] sm:$0xf]
        %v1355 = vld [vmem:[%s12 + $0x34] sm:$0xf]
        %v1356 = vld [vmem:[%s12 + $0x38] sm:$0xf]
        %v1357 = vld [vmem:[%s12 + $0x3c] sm:$0xf]
        %v1358 = vld [vmem:[%s13] sm:$0x1]
        %v1360 = vlaneseq
        %v1361 = vshrl.u32 %v1360, 7
        %v1362 = vsub.s32 0, %v1361
        %v1363 = vrot.slane %v1358, %v1362
        %v1381 = vunpack.c.l.b16 %v1342
        %v1382 = vunpack.c.l.b16 %v1343
        %v1383 = vunpack.c.l.b16 %v1344
        %v1384 = vunpack.c.l.b16 %v1345
        %v1385 = vunpack.c.l.b16 %v1346
        %v1386 = vunpack.c.l.b16 %v1347
        %v1387 = vunpack.c.l.b16 %v1348
        %v1388 = vunpack.c.l.b16 %v1349
        %v1389 = vunpack.c.l.b16 %v1350
        %v1390 = vunpack.c.l.b16 %v1351
        %v1391 = vunpack.c.l.b16 %v1352
        %v1392 = vunpack.c.l.b16 %v1353
        %v1393 = vunpack.c.l.b16 %v1354
        %v1394 = vunpack.c.l.b16 %v1355
        %v1395 = vunpack.c.l.b16 %v1356
        %v1396 = vunpack.c.l.b16 %v1357
        %v1397 = vpack.c.b16 %v1382, %v1381
        %v1398 = vpack.c.b16 %v1384, %v1383
        %v1399 = vpack.c.b16 %v1386, %v1385
        %v1400 = vpack.c.b16 %v1388, %v1387
        %v1401 = vpack.c.b16 %v1390, %v1389
        %v1402 = vpack.c.b16 %v1392, %v1391
        %v1403 = vpack.c.b16 %v1394, %v1393
        %v1404 = vpack.c.b16 %v1396, %v1395
        %1413 = vmatprep.subr.bf16.mxu0 0
        %1414 = vmatpush1.bf16.msra.mxu0 %v1404
        %1415 = vmatprep.subr.bf16.mxu0 0
        %1416 = vmatpush1.bf16.msra.mxu0 %v1403
        %1417 = vmatprep.subr.bf16.mxu0 0
        %1418 = vmatpush1.bf16.msra.mxu0 %v1402
        %1419 = vmatprep.subr.bf16.mxu0 0
        %1420 = vmatpush1.bf16.msra.mxu0 %v1401
        %1421 = vmatprep.subr.bf16.mxu0 0
        %1422 = vmatpush1.bf16.msra.mxu0 %v1400
        %1423 = vmatprep.subr.bf16.mxu0 0
        %1424 = vmatpush1.bf16.msra.mxu0 %v1399
        %1425 = vmatprep.subr.bf16.mxu0 0
        %1426 = vmatpush1.bf16.msra.mxu0 %v1398
        %1427 = vmatprep.subr.bf16.mxu0 0
        %1428 = vmatpush1.bf16.msra.mxu0 %v1397
        %1429 = vmatprep.subr.bf16.mxu0 0
        %1430 = vmatpush2.bf16.msra.mxu0 0
        %1431 = vmatprep.subr.bf16.mxu0 0
        %1432 = vmatpush2.bf16.msra.mxu0 0
        %1433 = vmatprep.subr.bf16.mxu0 0
        %1434 = vmatpush2.bf16.msra.mxu0 0
        %1435 = vmatprep.subr.bf16.mxu0 0
        %1436 = vmatpush2.bf16.msra.mxu0 0
        %1437 = vmatprep.subr.bf16.mxu0 0
        %1438 = vmatpush2.bf16.msra.mxu0 0
        %1439 = vmatprep.subr.bf16.mxu0 0
        %1440 = vmatpush2.bf16.msra.mxu0 0
        %1441 = vmatprep.subr.bf16.mxu0 0
        %1442 = vmatpush2.bf16.msra.mxu0 0
        %1443 = vmatprep.subr.bf16.mxu0 0
        %1444 = vmatpush2.bf16.msra.mxu0 0
        %1445 = vmatprep.mubr.bf16.mxu0 0
        %1446 = vmatmul.mubr.bf16.gmra.mxu0 %v1341
        %v1447 = vpop.f32.mrf.mxu0
        %v1448 = vadd.f32 %v1363, %v1447
        %v1449 = vpop.f32.mrf.mxu0
        %v1450 = vpop.f32.mrf.mxu0
        %v1451 = vpop.f32.mrf.mxu0
        %1452 = vdwg.mxu0
        %v1453 = vadd.f32 %v1235, %v1448
        %1454 = vst.msk [vmem:[%s486] sm:$0xff] %vm495, %v1453
        %s1455 = sand.u32 %s337, 1
        %s1456 = scalar_lea.sflag [#allocation5], %s1455
        %s1457 = sand.u32 %s337, 1
        %s1458 = smul.addr %s1457, 8
        %s1459 = scalar_lea.vmem [#allocation8], %s1458
        // Predicated region
        $region85: #{tpu_custom_call.1} parent=75 // pred_check
          %p1460 = pneg %p347
        $region86: #{tpu_custom_call.1} parent=75 // pred_check_branch
          %1462 = sbr.rel (%p1460) target = $region88
        $region87: #{tpu_custom_call.1} parent=75 // pred_region
          %s1464 = ssub.s32 128, 128
          %1465 = vsyncadd %s1456, %s1464
          %s1466 = smul.addr %s30, 128
          %s1467 = scalar_lea.hbm %s14, %s1466
          %s1469 = sshll.u32 %s1459, 4
          %s1470 = int_to_ptr.vmem [resolvable:$true] %s1469
          %1472 = dma.vmem_to_hbm [thread:$0]  %s1470, 128, %s1467, %s1456
        $region88: #{tpu_custom_call.1} parent=75 // pred_fallthru
          _
      $region76: #{tpu_custom_call.1} parent=5 // pred_fallthru
        _
      %p1473 = scmp.le.s32.totalorder 2, %s25
      // Predicated region
      $region89: #{tpu_custom_call.1} parent=5 // pred_check
        %p1474 = pneg %p1473
      $region90: #{tpu_custom_call.1} parent=5 // pred_check_branch
        %1476 = sbr.rel (%p1474) target = $region92
      $region91: #{tpu_custom_call.1} parent=5 // pred_region
        %s1477 = ssub.s32 %s25, 2
        // Predicated region
        $region93: #{tpu_custom_call.1} parent=91 // pred_check
          %p1478 = pneg %p353
        $region94: #{tpu_custom_call.1} parent=91 // pred_check_branch
          %1480 = sbr.rel (%p1478) target = $region96
        $region95: #{tpu_custom_call.1} parent=91 // pred_region
          %s1481 = sand.u32 %s338, 1
          %s1482 = scalar_lea.sflag [#allocation5], %s1481
          %s1483 = sand.u32 %s338, 1
          %s1484 = smul.addr %s1483, 8
          %s1485 = scalar_lea.vmem [#allocation8], %s1484
          %1486 = dma.done %s1482, 128
        $region96: #{tpu_custom_call.1} parent=91 // pred_fallthru
          _
      $region92: #{tpu_custom_call.1} parent=5 // pred_fallthru
        _
    $region6: #{tpu_custom_call.1} parent=1 // loop_footer
      %s29 = sadd.s32 1, %s25
    $region7: #{tpu_custom_call.1} parent=1 // loop_footer_branch
      %24 = sbr.rel target = $region3
    $region8: #{tpu_custom_call.1} parent=1 // loop_exit
      _
    %1487 = vsyncpa [#allocation4], 1
    %s1488 = scalar_lea.sflag [#allocation4], 1
    %1489 = vsyncpa %s1488, 1
    %1490 = vsyncpa [#allocation7], 1
    %1491 = vsyncpa [#allocation5], 1
    %s1492 = scalar_lea.sflag [#allocation5], 1
    %1493 = vsyncpa %s1492, 1

</llo_original>
